<compile_context>
chip_gen: v5e
topology: v5e:2x2
jax: 0.10.0
libtpu: 0.0.40
codegen_flags: <defaults>
</compile_context>

<pallas_src>
import jax
import jax.numpy as jnp
from jax.experimental import pallas as pl
from jax.experimental.pallas import tpu as pltpu


META_PAD = 128  # pad the 4-wide metadata contraction up to one MXU K tile


def _round_up(x, m):
    return (x + m - 1) // m * m


def _odir_kernel(img_ref, meta_ref,
                 bb_w_ref, bb_b_ref,
                 head_w_ref, head_b_ref,
                 m1_w_ref, m1_b_ref,
                 m2_w_ref, m2_b_ref,
                 m3_w_ref, m3_b_ref,
                 m4_w_ref, m4_b_ref,
                 f1a_w_ref, f1b_w_ref, f1_b_ref,
                 f2_w_ref, f2_b_ref,
                 cls_w_ref, cls_b_ref,
                 logits_ref,
                 acc_ref):
    dot = lambda a, b: jnp.dot(a, b, preferred_element_type=jnp.float32)
    relu = lambda x: jnp.maximum(x, 0.0)
    k = pl.program_id(1)

    @pl.when(k == 0)
    def _init():
        acc_ref[...] = jnp.zeros_like(acc_ref)

    # Streamed backbone matmul: bf16 operands, f32 accumulation in VMEM scratch.
    acc_ref[...] += dot(img_ref[...], bb_w_ref[...])                     # (Bt, 768)

    @pl.when(k == pl.num_programs(1) - 1)
    def _finalize():
        # ---- image branch: backbone stand-in + swin.head (768 -> 256) ----
        img_feat = acc_ref[...] + bb_b_ref[...]                          # (Bt, 768)
        img_embed = dot(img_feat, head_w_ref[...]) + head_b_ref[...]     # (Bt, 256)

        # ---- metadata branch (AlphaDropout is identity at inference) ----
        h = relu(dot(meta_ref[...], m1_w_ref[...]) + m1_b_ref[...])      # (Bt, 64)
        h = relu(dot(h, m2_w_ref[...]) + m2_b_ref[...])                  # (Bt, 64)
        h = relu(dot(h, m3_w_ref[...]) + m3_b_ref[...])                  # (Bt, 128)
        meta_embed = dot(h, m4_w_ref[...]) + m4_b_ref[...]               # (Bt, 128)

        # ---- fusion_net: cat([img_embed, meta_embed]) @ W1 as a split matmul
        fused = relu(dot(img_embed, f1a_w_ref[...])
                     + dot(meta_embed, f1b_w_ref[...])
                     + f1_b_ref[...])                                    # (Bt, 256)
        fused = relu(dot(fused, f2_w_ref[...]) + f2_b_ref[...])          # (Bt, 256)

        # ---- classifier (lane-dense padded output block) ----
        logits_ref[...] = (dot(fused, cls_w_ref[...])
                           + cls_b_ref[...]).astype(logits_ref.dtype)


def odir_forward(img, meta, params, num_labels=8, b_tile=None, tk=None):
    """img: (B, C, H, W) float32 NCHW (PyTorch convention); meta: (B, metadata_length)."""
    B = img.shape[0]
    img_flat = img.reshape(B, -1)
    K = img_flat.shape[1]
    ml = meta.shape[1]

    # --- tile sizes ---------------------------------------------------------
    if b_tile is None:
        b_tile = 128 if B >= 128 else _round_up(B, 8)
    if tk is None:
        # (tk, 768) bf16 weight tile ~ 9 MiB; double-buffered pair + resident
        # small weights stays well under v7x's 64 MiB physical VMEM.
        tk = min(_round_up(K, 128), 6144)
    B_pad = _round_up(B, b_tile)
    K_pad = _round_up(K, tk)
    out_pad = _round_up(num_labels, 128)

    f32, bf16 = jnp.float32, jnp.bfloat16

    # --- operand prep: bf16 backbone stream, zero-padded to tile multiples ---
    img_p = jnp.zeros((B_pad, K_pad), bf16).at[:B, :K].set(img_flat.astype(bf16))
    bb_w = jnp.zeros((K_pad, 768), bf16).at[:K, :].set(params["bb_w"].astype(bf16))

    meta_p = jnp.zeros((B_pad, META_PAD), f32).at[:B, :ml].set(meta.astype(f32))
    m1_w = jnp.zeros((META_PAD, params["m1_w"].shape[1]), f32).at[:ml, :].set(params["m1_w"])

    cls_w = jnp.zeros((256, out_pad), f32).at[:, :num_labels].set(params["cls_w"])
    cls_b = jnp.zeros((1, out_pad), f32).at[:, :num_labels].set(params["cls_b"])

    operands = (img_p, meta_p,
                bb_w, params["bb_b"],
                params["head_w"], params["head_b"],
                m1_w, params["m1_b"],
                params["m2_w"], params["m2_b"],
                params["m3_w"], params["m3_b"],
                params["m4_w"], params["m4_b"],
                params["f1a_w"], params["f1b_w"], params["f1_b"],
                params["f2_w"], params["f2_b"],
                cls_w, cls_b)

    grid = (B_pad // b_tile, K_pad // tk)

    def resident(shape):
        # Small weight / bias: one full-array block, same block index at every
        # grid step -> VMEM-resident across the whole grid (no re-DMA).
        return pl.BlockSpec(shape, lambda b, k, _n=len(shape): (0,) * _n)

    in_specs = [
        pl.BlockSpec((b_tile, tk), lambda b, k: (b, k)),        # img (streamed)
        pl.BlockSpec((b_tile, META_PAD), lambda b, k: (b, 0)),  # meta (per-B tile)
        pl.BlockSpec((tk, 768), lambda b, k: (k, 0)),           # bb_w (streamed)
    ] + [resident(op.shape) for op in operands[3:]]

    out_spec = pl.BlockSpec((b_tile, out_pad), lambda b, k: (b, 0))

    # --- VMEM budget: double-buffered streamed tiles + resident small weights
    resident_bytes = sum(int(op.size) * op.dtype.itemsize for op in operands[3:])
    streamed_bytes = 2 * (tk * 768 * 2 + b_tile * tk * 2 + b_tile * META_PAD * 4)
    scratch_bytes = b_tile * 768 * 4 + 2 * b_tile * out_pad * 4
    vmem_limit = min(int(1.5 * (resident_bytes + streamed_bytes + scratch_bytes)) + (4 << 20),
                     48 << 20)  # leave headroom inside v7x's 64 MiB physical VMEM

    flops = (2 * B_pad * K_pad * 768
             + 2 * B_pad * (768 * 256 + META_PAD * 64 + 64 * 64 + 64 * 128
                            + 128 * 128 + 256 * 256 + 128 * 256 + 256 * 256
                            + 256 * out_pad))
    bytes_accessed = (sum(int(op.size) * op.dtype.itemsize for op in operands)
                      + B_pad * out_pad * 4)

    logits_padded = pl.pallas_call(
        _odir_kernel,
        out_shape=jax.ShapeDtypeStruct((B_pad, out_pad), jnp.float32),
        grid_spec=pltpu.PrefetchScalarGridSpec(
            num_scalar_prefetch=0,
            grid=grid,
            in_specs=in_specs,
            out_specs=out_spec,
            scratch_shapes=[pltpu.VMEM((b_tile, 768), jnp.float32)],
        ),
        compiler_params=pltpu.CompilerParams(
            dimension_semantics=("parallel", "arbitrary"),
            vmem_limit_bytes=vmem_limit,
        ),
        cost_estimate=pl.CostEstimate(
            flops=flops, transcendentals=0, bytes_accessed=bytes_accessed),
    )(*operands)

    return logits_padded[:B, :num_labels]


def init_params(key, img_features, metadata_length=4, num_labels=8):
    """Deterministic synthetic weights; Linear weights stored (in, out), bias (1, out)."""
    meta_hidden = [64, 64, 128]

    def linear(k, din, dout, scale=0.02):
        kw, kb = jax.random.split(k)
        w = jax.random.normal(kw, (din, dout), jnp.float32) * scale
        b = jax.random.normal(kb, (1, dout), jnp.float32) * scale
        return w, b

    keys = jax.random.split(key, 10)
    p = {}
    p["bb_w"], p["bb_b"] = linear(keys[0], img_features, 768)        # backbone stand-in
    p["head_w"], p["head_b"] = linear(keys[1], 768, 256)             # swin.head
    p["m1_w"], p["m1_b"] = linear(keys[2], metadata_length, meta_hidden[0])
    p["m2_w"], p["m2_b"] = linear(keys[3], meta_hidden[0], meta_hidden[1])
    p["m3_w"], p["m3_b"] = linear(keys[4], meta_hidden[1], meta_hidden[2])
    p["m4_w"], p["m4_b"] = linear(keys[5], 128, 128)
    f1_w, p["f1_b"] = linear(keys[6], 384, 256)                      # fusion Linear(384,256)
    p["f1a_w"] = f1_w[:256, :]                                       # rows for img_embed
    p["f1b_w"] = f1_w[256:, :]                                       # rows for meta_embed
    p["f2_w"], p["f2_b"] = linear(keys[7], 256, 256)
    p["cls_w"], p["cls_b"] = linear(keys[8], 256, num_labels)
    return p


def reference_forward(img, meta, params):
    """Pure-JAX reference mirroring the PyTorch module (eval mode).

    Uses the same bf16-rounded backbone operands the kernel consumes so the
    comparison is apples-to-apples (accumulation stays f32 in both paths)."""
    B = img.shape[0]
    x = img.reshape(B, -1).astype(jnp.bfloat16).astype(jnp.float32)
    bb_w = params["bb_w"].astype(jnp.bfloat16).astype(jnp.float32)
    img_feat = x @ bb_w + params["bb_b"]
    img_embed = img_feat @ params["head_w"] + params["head_b"]

    h = jax.nn.relu(meta @ params["m1_w"] + params["m1_b"])
    h = jax.nn.relu(h @ params["m2_w"] + params["m2_b"])
    h = jax.nn.relu(h @ params["m3_w"] + params["m3_b"])
    meta_embed = h @ params["m4_w"] + params["m4_b"]

    hidden = jnp.concatenate([img_embed, meta_embed], axis=1)        # (B, 384)
    f1_w = jnp.concatenate([params["f1a_w"], params["f1b_w"]], axis=0)
    h = jax.nn.relu(hidden @ f1_w + params["f1_b"])
    h = jax.nn.relu(h @ params["f2_w"] + params["f2_b"])
    return h @ params["cls_w"] + params["cls_b"]


if __name__ == "__main__":
    B, C, H, W = 2, 4, 16, 16          # small synthetic stand-in for (B, 3, 224, 224)
    METADATA_LENGTH = 4
    NUM_LABELS = 8

    key = jax.random.PRNGKey(0)
    k_img, k_meta, k_par = jax.random.split(key, 3)

    img = jax.random.normal(k_img, (B, C, H, W), jnp.float32)        # NCHW like PyTorch
    meta = jax.random.normal(k_meta, (B, METADATA_LENGTH), jnp.float32)
    params = init_params(k_par, img_features=C * H * W,
                         metadata_length=METADATA_LENGTH, num_labels=NUM_LABELS)

    # tk=256 at K=1024 gives 4 reduction steps -> exercises the K-tiled
    # accumulate / pl.when init / finalize path even at toy size.
    logits = odir_forward(img, meta, params, num_labels=NUM_LABELS, tk=256)
    logits = jax.block_until_ready(logits)

    ref = reference_forward(img, meta, params)
    assert logits.shape == (B, NUM_LABELS)
    assert jnp.allclose(logits, ref, atol=1e-3, rtol=1e-3), \
        "Pallas output mismatch vs JAX reference"

    print("KERNEL_OK")
</pallas_src>

<mosaic_0001>
module attributes {stable_mosaic.version = 11 : i64} {
  func.func @_odir_kernel(%arg0: i32, %arg1: i32, %arg2: memref<8x256xbf16, #tpu.memory_space<vmem>>, %arg3: memref<8x128xf32, #tpu.memory_space<vmem>>, %arg4: memref<256x768xbf16, #tpu.memory_space<vmem>>, %arg5: memref<1x768xf32, #tpu.memory_space<vmem>>, %arg6: memref<768x256xf32, #tpu.memory_space<vmem>>, %arg7: memref<1x256xf32, #tpu.memory_space<vmem>>, %arg8: memref<128x64xf32, #tpu.memory_space<vmem>>, %arg9: memref<1x64xf32, #tpu.memory_space<vmem>>, %arg10: memref<64x64xf32, #tpu.memory_space<vmem>>, %arg11: memref<1x64xf32, #tpu.memory_space<vmem>>, %arg12: memref<64x128xf32, #tpu.memory_space<vmem>>, %arg13: memref<1x128xf32, #tpu.memory_space<vmem>>, %arg14: memref<128x128xf32, #tpu.memory_space<vmem>>, %arg15: memref<1x128xf32, #tpu.memory_space<vmem>>, %arg16: memref<256x256xf32, #tpu.memory_space<vmem>>, %arg17: memref<128x256xf32, #tpu.memory_space<vmem>>, %arg18: memref<1x256xf32, #tpu.memory_space<vmem>>, %arg19: memref<256x256xf32, #tpu.memory_space<vmem>>, %arg20: memref<1x256xf32, #tpu.memory_space<vmem>>, %arg21: memref<256x128xf32, #tpu.memory_space<vmem>>, %arg22: memref<1x128xf32, #tpu.memory_space<vmem>>, %arg23: memref<8x128xf32, #tpu.memory_space<vmem>>, %arg24: memref<8x768xf32, #tpu.memory_space<vmem>>) attributes {dimension_semantics = [#tpu.dimension_semantics<parallel>, #tpu.dimension_semantics<arbitrary>], iteration_bounds = array<i64: 1, 4>, scalar_prefetch = 0 : i64, scratch_operands = 1 : i64, tpu.core_type = #tpu.core_type<tc>, window_params = [{transform_indices = @transform_0, window_bounds = array<i64: 8, 256>}, {transform_indices = @transform_1, window_bounds = array<i64: 8, 128>}, {transform_indices = @transform_2, window_bounds = array<i64: 256, 768>}, {pipeline_mode = #tpu.pipeline_mode<synchronous>, transform_indices = @transform_3, window_bounds = array<i64: 1, 768>}, {pipeline_mode = #tpu.pipeline_mode<synchronous>, transform_indices = @transform_4, window_bounds = array<i64: 768, 256>}, {pipeline_mode = #tpu.pipeline_mode<synchronous>, transform_indices = @transform_5, window_bounds = array<i64: 1, 256>}, {pipeline_mode = #tpu.pipeline_mode<synchronous>, transform_indices = @transform_6, window_bounds = array<i64: 128, 64>}, {pipeline_mode = #tpu.pipeline_mode<synchronous>, transform_indices = @transform_7, window_bounds = array<i64: 1, 64>}, {pipeline_mode = #tpu.pipeline_mode<synchronous>, transform_indices = @transform_8, window_bounds = array<i64: 64, 64>}, {pipeline_mode = #tpu.pipeline_mode<synchronous>, transform_indices = @transform_9, window_bounds = array<i64: 1, 64>}, {pipeline_mode = #tpu.pipeline_mode<synchronous>, transform_indices = @transform_10, window_bounds = array<i64: 64, 128>}, {pipeline_mode = #tpu.pipeline_mode<synchronous>, transform_indices = @transform_11, window_bounds = array<i64: 1, 128>}, {pipeline_mode = #tpu.pipeline_mode<synchronous>, transform_indices = @transform_12, window_bounds = array<i64: 128, 128>}, {pipeline_mode = #tpu.pipeline_mode<synchronous>, transform_indices = @transform_13, window_bounds = array<i64: 1, 128>}, {pipeline_mode = #tpu.pipeline_mode<synchronous>, transform_indices = @transform_14, window_bounds = array<i64: 256, 256>}, {pipeline_mode = #tpu.pipeline_mode<synchronous>, transform_indices = @transform_15, window_bounds = array<i64: 128, 256>}, {pipeline_mode = #tpu.pipeline_mode<synchronous>, transform_indices = @transform_16, window_bounds = array<i64: 1, 256>}, {pipeline_mode = #tpu.pipeline_mode<synchronous>, transform_indices = @transform_17, window_bounds = array<i64: 256, 256>}, {pipeline_mode = #tpu.pipeline_mode<synchronous>, transform_indices = @transform_18, window_bounds = array<i64: 1, 256>}, {pipeline_mode = #tpu.pipeline_mode<synchronous>, transform_indices = @transform_19, window_bounds = array<i64: 256, 128>}, {pipeline_mode = #tpu.pipeline_mode<synchronous>, transform_indices = @transform_20, window_bounds = array<i64: 1, 128>}, {transform_indices = @transform_21, window_bounds = array<i64: 8, 128>}]} {
    %c0_i32 = arith.constant 0 : i32
    %0 = arith.cmpi eq, %arg1, %c0_i32 : i32
    %1 = arith.extui %0 : i1 to i32
    %c0_i32_0 = arith.constant 0 : i32
    %2 = arith.cmpi ne, %1, %c0_i32_0 : i32
    scf.if %2 {
      %cst_9 = arith.constant 0.000000e+00 : f32
      %12 = vector.broadcast %cst_9 : f32 to vector<8x768xf32>
      %c0_10 = arith.constant 0 : index
      %c0_11 = arith.constant 0 : index
      %13 = vector.load %arg24[%c0_10, %c0_11] : memref<8x768xf32, #tpu.memory_space<vmem>>, vector<8x768xf32>
      tpu.vector_store %arg24[%c0_10, %c0_11], %12 {strides = array<i32>} : memref<8x768xf32, #tpu.memory_space<vmem>>, vector<8x768xf32>,
    } else {
    }
    %c0 = arith.constant 0 : index
    %c0_1 = arith.constant 0 : index
    %3 = vector.load %arg24[%c0, %c0_1] : memref<8x768xf32, #tpu.memory_space<vmem>>, vector<8x768xf32>
    %c0_2 = arith.constant 0 : index
    %c0_3 = arith.constant 0 : index
    %4 = vector.load %arg2[%c0_2, %c0_3] : memref<8x256xbf16, #tpu.memory_space<vmem>>, vector<8x256xbf16>
    %c0_4 = arith.constant 0 : index
    %c0_5 = arith.constant 0 : index
    %5 = vector.load %arg4[%c0_4, %c0_5] : memref<256x768xbf16, #tpu.memory_space<vmem>>, vector<256x768xbf16>
    %cst = arith.constant dense<0.000000e+00> : vector<8x768xf32>
    %6 = tpu.matmul %4, %5, %cst {dimension_numbers = #tpu.dot_dimension_numbers<[1], [0], [0], [1], [0, 0, 1, 1], [], []>} : vector<8x256xbf16>, vector<256x768xbf16>, vector<8x768xf32> -> vector<8x768xf32>
    %7 = arith.addf %3, %6 : vector<8x768xf32>
    %c0_6 = arith.constant 0 : index
    %c0_7 = arith.constant 0 : index
    %8 = vector.load %arg24[%c0_6, %c0_7] : memref<8x768xf32, #tpu.memory_space<vmem>>, vector<8x768xf32>
    tpu.vector_store %arg24[%c0_6, %c0_7], %7 {strides = array<i32>} : memref<8x768xf32, #tpu.memory_space<vmem>>, vector<8x768xf32>,
    %c3_i32 = arith.constant 3 : i32
    %9 = arith.cmpi eq, %arg1, %c3_i32 : i32
    %10 = arith.extui %9 : i1 to i32
    %c0_i32_8 = arith.constant 0 : i32
    %11 = arith.cmpi ne, %10, %c0_i32_8 : i32
    scf.if %11 {
      %c0_9 = arith.constant 0 : index
      %c0_10 = arith.constant 0 : index
      %12 = vector.load %arg24[%c0_9, %c0_10] : memref<8x768xf32, #tpu.memory_space<vmem>>, vector<8x768xf32>
      %c0_11 = arith.constant 0 : index
      %c0_12 = arith.constant 0 : index
      %13 = vector.load %arg5[%c0_11, %c0_12] : memref<1x768xf32, #tpu.memory_space<vmem>>, vector<1x768xf32>
      %14 = vector.broadcast %13 : vector<1x768xf32> to vector<8x768xf32>
      %15 = arith.addf %12, %14 : vector<8x768xf32>
      %c0_13 = arith.constant 0 : index
      %c0_14 = arith.constant 0 : index
      %16 = vector.load %arg6[%c0_13, %c0_14] : memref<768x256xf32, #tpu.memory_space<vmem>>, vector<768x256xf32>
      %cst_15 = arith.constant dense<0.000000e+00> : vector<8x256xf32>
      %17 = tpu.matmul %15, %16, %cst_15 {dimension_numbers = #tpu.dot_dimension_numbers<[1], [0], [0], [1], [0, 0, 1, 1], [], []>} : vector<8x768xf32>, vector<768x256xf32>, vector<8x256xf32> -> vector<8x256xf32>
      %c0_16 = arith.constant 0 : index
      %c0_17 = arith.constant 0 : index
      %18 = vector.load %arg7[%c0_16, %c0_17] : memref<1x256xf32, #tpu.memory_space<vmem>>, vector<1x256xf32>
      %19 = vector.broadcast %18 : vector<1x256xf32> to vector<8x256xf32>
      %20 = arith.addf %17, %19 : vector<8x256xf32>
      %c0_18 = arith.constant 0 : index
      %c0_19 = arith.constant 0 : index
      %21 = vector.load %arg3[%c0_18, %c0_19] : memref<8x128xf32, #tpu.memory_space<vmem>>, vector<8x128xf32>
      %c0_20 = arith.constant 0 : index
      %c0_21 = arith.constant 0 : index
      %22 = vector.load %arg8[%c0_20, %c0_21] : memref<128x64xf32, #tpu.memory_space<vmem>>, vector<128x64xf32>
      %cst_22 = arith.constant dense<0.000000e+00> : vector<8x64xf32>
      %23 = tpu.matmul %21, %22, %cst_22 {dimension_numbers = #tpu.dot_dimension_numbers<[1], [0], [0], [1], [0, 0, 1, 1], [], []>} : vector<8x128xf32>, vector<128x64xf32>, vector<8x64xf32> -> vector<8x64xf32>
      %c0_23 = arith.constant 0 : index
      %c0_24 = arith.constant 0 : index
      %24 = vector.load %arg9[%c0_23, %c0_24] : memref<1x64xf32, #tpu.memory_space<vmem>>, vector<1x64xf32>
      %25 = vector.broadcast %24 : vector<1x64xf32> to vector<8x64xf32>
      %26 = arith.addf %23, %25 : vector<8x64xf32>
      %cst_25 = arith.constant 0.000000e+00 : f32
      %27 = vector.broadcast %cst_25 : f32 to vector<8x64xf32>
      %28 = arith.maximumf %26, %27 : vector<8x64xf32>
      %c0_26 = arith.constant 0 : index
      %c0_27 = arith.constant 0 : index
      %29 = vector.load %arg10[%c0_26, %c0_27] : memref<64x64xf32, #tpu.memory_space<vmem>>, vector<64x64xf32>
      %cst_28 = arith.constant dense<0.000000e+00> : vector<8x64xf32>
      %30 = tpu.matmul %28, %29, %cst_28 {dimension_numbers = #tpu.dot_dimension_numbers<[1], [0], [0], [1], [0, 0, 1, 1], [], []>} : vector<8x64xf32>, vector<64x64xf32>, vector<8x64xf32> -> vector<8x64xf32>
      %c0_29 = arith.constant 0 : index
      %c0_30 = arith.constant 0 : index
      %31 = vector.load %arg11[%c0_29, %c0_30] : memref<1x64xf32, #tpu.memory_space<vmem>>, vector<1x64xf32>
      %32 = vector.broadcast %31 : vector<1x64xf32> to vector<8x64xf32>
      %33 = arith.addf %30, %32 : vector<8x64xf32>
      %cst_31 = arith.constant 0.000000e+00 : f32
      %34 = vector.broadcast %cst_31 : f32 to vector<8x64xf32>
      %35 = arith.maximumf %33, %34 : vector<8x64xf32>
      %c0_32 = arith.constant 0 : index
      %c0_33 = arith.constant 0 : index
      %36 = vector.load %arg12[%c0_32, %c0_33] : memref<64x128xf32, #tpu.memory_space<vmem>>, vector<64x128xf32>
      %cst_34 = arith.constant dense<0.000000e+00> : vector<8x128xf32>
      %37 = tpu.matmul %35, %36, %cst_34 {dimension_numbers = #tpu.dot_dimension_numbers<[1], [0], [0], [1], [0, 0, 1, 1], [], []>} : vector<8x64xf32>, vector<64x128xf32>, vector<8x128xf32> -> vector<8x128xf32>
      %c0_35 = arith.constant 0 : index
      %c0_36 = arith.constant 0 : index
      %38 = vector.load %arg13[%c0_35, %c0_36] : memref<1x128xf32, #tpu.memory_space<vmem>>, vector<1x128xf32>
      %39 = vector.broadcast %38 : vector<1x128xf32> to vector<8x128xf32>
      %40 = arith.addf %37, %39 : vector<8x128xf32>
      %cst_37 = arith.constant 0.000000e+00 : f32
      %41 = vector.broadcast %cst_37 : f32 to vector<8x128xf32>
      %42 = arith.maximumf %40, %41 : vector<8x128xf32>
      %c0_38 = arith.constant 0 : index
      %c0_39 = arith.constant 0 : index
      %43 = vector.load %arg14[%c0_38, %c0_39] : memref<128x128xf32, #tpu.memory_space<vmem>>, vector<128x128xf32>
      %cst_40 = arith.constant dense<0.000000e+00> : vector<8x128xf32>
      %44 = tpu.matmul %42, %43, %cst_40 {dimension_numbers = #tpu.dot_dimension_numbers<[1], [0], [0], [1], [0, 0, 1, 1], [], []>} : vector<8x128xf32>, vector<128x128xf32>, vector<8x128xf32> -> vector<8x128xf32>
      %c0_41 = arith.constant 0 : index
      %c0_42 = arith.constant 0 : index
      %45 = vector.load %arg15[%c0_41, %c0_42] : memref<1x128xf32, #tpu.memory_space<vmem>>, vector<1x128xf32>
      %46 = vector.broadcast %45 : vector<1x128xf32> to vector<8x128xf32>
      %47 = arith.addf %44, %46 : vector<8x128xf32>
      %c0_43 = arith.constant 0 : index
      %c0_44 = arith.constant 0 : index
      %48 = vector.load %arg16[%c0_43, %c0_44] : memref<256x256xf32, #tpu.memory_space<vmem>>, vector<256x256xf32>
      %cst_45 = arith.constant dense<0.000000e+00> : vector<8x256xf32>
      %49 = tpu.matmul %20, %48, %cst_45 {dimension_numbers = #tpu.dot_dimension_numbers<[1], [0], [0], [1], [0, 0, 1, 1], [], []>} : vector<8x256xf32>, vector<256x256xf32>, vector<8x256xf32> -> vector<8x256xf32>
      %c0_46 = arith.constant 0 : index
      %c0_47 = arith.constant 0 : index
      %50 = vector.load %arg17[%c0_46, %c0_47] : memref<128x256xf32, #tpu.memory_space<vmem>>, vector<128x256xf32>
      %cst_48 = arith.constant dense<0.000000e+00> : vector<8x256xf32>
      %51 = tpu.matmul %47, %50, %cst_48 {dimension_numbers = #tpu.dot_dimension_numbers<[1], [0], [0], [1], [0, 0, 1, 1], [], []>} : vector<8x128xf32>, vector<128x256xf32>, vector<8x256xf32> -> vector<8x256xf32>
      %52 = arith.addf %49, %51 : vector<8x256xf32>
      %c0_49 = arith.constant 0 : index
      %c0_50 = arith.constant 0 : index
      %53 = vector.load %arg18[%c0_49, %c0_50] : memref<1x256xf32, #tpu.memory_space<vmem>>, vector<1x256xf32>
      %54 = vector.broadcast %53 : vector<1x256xf32> to vector<8x256xf32>
      %55 = arith.addf %52, %54 : vector<8x256xf32>
      %cst_51 = arith.constant 0.000000e+00 : f32
      %56 = vector.broadcast %cst_51 : f32 to vector<8x256xf32>
      %57 = arith.maximumf %55, %56 : vector<8x256xf32>
      %c0_52 = arith.constant 0 : index
      %c0_53 = arith.constant 0 : index
      %58 = vector.load %arg19[%c0_52, %c0_53] : memref<256x256xf32, #tpu.memory_space<vmem>>, vector<256x256xf32>
      %cst_54 = arith.constant dense<0.000000e+00> : vector<8x256xf32>
      %59 = tpu.matmul %57, %58, %cst_54 {dimension_numbers = #tpu.dot_dimension_numbers<[1], [0], [0], [1], [0, 0, 1, 1], [], []>} : vector<8x256xf32>, vector<256x256xf32>, vector<8x256xf32> -> vector<8x256xf32>
      %c0_55 = arith.constant 0 : index
      %c0_56 = arith.constant 0 : index
      %60 = vector.load %arg20[%c0_55, %c0_56] : memref<1x256xf32, #tpu.memory_space<vmem>>, vector<1x256xf32>
      %61 = vector.broadcast %60 : vector<1x256xf32> to vector<8x256xf32>
      %62 = arith.addf %59, %61 : vector<8x256xf32>
      %cst_57 = arith.constant 0.000000e+00 : f32
      %63 = vector.broadcast %cst_57 : f32 to vector<8x256xf32>
      %64 = arith.maximumf %62, %63 : vector<8x256xf32>
      %c0_58 = arith.constant 0 : index
      %c0_59 = arith.constant 0 : index
      %65 = vector.load %arg21[%c0_58, %c0_59] : memref<256x128xf32, #tpu.memory_space<vmem>>, vector<256x128xf32>
      %cst_60 = arith.constant dense<0.000000e+00> : vector<8x128xf32>
      %66 = tpu.matmul %64, %65, %cst_60 {dimension_numbers = #tpu.dot_dimension_numbers<[1], [0], [0], [1], [0, 0, 1, 1], [], []>} : vector<8x256xf32>, vector<256x128xf32>, vector<8x128xf32> -> vector<8x128xf32>
      %c0_61 = arith.constant 0 : index
      %c0_62 = arith.constant 0 : index
      %67 = vector.load %arg22[%c0_61, %c0_62] : memref<1x128xf32, #tpu.memory_space<vmem>>, vector<1x128xf32>
      %68 = vector.broadcast %67 : vector<1x128xf32> to vector<8x128xf32>
      %69 = arith.addf %66, %68 : vector<8x128xf32>
      %c0_63 = arith.constant 0 : index
      %c0_64 = arith.constant 0 : index
      %70 = vector.load %arg23[%c0_63, %c0_64] : memref<8x128xf32, #tpu.memory_space<vmem>>, vector<8x128xf32>
      tpu.vector_store %arg23[%c0_63, %c0_64], %69 {strides = array<i32>} : memref<8x128xf32, #tpu.memory_space<vmem>>, vector<8x128xf32>,
    } else {
    }
    return
  }
  func.func @transform_0(%arg0: i32, %arg1: i32) -> (i32, i32) {
    %c0_i32 = arith.constant 0 : i32
    return %arg0, %arg1 : i32, i32
  }
  func.func @transform_1(%arg0: i32, %arg1: i32) -> (i32, i32) {
    %c0_i32 = arith.constant 0 : i32
    %c0_i32_0 = arith.constant 0 : i32
    return %arg0, %c0_i32 : i32, i32
  }
  func.func @transform_2(%arg0: i32, %arg1: i32) -> (i32, i32) {
    %c0_i32 = arith.constant 0 : i32
    %c0_i32_0 = arith.constant 0 : i32
    return %arg1, %c0_i32 : i32, i32
  }
  func.func @transform_3(%arg0: i32, %arg1: i32) -> (i32, i32) {
    %c0_i32 = arith.constant 0 : i32
    %c0_i32_0 = arith.constant 0 : i32
    %c0_i32_1 = arith.constant 0 : i32
    return %c0_i32, %c0_i32_0 : i32, i32
  }
  func.func @transform_4(%arg0: i32, %arg1: i32) -> (i32, i32) {
    %c0_i32 = arith.constant 0 : i32
    %c0_i32_0 = arith.constant 0 : i32
    %c0_i32_1 = arith.constant 0 : i32
    return %c0_i32, %c0_i32_0 : i32, i32
  }
  func.func @transform_5(%arg0: i32, %arg1: i32) -> (i32, i32) {
    %c0_i32 = arith.constant 0 : i32
    %c0_i32_0 = arith.constant 0 : i32
    %c0_i32_1 = arith.constant 0 : i32
    return %c0_i32, %c0_i32_0 : i32, i32
  }
  func.func @transform_6(%arg0: i32, %arg1: i32) -> (i32, i32) {
    %c0_i32 = arith.constant 0 : i32
    %c0_i32_0 = arith.constant 0 : i32
    %c0_i32_1 = arith.constant 0 : i32
    return %c0_i32, %c0_i32_0 : i32, i32
  }
  func.func @transform_7(%arg0: i32, %arg1: i32) -> (i32, i32) {
    %c0_i32 = arith.constant 0 : i32
    %c0_i32_0 = arith.constant 0 : i32
    %c0_i32_1 = arith.constant 0 : i32
    return %c0_i32, %c0_i32_0 : i32, i32
  }
  func.func @transform_8(%arg0: i32, %arg1: i32) -> (i32, i32) {
    %c0_i32 = arith.constant 0 : i32
    %c0_i32_0 = arith.constant 0 : i32
    %c0_i32_1 = arith.constant 0 : i32
    return %c0_i32, %c0_i32_0 : i32, i32
  }
  func.func @transform_9(%arg0: i32, %arg1: i32) -> (i32, i32) {
    %c0_i32 = arith.constant 0 : i32
    %c0_i32_0 = arith.constant 0 : i32
    %c0_i32_1 = arith.constant 0 : i32
    return %c0_i32, %c0_i32_0 : i32, i32
  }
  func.func @transform_10(%arg0: i32, %arg1: i32) -> (i32, i32) {
    %c0_i32 = arith.constant 0 : i32
    %c0_i32_0 = arith.constant 0 : i32
    %c0_i32_1 = arith.constant 0 : i32
    return %c0_i32, %c0_i32_0 : i32, i32
  }
  func.func @transform_11(%arg0: i32, %arg1: i32) -> (i32, i32) {
    %c0_i32 = arith.constant 0 : i32
    %c0_i32_0 = arith.constant 0 : i32
    %c0_i32_1 = arith.constant 0 : i32
    return %c0_i32, %c0_i32_0 : i32, i32
  }
  func.func @transform_12(%arg0: i32, %arg1: i32) -> (i32, i32) {
    %c0_i32 = arith.constant 0 : i32
    %c0_i32_0 = arith.constant 0 : i32
    %c0_i32_1 = arith.constant 0 : i32
    return %c0_i32, %c0_i32_0 : i32, i32
  }
  func.func @transform_13(%arg0: i32, %arg1: i32) -> (i32, i32) {
    %c0_i32 = arith.constant 0 : i32
    %c0_i32_0 = arith.constant 0 : i32
    %c0_i32_1 = arith.constant 0 : i32
    return %c0_i32, %c0_i32_0 : i32, i32
  }
  func.func @transform_14(%arg0: i32, %arg1: i32) -> (i32, i32) {
    %c0_i32 = arith.constant 0 : i32
    %c0_i32_0 = arith.constant 0 : i32
    %c0_i32_1 = arith.constant 0 : i32
    return %c0_i32, %c0_i32_0 : i32, i32
  }
  func.func @transform_15(%arg0: i32, %arg1: i32) -> (i32, i32) {
    %c0_i32 = arith.constant 0 : i32
    %c0_i32_0 = arith.constant 0 : i32
    %c0_i32_1 = arith.constant 0 : i32
    return %c0_i32, %c0_i32_0 : i32, i32
  }
  func.func @transform_16(%arg0: i32, %arg1: i32) -> (i32, i32) {
    %c0_i32 = arith.constant 0 : i32
    %c0_i32_0 = arith.constant 0 : i32
    %c0_i32_1 = arith.constant 0 : i32
    return %c0_i32, %c0_i32_0 : i32, i32
  }
  func.func @transform_17(%arg0: i32, %arg1: i32) -> (i32, i32) {
    %c0_i32 = arith.constant 0 : i32
    %c0_i32_0 = arith.constant 0 : i32
    %c0_i32_1 = arith.constant 0 : i32
    return %c0_i32, %c0_i32_0 : i32, i32
  }
  func.func @transform_18(%arg0: i32, %arg1: i32) -> (i32, i32) {
    %c0_i32 = arith.constant 0 : i32
    %c0_i32_0 = arith.constant 0 : i32
    %c0_i32_1 = arith.constant 0 : i32
    return %c0_i32, %c0_i32_0 : i32, i32
  }
  func.func @transform_19(%arg0: i32, %arg1: i32) -> (i32, i32) {
    %c0_i32 = arith.constant 0 : i32
    %c0_i32_0 = arith.constant 0 : i32
    %c0_i32_1 = arith.constant 0 : i32
    return %c0_i32, %c0_i32_0 : i32, i32
  }
  func.func @transform_20(%arg0: i32, %arg1: i32) -> (i32, i32) {
    %c0_i32 = arith.constant 0 : i32
    %c0_i32_0 = arith.constant 0 : i32
    %c0_i32_1 = arith.constant 0 : i32
    return %c0_i32, %c0_i32_0 : i32, i32
  }
  func.func @transform_21(%arg0: i32, %arg1: i32) -> (i32, i32) {
    %c0_i32 = arith.constant 0 : i32
    %c0_i32_0 = arith.constant 0 : i32
    return %arg0, %c0_i32 : i32, i32
  }
}

</mosaic_0001>

<llo_original>
// kernel: tpu_custom_call.1
$region0: #{tpu_custom_call.1}
  #allocation0 [shape = 'u32[]', space=smem, size = 0x4, offset = 0x4, fixed_abs, tag = 'smem constant byte address 0x4 - core index']
  #allocation1 [shape = 'u32[72,128]{1,0:T(1,128)}', space=vmem, size = 0x9000, scoped, tag = 'internal scratch']
  #allocation2 [shape = 'f32[8,768]{1,0:T(8,128)}', space=vmem, size = 0x6000, scoped, tag = 'scratch operand']
  %s0 = inlined_call_operand.hbm [shape: bf16[8,1024], index: 0, kind: input, shape index: {}]
  %s1 = inlined_call_operand.hbm [shape: f32[8,128], index: 1, kind: input, shape index: {}]
  %s2 = inlined_call_operand.hbm [shape: bf16[1024,768], index: 2, kind: input, shape index: {}]
  %s3 = inlined_call_operand.hbm [shape: f32[1,768], index: 3, kind: input, shape index: {}]
  %s4 = inlined_call_operand.hbm [shape: f32[768,256], index: 4, kind: input, shape index: {}]
  %s5 = inlined_call_operand.hbm [shape: f32[1,256], index: 5, kind: input, shape index: {}]
  %s6 = inlined_call_operand.vmem [shape: f32[128,64], index: 6, kind: input, shape index: {}]
  %s7 = inlined_call_operand.hbm [shape: f32[1,64], index: 7, kind: input, shape index: {}]
  %s8 = inlined_call_operand.hbm [shape: f32[64,64], index: 8, kind: input, shape index: {}]
  %s9 = inlined_call_operand.hbm [shape: f32[1,64], index: 9, kind: input, shape index: {}]
  %s10 = inlined_call_operand.hbm [shape: f32[64,128], index: 10, kind: input, shape index: {}]
  %s11 = inlined_call_operand.hbm [shape: f32[1,128], index: 11, kind: input, shape index: {}]
  %s12 = inlined_call_operand.hbm [shape: f32[128,128], index: 12, kind: input, shape index: {}]
  %s13 = inlined_call_operand.hbm [shape: f32[1,128], index: 13, kind: input, shape index: {}]
  %s14 = inlined_call_operand.hbm [shape: f32[256,256], index: 14, kind: input, shape index: {}]
  %s15 = inlined_call_operand.hbm [shape: f32[128,256], index: 15, kind: input, shape index: {}]
  %s16 = inlined_call_operand.hbm [shape: f32[1,256], index: 16, kind: input, shape index: {}]
  %s17 = inlined_call_operand.hbm [shape: f32[256,256], index: 17, kind: input, shape index: {}]
  %s18 = inlined_call_operand.hbm [shape: f32[1,256], index: 18, kind: input, shape index: {}]
  %s19 = inlined_call_operand.hbm [shape: f32[256,128], index: 19, kind: input, shape index: {}]
  %s20 = inlined_call_operand.hbm [shape: f32[1,128], index: 20, kind: input, shape index: {}]
  %s21 = inlined_call_operand.hbm [shape: f32[8,128], index: 21, kind: output, shape index: {}]
  %s22 = sld [smem:[#allocation0]]
  $region205: #{tpu_custom_call.1} parent=0
    _
  %s24 = ssub.s32 1, %s22
  %s25 = scalar_select 0, %s24, %s22
  $region1: #{tpu_custom_call.1} parent=0
    #allocation3 [shape = 'u8[8192]{0}', space=vmem, size = 0x2000, scoped, tag = 'input window, operand 0']
    #allocation4 [shape = 's32[2]{0}', space=sflag, size = 0x8, scoped, tag = 'scoped memory for tpu_custom_call.1']
    #allocation5 [shape = 's32[2]{0}', space=sflag, size = 0x8, scoped, tag = 'scoped memory for tpu_custom_call.1']
    #allocation6 [shape = 'u8[4096]{0}', space=vmem, size = 0x1000, scoped, tag = 'input window, operand 1, single buffered']
    #allocation7 [shape = 's32[1]{0}', space=sflag, size = 0x4, scoped, tag = 'scoped memory for tpu_custom_call.1']
    #allocation8 [shape = 'u8[786432]{0}', space=vmem, size = 0xc0000, scoped, tag = 'input window, operand 2']
    #allocation9 [shape = 'u8[3072]{0}', space=vmem, size = 0xc00, scoped, tag = 'input window, operand 3, single buffered']
    #allocation10 [shape = 'u8[786432]{0}', space=vmem, size = 0xc0000, scoped, tag = 'input window, operand 4, single buffered']
    #allocation11 [shape = 's32[1]{0}', space=sflag, size = 0x4, scoped, tag = 'scoped memory for tpu_custom_call.1']
    #allocation12 [shape = 'u8[1024]{0}', space=vmem, size = 0x400, scoped, tag = 'input window, operand 5, single buffered']
    #allocation13 [shape = 'u8[512]{0}', space=vmem, size = 0x400, scoped, tag = 'input window, operand 7, single buffered']
    #allocation14 [shape = 's32[1]{0}', space=sflag, size = 0x4, scoped, tag = 'scoped memory for tpu_custom_call.1']
    #allocation15 [shape = 'u8[32768]{0}', space=vmem, size = 0x8000, scoped, tag = 'input window, operand 8, single buffered']
    #allocation16 [shape = 'u8[512]{0}', space=vmem, size = 0x400, scoped, tag = 'input window, operand 9, single buffered']
    #allocation17 [shape = 's32[1]{0}', space=sflag, size = 0x4, scoped, tag = 'scoped memory for tpu_custom_call.1']
    #allocation18 [shape = 'u8[32768]{0}', space=vmem, size = 0x8000, scoped, tag = 'input window, operand 10, single buffered']
    #allocation19 [shape = 'u8[512]{0}', space=vmem, size = 0x400, scoped, tag = 'input window, operand 11, single buffered']
    #allocation20 [shape = 's32[1]{0}', space=sflag, size = 0x4, scoped, tag = 'scoped memory for tpu_custom_call.1']
    #allocation21 [shape = 'u8[65536]{0}', space=vmem, size = 0x10000, scoped, tag = 'input window, operand 12, single buffered']
    #allocation22 [shape = 'u8[512]{0}', space=vmem, size = 0x400, scoped, tag = 'input window, operand 13, single buffered']
    #allocation23 [shape = 's32[1]{0}', space=sflag, size = 0x4, scoped, tag = 'scoped memory for tpu_custom_call.1']
    #allocation24 [shape = 'u8[262144]{0}', space=vmem, size = 0x40000, scoped, tag = 'input window, operand 14, single buffered']
    #allocation25 [shape = 'u8[131072]{0}', space=vmem, size = 0x20000, scoped, tag = 'input window, operand 15, single buffered']
    #allocation26 [shape = 's32[1]{0}', space=sflag, size = 0x4, scoped, tag = 'scoped memory for tpu_custom_call.1']
    #allocation27 [shape = 'u8[1024]{0}', space=vmem, size = 0x400, scoped, tag = 'input window, operand 16, single buffered']
    #allocation28 [shape = 'u8[262144]{0}', space=vmem, size = 0x40000, scoped, tag = 'input window, operand 17, single buffered']
    #allocation29 [shape = 's32[1]{0}', space=sflag, size = 0x4, scoped, tag = 'scoped memory for tpu_custom_call.1']
    #allocation30 [shape = 'u8[1024]{0}', space=vmem, size = 0x400, scoped, tag = 'input window, operand 18, single buffered']
    #allocation31 [shape = 'u8[131072]{0}', space=vmem, size = 0x20000, scoped, tag = 'input window, operand 19, single buffered']
    #allocation32 [shape = 's32[1]{0}', space=sflag, size = 0x4, scoped, tag = 'scoped memory for tpu_custom_call.1']
    #allocation33 [shape = 'u8[512]{0}', space=vmem, size = 0x400, scoped, tag = 'input window, operand 20, single buffered']
    #allocation34 [shape = 'u8[4096]{0}', space=vmem, size = 0x1000, scoped, tag = 'output window, operand 0, single buffered']
    %26 = vsyncpa [#allocation4], 0
    %s27 = scalar_lea.sflag [#allocation4], 1
    %28 = vsyncpa %s27, 0
    %29 = vsyncpa [#allocation7], 0
    %30 = vsyncpa [#allocation11], 0
    %31 = vsyncpa [#allocation14], 0
    %32 = vsyncpa [#allocation17], 0
    %33 = vsyncpa [#allocation20], 0
    %34 = vsyncpa [#allocation23], 0
    %35 = vsyncpa [#allocation26], 0
    %36 = vsyncpa [#allocation29], 0
    %37 = vsyncpa [#allocation32], 0
    %38 = vsyncpa [#allocation5], 0
    loop: start=0, step=1, limit=6
    $region2: #{tpu_custom_call.1} parent=1 // loop_pre_header
      _
    $region3: #{tpu_custom_call.1} parent=1 // loop_header
      %s40 = sphi 0, %s44
      %p41 = scmp.ge.s32.totalorder %s40, 6
      %s47 = sphi 0, %s59
      %s48 = sphi 0, %s55
      %s49 = sphi 0, %s47
      %s50 = sphi 0, %s48
      %s51 = sphi 0, %s49
      %s52 = sphi 0, %s50
      %s64 = sphi 0, %s66
      %s67 = sphi 0, %s64
      %s68 = sphi 0, %s67
      %s84 = sphi 0, %s68
      %s90 = sphi 0, %s92
      %s93 = sphi 0, %s90
      %s94 = sphi 0, %s93
      %s110 = sphi 0, %s94
      %s116 = sphi 0, %s118
      %s119 = sphi 0, %s116
      %s120 = sphi 0, %s119
      %s136 = sphi 0, %s120
      %s140 = sphi 0, %s140
      %s142 = sphi 0, %s140
      %s143 = sphi 0, %s142
      %s157 = sphi 0, %s143
      %s161 = sphi 0, %s161
      %s163 = sphi 0, %s161
      %s164 = sphi 0, %s163
      %s178 = sphi 0, %s164
      %s182 = sphi 0, %s182
      %s184 = sphi 0, %s182
      %s185 = sphi 0, %s184
      %s199 = sphi 0, %s185
      %s203 = sphi 0, %s203
      %s205 = sphi 0, %s203
      %s206 = sphi 0, %s205
      %s220 = sphi 0, %s206
      %s224 = sphi 0, %s224
      %s226 = sphi 0, %s224
      %s227 = sphi 0, %s226
      %s241 = sphi 0, %s227
      %s245 = sphi 0, %s245
      %s247 = sphi 0, %s245
      %s248 = sphi 0, %s247
      %s262 = sphi 0, %s248
      %s266 = sphi 0, %s266
      %s268 = sphi 0, %s266
      %s269 = sphi 0, %s268
      %s283 = sphi 0, %s269
      %s287 = sphi 0, %s287
      %s289 = sphi 0, %s287
      %s290 = sphi 0, %s289
      %s304 = sphi 0, %s290
      %s308 = sphi 0, %s308
      %s310 = sphi 0, %s308
      %s311 = sphi 0, %s310
      %s325 = sphi 0, %s311
      %s329 = sphi 0, %s329
      %s331 = sphi 0, %s329
      %s332 = sphi 0, %s331
      %s346 = sphi 0, %s332
      %s350 = sphi 0, %s350
      %s352 = sphi 0, %s350
      %s353 = sphi 0, %s352
      %s367 = sphi 0, %s353
      %s371 = sphi 0, %s371
      %s373 = sphi 0, %s371
      %s374 = sphi 0, %s373
      %s388 = sphi 0, %s374
      %s392 = sphi 0, %s392
      %s394 = sphi 0, %s392
      %s395 = sphi 0, %s394
      %s409 = sphi 0, %s395
      %s413 = sphi 0, %s413
      %s415 = sphi 0, %s413
      %s416 = sphi 0, %s415
      %s430 = sphi 0, %s416
      %s434 = sphi 0, %s434
      %s436 = sphi 0, %s434
      %s437 = sphi 0, %s436
      %s451 = sphi 0, %s437
      %s455 = sphi 0, %s455
      %s457 = sphi 0, %s455
      %s458 = sphi 0, %s457
      %s472 = sphi 0, %s458
      %s476 = sphi 0, %s476
      %s478 = sphi 0, %s476
      %s479 = sphi 0, %s478
      %s493 = sphi 0, %s479
      %s497 = sphi 0, %s497
      %s499 = sphi 0, %s497
      %s500 = sphi 0, %s499
      %s514 = sphi 0, %s500
      %s520 = sphi 0, %s522
      %s523 = sphi 0, %s520
      %s524 = sphi 0, %s523
      %s540 = sphi 0, %s524
    $region4: #{tpu_custom_call.1} parent=1 // loop_header_branch
      %43 = sbr.rel (%p41) target = $region8
    $region5: #{tpu_custom_call.1} parent=1 // loop_body
      %s45 = ssub.s32 %s40, 1
      %s46 = ssub.s32 %s40, 2
      %s53 = sadd.s32 1, %s48
      %p54 = scmp.ge.s32.totalorder %s53, 4
      %s55 = scalar_select %p54, 0, %s53
      %s56 = sadd.s32 1, %s47
      %s57 = scalar_select %p54, %s56, %s47
      %p58 = scmp.ge.s32.totalorder %s57, 1
      %s59 = scalar_select %p58, 0, %s57
      %s60 = ssub.s32 %s47, %s59
      %s61 = ssub.s32 %s48, %s55
      %s62 = sor.u32 %s60, %s61
      %p63 = scmp.eq.s32.totalorder %s62, 0
      %s65 = sadd.s32 %s64, 1
      %s66 = scalar_select %p63, %s64, %s65
      %p69 = pneg %p63
      %p70 = scmp.eq.s32.totalorder %s40, 3
      %p71 = por %p69, %p70
      %p72 = scmp.ne.s32.totalorder %s64, %s67
      %p73 = scmp.eq.s32.totalorder %s40, 0
      %p74 = por %p72, %p73
      %p75 = scmp.ne.s32.totalorder %s64, %s67
      %p76 = scmp.eq.s32.totalorder %s45, 3
      %p77 = por %p75, %p76
      %p78 = scmp.ne.s32.totalorder %s67, %s68
      %p79 = scmp.eq.s32.totalorder %s45, 0
      %p80 = por %p78, %p79
      %p81 = scmp.ne.s32.totalorder %s67, %s68
      %p82 = scmp.eq.s32.totalorder %s46, 3
      %p83 = por %p81, %p82
      %p85 = scmp.ne.s32.totalorder %s68, %s84
      %p86 = scmp.eq.s32.totalorder %s46, 0
      %p87 = por %p85, %p86
      %s88 = ssub.s32 %s47, %s59
      %p89 = scmp.eq.s32.totalorder %s88, 0
      %s91 = sadd.s32 %s90, 1
      %s92 = scalar_select %p89, %s90, %s91
      %p95 = pneg %p89
      %p96 = scmp.eq.s32.totalorder %s40, 3
      %p97 = por %p95, %p96
      %p98 = scmp.ne.s32.totalorder %s90, %s93
      %p99 = scmp.eq.s32.totalorder %s40, 0
      %p100 = por %p98, %p99
      %p101 = scmp.ne.s32.totalorder %s90, %s93
      %p102 = scmp.eq.s32.totalorder %s45, 3
      %p103 = por %p101, %p102
      %p104 = scmp.ne.s32.totalorder %s93, %s94
      %p105 = scmp.eq.s32.totalorder %s45, 0
      %p106 = por %p104, %p105
      %p107 = scmp.ne.s32.totalorder %s93, %s94
      %p108 = scmp.eq.s32.totalorder %s46, 3
      %p109 = por %p107, %p108
      %p111 = scmp.ne.s32.totalorder %s94, %s110
      %p112 = scmp.eq.s32.totalorder %s46, 0
      %p113 = por %p111, %p112
      %s114 = ssub.s32 %s48, %s55
      %p115 = scmp.eq.s32.totalorder %s114, 0
      %s117 = sadd.s32 %s116, 1
      %s118 = scalar_select %p115, %s116, %s117
      %p121 = pneg %p115
      %p122 = scmp.eq.s32.totalorder %s40, 3
      %p123 = por %p121, %p122
      %p124 = scmp.ne.s32.totalorder %s116, %s119
      %p125 = scmp.eq.s32.totalorder %s40, 0
      %p126 = por %p124, %p125
      %p127 = scmp.ne.s32.totalorder %s116, %s119
      %p128 = scmp.eq.s32.totalorder %s45, 3
      %p129 = por %p127, %p128
      %p130 = scmp.ne.s32.totalorder %s119, %s120
      %p131 = scmp.eq.s32.totalorder %s45, 0
      %p132 = por %p130, %p131
      %p133 = scmp.ne.s32.totalorder %s119, %s120
      %p134 = scmp.eq.s32.totalorder %s46, 3
      %p135 = por %p133, %p134
      %p137 = scmp.ne.s32.totalorder %s120, %s136
      %p138 = scmp.eq.s32.totalorder %s46, 0
      %p139 = por %p137, %p138
      %s141 = sadd.s32 %s140, 1
      %p144 = scmp.eq.s32.totalorder %s40, 3
      %p145 = scmp.ne.s32.totalorder %s140, %s142
      %p146 = scmp.eq.s32.totalorder %s40, 0
      %p147 = por %p145, %p146
      %p148 = scmp.ne.s32.totalorder %s140, %s142
      %p149 = scmp.eq.s32.totalorder %s45, 3
      %p150 = por %p148, %p149
      %p151 = scmp.ne.s32.totalorder %s142, %s143
      %p152 = scmp.eq.s32.totalorder %s45, 0
      %p153 = por %p151, %p152
      %p154 = scmp.ne.s32.totalorder %s142, %s143
      %p155 = scmp.eq.s32.totalorder %s46, 3
      %p156 = por %p154, %p155
      %p158 = scmp.ne.s32.totalorder %s143, %s157
      %p159 = scmp.eq.s32.totalorder %s46, 0
      %p160 = por %p158, %p159
      %s162 = sadd.s32 %s161, 1
      %p165 = scmp.eq.s32.totalorder %s40, 3
      %p166 = scmp.ne.s32.totalorder %s161, %s163
      %p167 = scmp.eq.s32.totalorder %s40, 0
      %p168 = por %p166, %p167
      %p169 = scmp.ne.s32.totalorder %s161, %s163
      %p170 = scmp.eq.s32.totalorder %s45, 3
      %p171 = por %p169, %p170
      %p172 = scmp.ne.s32.totalorder %s163, %s164
      %p173 = scmp.eq.s32.totalorder %s45, 0
      %p174 = por %p172, %p173
      %p175 = scmp.ne.s32.totalorder %s163, %s164
      %p176 = scmp.eq.s32.totalorder %s46, 3
      %p177 = por %p175, %p176
      %p179 = scmp.ne.s32.totalorder %s164, %s178
      %p180 = scmp.eq.s32.totalorder %s46, 0
      %p181 = por %p179, %p180
      %s183 = sadd.s32 %s182, 1
      %p186 = scmp.eq.s32.totalorder %s40, 3
      %p187 = scmp.ne.s32.totalorder %s182, %s184
      %p188 = scmp.eq.s32.totalorder %s40, 0
      %p189 = por %p187, %p188
      %p190 = scmp.ne.s32.totalorder %s182, %s184
      %p191 = scmp.eq.s32.totalorder %s45, 3
      %p192 = por %p190, %p191
      %p193 = scmp.ne.s32.totalorder %s184, %s185
      %p194 = scmp.eq.s32.totalorder %s45, 0
      %p195 = por %p193, %p194
      %p196 = scmp.ne.s32.totalorder %s184, %s185
      %p197 = scmp.eq.s32.totalorder %s46, 3
      %p198 = por %p196, %p197
      %p200 = scmp.ne.s32.totalorder %s185, %s199
      %p201 = scmp.eq.s32.totalorder %s46, 0
      %p202 = por %p200, %p201
      %s204 = sadd.s32 %s203, 1
      %p207 = scmp.eq.s32.totalorder %s40, 3
      %p208 = scmp.ne.s32.totalorder %s203, %s205
      %p209 = scmp.eq.s32.totalorder %s40, 0
      %p210 = por %p208, %p209
      %p211 = scmp.ne.s32.totalorder %s203, %s205
      %p212 = scmp.eq.s32.totalorder %s45, 3
      %p213 = por %p211, %p212
      %p214 = scmp.ne.s32.totalorder %s205, %s206
      %p215 = scmp.eq.s32.totalorder %s45, 0
      %p216 = por %p214, %p215
      %p217 = scmp.ne.s32.totalorder %s205, %s206
      %p218 = scmp.eq.s32.totalorder %s46, 3
      %p219 = por %p217, %p218
      %p221 = scmp.ne.s32.totalorder %s206, %s220
      %p222 = scmp.eq.s32.totalorder %s46, 0
      %p223 = por %p221, %p222
      %s225 = sadd.s32 %s224, 1
      %p228 = scmp.eq.s32.totalorder %s40, 3
      %p229 = scmp.ne.s32.totalorder %s224, %s226
      %p230 = scmp.eq.s32.totalorder %s40, 0
      %p231 = por %p229, %p230
      %p232 = scmp.ne.s32.totalorder %s224, %s226
      %p233 = scmp.eq.s32.totalorder %s45, 3
      %p234 = por %p232, %p233
      %p235 = scmp.ne.s32.totalorder %s226, %s227
      %p236 = scmp.eq.s32.totalorder %s45, 0
      %p237 = por %p235, %p236
      %p238 = scmp.ne.s32.totalorder %s226, %s227
      %p239 = scmp.eq.s32.totalorder %s46, 3
      %p240 = por %p238, %p239
      %p242 = scmp.ne.s32.totalorder %s227, %s241
      %p243 = scmp.eq.s32.totalorder %s46, 0
      %p244 = por %p242, %p243
      %s246 = sadd.s32 %s245, 1
      %p249 = scmp.eq.s32.totalorder %s40, 3
      %p250 = scmp.ne.s32.totalorder %s245, %s247
      %p251 = scmp.eq.s32.totalorder %s40, 0
      %p252 = por %p250, %p251
      %p253 = scmp.ne.s32.totalorder %s245, %s247
      %p254 = scmp.eq.s32.totalorder %s45, 3
      %p255 = por %p253, %p254
      %p256 = scmp.ne.s32.totalorder %s247, %s248
      %p257 = scmp.eq.s32.totalorder %s45, 0
      %p258 = por %p256, %p257
      %p259 = scmp.ne.s32.totalorder %s247, %s248
      %p260 = scmp.eq.s32.totalorder %s46, 3
      %p261 = por %p259, %p260
      %p263 = scmp.ne.s32.totalorder %s248, %s262
      %p264 = scmp.eq.s32.totalorder %s46, 0
      %p265 = por %p263, %p264
      %s267 = sadd.s32 %s266, 1
      %p270 = scmp.eq.s32.totalorder %s40, 3
      %p271 = scmp.ne.s32.totalorder %s266, %s268
      %p272 = scmp.eq.s32.totalorder %s40, 0
      %p273 = por %p271, %p272
      %p274 = scmp.ne.s32.totalorder %s266, %s268
      %p275 = scmp.eq.s32.totalorder %s45, 3
      %p276 = por %p274, %p275
      %p277 = scmp.ne.s32.totalorder %s268, %s269
      %p278 = scmp.eq.s32.totalorder %s45, 0
      %p279 = por %p277, %p278
      %p280 = scmp.ne.s32.totalorder %s268, %s269
      %p281 = scmp.eq.s32.totalorder %s46, 3
      %p282 = por %p280, %p281
      %p284 = scmp.ne.s32.totalorder %s269, %s283
      %p285 = scmp.eq.s32.totalorder %s46, 0
      %p286 = por %p284, %p285
      %s288 = sadd.s32 %s287, 1
      %p291 = scmp.eq.s32.totalorder %s40, 3
      %p292 = scmp.ne.s32.totalorder %s287, %s289
      %p293 = scmp.eq.s32.totalorder %s40, 0
      %p294 = por %p292, %p293
      %p295 = scmp.ne.s32.totalorder %s287, %s289
      %p296 = scmp.eq.s32.totalorder %s45, 3
      %p297 = por %p295, %p296
      %p298 = scmp.ne.s32.totalorder %s289, %s290
      %p299 = scmp.eq.s32.totalorder %s45, 0
      %p300 = por %p298, %p299
      %p301 = scmp.ne.s32.totalorder %s289, %s290
      %p302 = scmp.eq.s32.totalorder %s46, 3
      %p303 = por %p301, %p302
      %p305 = scmp.ne.s32.totalorder %s290, %s304
      %p306 = scmp.eq.s32.totalorder %s46, 0
      %p307 = por %p305, %p306
      %s309 = sadd.s32 %s308, 1
      %p312 = scmp.eq.s32.totalorder %s40, 3
      %p313 = scmp.ne.s32.totalorder %s308, %s310
      %p314 = scmp.eq.s32.totalorder %s40, 0
      %p315 = por %p313, %p314
      %p316 = scmp.ne.s32.totalorder %s308, %s310
      %p317 = scmp.eq.s32.totalorder %s45, 3
      %p318 = por %p316, %p317
      %p319 = scmp.ne.s32.totalorder %s310, %s311
      %p320 = scmp.eq.s32.totalorder %s45, 0
      %p321 = por %p319, %p320
      %p322 = scmp.ne.s32.totalorder %s310, %s311
      %p323 = scmp.eq.s32.totalorder %s46, 3
      %p324 = por %p322, %p323
      %p326 = scmp.ne.s32.totalorder %s311, %s325
      %p327 = scmp.eq.s32.totalorder %s46, 0
      %p328 = por %p326, %p327
      %s330 = sadd.s32 %s329, 1
      %p333 = scmp.eq.s32.totalorder %s40, 3
      %p334 = scmp.ne.s32.totalorder %s329, %s331
      %p335 = scmp.eq.s32.totalorder %s40, 0
      %p336 = por %p334, %p335
      %p337 = scmp.ne.s32.totalorder %s329, %s331
      %p338 = scmp.eq.s32.totalorder %s45, 3
      %p339 = por %p337, %p338
      %p340 = scmp.ne.s32.totalorder %s331, %s332
      %p341 = scmp.eq.s32.totalorder %s45, 0
      %p342 = por %p340, %p341
      %p343 = scmp.ne.s32.totalorder %s331, %s332
      %p344 = scmp.eq.s32.totalorder %s46, 3
      %p345 = por %p343, %p344
      %p347 = scmp.ne.s32.totalorder %s332, %s346
      %p348 = scmp.eq.s32.totalorder %s46, 0
      %p349 = por %p347, %p348
      %s351 = sadd.s32 %s350, 1
      %p354 = scmp.eq.s32.totalorder %s40, 3
      %p355 = scmp.ne.s32.totalorder %s350, %s352
      %p356 = scmp.eq.s32.totalorder %s40, 0
      %p357 = por %p355, %p356
      %p358 = scmp.ne.s32.totalorder %s350, %s352
      %p359 = scmp.eq.s32.totalorder %s45, 3
      %p360 = por %p358, %p359
      %p361 = scmp.ne.s32.totalorder %s352, %s353
      %p362 = scmp.eq.s32.totalorder %s45, 0
      %p363 = por %p361, %p362
      %p364 = scmp.ne.s32.totalorder %s352, %s353
      %p365 = scmp.eq.s32.totalorder %s46, 3
      %p366 = por %p364, %p365
      %p368 = scmp.ne.s32.totalorder %s353, %s367
      %p369 = scmp.eq.s32.totalorder %s46, 0
      %p370 = por %p368, %p369
      %s372 = sadd.s32 %s371, 1
      %p375 = scmp.eq.s32.totalorder %s40, 3
      %p376 = scmp.ne.s32.totalorder %s371, %s373
      %p377 = scmp.eq.s32.totalorder %s40, 0
      %p378 = por %p376, %p377
      %p379 = scmp.ne.s32.totalorder %s371, %s373
      %p380 = scmp.eq.s32.totalorder %s45, 3
      %p381 = por %p379, %p380
      %p382 = scmp.ne.s32.totalorder %s373, %s374
      %p383 = scmp.eq.s32.totalorder %s45, 0
      %p384 = por %p382, %p383
      %p385 = scmp.ne.s32.totalorder %s373, %s374
      %p386 = scmp.eq.s32.totalorder %s46, 3
      %p387 = por %p385, %p386
      %p389 = scmp.ne.s32.totalorder %s374, %s388
      %p390 = scmp.eq.s32.totalorder %s46, 0
      %p391 = por %p389, %p390
      %s393 = sadd.s32 %s392, 1
      %p396 = scmp.eq.s32.totalorder %s40, 3
      %p397 = scmp.ne.s32.totalorder %s392, %s394
      %p398 = scmp.eq.s32.totalorder %s40, 0
      %p399 = por %p397, %p398
      %p400 = scmp.ne.s32.totalorder %s392, %s394
      %p401 = scmp.eq.s32.totalorder %s45, 3
      %p402 = por %p400, %p401
      %p403 = scmp.ne.s32.totalorder %s394, %s395
      %p404 = scmp.eq.s32.totalorder %s45, 0
      %p405 = por %p403, %p404
      %p406 = scmp.ne.s32.totalorder %s394, %s395
      %p407 = scmp.eq.s32.totalorder %s46, 3
      %p408 = por %p406, %p407
      %p410 = scmp.ne.s32.totalorder %s395, %s409
      %p411 = scmp.eq.s32.totalorder %s46, 0
      %p412 = por %p410, %p411
      %s414 = sadd.s32 %s413, 1
      %p417 = scmp.eq.s32.totalorder %s40, 3
      %p418 = scmp.ne.s32.totalorder %s413, %s415
      %p419 = scmp.eq.s32.totalorder %s40, 0
      %p420 = por %p418, %p419
      %p421 = scmp.ne.s32.totalorder %s413, %s415
      %p422 = scmp.eq.s32.totalorder %s45, 3
      %p423 = por %p421, %p422
      %p424 = scmp.ne.s32.totalorder %s415, %s416
      %p425 = scmp.eq.s32.totalorder %s45, 0
      %p426 = por %p424, %p425
      %p427 = scmp.ne.s32.totalorder %s415, %s416
      %p428 = scmp.eq.s32.totalorder %s46, 3
      %p429 = por %p427, %p428
      %p431 = scmp.ne.s32.totalorder %s416, %s430
      %p432 = scmp.eq.s32.totalorder %s46, 0
      %p433 = por %p431, %p432
      %s435 = sadd.s32 %s434, 1
      %p438 = scmp.eq.s32.totalorder %s40, 3
      %p439 = scmp.ne.s32.totalorder %s434, %s436
      %p440 = scmp.eq.s32.totalorder %s40, 0
      %p441 = por %p439, %p440
      %p442 = scmp.ne.s32.totalorder %s434, %s436
      %p443 = scmp.eq.s32.totalorder %s45, 3
      %p444 = por %p442, %p443
      %p445 = scmp.ne.s32.totalorder %s436, %s437
      %p446 = scmp.eq.s32.totalorder %s45, 0
      %p447 = por %p445, %p446
      %p448 = scmp.ne.s32.totalorder %s436, %s437
      %p449 = scmp.eq.s32.totalorder %s46, 3
      %p450 = por %p448, %p449
      %p452 = scmp.ne.s32.totalorder %s437, %s451
      %p453 = scmp.eq.s32.totalorder %s46, 0
      %p454 = por %p452, %p453
      %s456 = sadd.s32 %s455, 1
      %p459 = scmp.eq.s32.totalorder %s40, 3
      %p460 = scmp.ne.s32.totalorder %s455, %s457
      %p461 = scmp.eq.s32.totalorder %s40, 0
      %p462 = por %p460, %p461
      %p463 = scmp.ne.s32.totalorder %s455, %s457
      %p464 = scmp.eq.s32.totalorder %s45, 3
      %p465 = por %p463, %p464
      %p466 = scmp.ne.s32.totalorder %s457, %s458
      %p467 = scmp.eq.s32.totalorder %s45, 0
      %p468 = por %p466, %p467
      %p469 = scmp.ne.s32.totalorder %s457, %s458
      %p470 = scmp.eq.s32.totalorder %s46, 3
      %p471 = por %p469, %p470
      %p473 = scmp.ne.s32.totalorder %s458, %s472
      %p474 = scmp.eq.s32.totalorder %s46, 0
      %p475 = por %p473, %p474
      %s477 = sadd.s32 %s476, 1
      %p480 = scmp.eq.s32.totalorder %s40, 3
      %p481 = scmp.ne.s32.totalorder %s476, %s478
      %p482 = scmp.eq.s32.totalorder %s40, 0
      %p483 = por %p481, %p482
      %p484 = scmp.ne.s32.totalorder %s476, %s478
      %p485 = scmp.eq.s32.totalorder %s45, 3
      %p486 = por %p484, %p485
      %p487 = scmp.ne.s32.totalorder %s478, %s479
      %p488 = scmp.eq.s32.totalorder %s45, 0
      %p489 = por %p487, %p488
      %p490 = scmp.ne.s32.totalorder %s478, %s479
      %p491 = scmp.eq.s32.totalorder %s46, 3
      %p492 = por %p490, %p491
      %p494 = scmp.ne.s32.totalorder %s479, %s493
      %p495 = scmp.eq.s32.totalorder %s46, 0
      %p496 = por %p494, %p495
      %s498 = sadd.s32 %s497, 1
      %p501 = scmp.eq.s32.totalorder %s40, 3
      %p502 = scmp.ne.s32.totalorder %s497, %s499
      %p503 = scmp.eq.s32.totalorder %s40, 0
      %p504 = por %p502, %p503
      %p505 = scmp.ne.s32.totalorder %s497, %s499
      %p506 = scmp.eq.s32.totalorder %s45, 3
      %p507 = por %p505, %p506
      %p508 = scmp.ne.s32.totalorder %s499, %s500
      %p509 = scmp.eq.s32.totalorder %s45, 0
      %p510 = por %p508, %p509
      %p511 = scmp.ne.s32.totalorder %s499, %s500
      %p512 = scmp.eq.s32.totalorder %s46, 3
      %p513 = por %p511, %p512
      %p515 = scmp.ne.s32.totalorder %s500, %s514
      %p516 = scmp.eq.s32.totalorder %s46, 0
      %p517 = por %p515, %p516
      %s518 = ssub.s32 %s47, %s59
      %p519 = scmp.eq.s32.totalorder %s518, 0
      %s521 = sadd.s32 %s520, 1
      %s522 = scalar_select %p519, %s520, %s521
      %p525 = pneg %p519
      %p526 = scmp.eq.s32.totalorder %s40, 3
      %p527 = por %p525, %p526
      %p528 = scmp.ne.s32.totalorder %s520, %s523
      %p529 = scmp.eq.s32.totalorder %s40, 0
      %p530 = por %p528, %p529
      %p531 = scmp.ne.s32.totalorder %s520, %s523
      %p532 = scmp.eq.s32.totalorder %s45, 3
      %p533 = por %p531, %p532
      %p534 = scmp.ne.s32.totalorder %s523, %s524
      %p535 = scmp.eq.s32.totalorder %s45, 0
      %p536 = por %p534, %p535
      %p537 = scmp.ne.s32.totalorder %s523, %s524
      %p538 = scmp.eq.s32.totalorder %s46, 3
      %p539 = por %p537, %p538
      %p541 = scmp.ne.s32.totalorder %s524, %s540
      %p542 = scmp.eq.s32.totalorder %s46, 0
      %p543 = por %p541, %p542
      %p544 = scmp.le.s32.totalorder 1, %s40
      %p545 = scmp.lt.s32.totalorder %s40, 5
      %p546 = pnand %p544, %p545
      %p547 = pneg %p546
      // Predicated region
      $region9: #{tpu_custom_call.1} parent=5 // pred_check
        _
      $region10: #{tpu_custom_call.1} parent=5 // pred_check_branch
        %549 = sbr.rel (%p546) target = $region12
      $region11: #{tpu_custom_call.1} parent=5 // pred_region
        %s550 = ssub.s32 %s40, 1
        // Predicated region
        $region13: #{tpu_custom_call.1} parent=11 // pred_check
          %p551 = pneg %p106
        $region14: #{tpu_custom_call.1} parent=11 // pred_check_branch
          %553 = sbr.rel (%p551) target = $region16
        $region15: #{tpu_custom_call.1} parent=11 // pred_region
          %555 = vsyncadd [#allocation7], 0
          %s556 = smul.addr %s49, 8
          %s557 = scalar_lea.hbm %s1, %s556
          %s559 = sshll.u32 %s557, 4
          %s560 = int_to_ptr.hbm [resolvable:$true] %s559
          %s561 = sshll.u32 [#allocation6], 4
          %s562 = int_to_ptr.vmem [resolvable:$true] %s561
          %564 = dma.hbm_to_vmem [thread:$0]  %s560, 128, %s562, [#allocation7]
        $region16: #{tpu_custom_call.1} parent=11 // pred_fallthru
          _
        // Predicated region
        $region17: #{tpu_custom_call.1} parent=11 // pred_check
          %p565 = pneg %p153
        $region18: #{tpu_custom_call.1} parent=11 // pred_check_branch
          %567 = sbr.rel (%p565) target = $region20
        $region19: #{tpu_custom_call.1} parent=11 // pred_region
          %569 = vsyncadd [#allocation7], 0
          %s571 = sshll.u32 %s3, 4
          %s572 = int_to_ptr.hbm [resolvable:$true] %s571
          %s573 = sshll.u32 [#allocation9], 4
          %s574 = int_to_ptr.vmem [resolvable:$true] %s573
          %576 = dma.hbm_to_vmem [thread:$0]  %s572, 96, %s574, [#allocation7]
        $region20: #{tpu_custom_call.1} parent=11 // pred_fallthru
          _
        // Predicated region
        $region21: #{tpu_custom_call.1} parent=11 // pred_check
          %p577 = pneg %p174
        $region22: #{tpu_custom_call.1} parent=11 // pred_check_branch
          %579 = sbr.rel (%p577) target = $region24
        $region23: #{tpu_custom_call.1} parent=11 // pred_region
          %581 = vsyncadd [#allocation11], 0
          %s582 = sshll.u32 %s4, 4
          %s583 = int_to_ptr.hbm [resolvable:$true] %s582
          %s584 = sshll.u32 [#allocation10], 4
          %s585 = int_to_ptr.vmem [resolvable:$true] %s584
          %590 = dma.hbm_to_vmem [thread:$0]  %s583, 24576, %s585, [#allocation11], 256, 256, 16
        $region24: #{tpu_custom_call.1} parent=11 // pred_fallthru
          _
        // Predicated region
        $region25: #{tpu_custom_call.1} parent=11 // pred_check
          %p591 = pneg %p195
        $region26: #{tpu_custom_call.1} parent=11 // pred_check_branch
          %593 = sbr.rel (%p591) target = $region28
        $region27: #{tpu_custom_call.1} parent=11 // pred_region
          %595 = vsyncadd [#allocation11], 0
          %s597 = sshll.u32 %s5, 4
          %s598 = int_to_ptr.hbm [resolvable:$true] %s597
          %s599 = sshll.u32 [#allocation12], 4
          %s600 = int_to_ptr.vmem [resolvable:$true] %s599
          %602 = dma.hbm_to_vmem [thread:$0]  %s598, 32, %s600, [#allocation11]
        $region28: #{tpu_custom_call.1} parent=11 // pred_fallthru
          _
        // Predicated region
        $region29: #{tpu_custom_call.1} parent=11 // pred_check
          %p603 = pneg %p216
        $region30: #{tpu_custom_call.1} parent=11 // pred_check_branch
          %605 = sbr.rel (%p603) target = $region32
        $region31: #{tpu_custom_call.1} parent=11 // pred_region
          _
        $region32: #{tpu_custom_call.1} parent=11 // pred_fallthru
          _
        // Predicated region
        $region33: #{tpu_custom_call.1} parent=11 // pred_check
          %p606 = pneg %p237
        $region34: #{tpu_custom_call.1} parent=11 // pred_check_branch
          %608 = sbr.rel (%p606) target = $region36
        $region35: #{tpu_custom_call.1} parent=11 // pred_region
          %610 = vsyncadd [#allocation14], 0
          %s612 = sshll.u32 %s7, 4
          %s613 = int_to_ptr.hbm [resolvable:$true] %s612
          %s614 = sshll.u32 [#allocation13], 4
          %s615 = int_to_ptr.vmem [resolvable:$true] %s614
          %617 = dma.hbm_to_vmem [thread:$0]  %s613, 16, %s615, [#allocation14]
        $region36: #{tpu_custom_call.1} parent=11 // pred_fallthru
          _
        // Predicated region
        $region37: #{tpu_custom_call.1} parent=11 // pred_check
          %p618 = pneg %p258
        $region38: #{tpu_custom_call.1} parent=11 // pred_check_branch
          %620 = sbr.rel (%p618) target = $region40
        $region39: #{tpu_custom_call.1} parent=11 // pred_region
          %622 = vsyncadd [#allocation14], 0
          %s623 = sshll.u32 %s8, 4
          %s624 = int_to_ptr.hbm [resolvable:$true] %s623
          %s625 = sshll.u32 [#allocation15], 4
          %s626 = int_to_ptr.vmem [resolvable:$true] %s625
          %631 = dma.hbm_to_vmem [thread:$0]  %s624, 1024, %s626, [#allocation14], 128, 128, 8
        $region40: #{tpu_custom_call.1} parent=11 // pred_fallthru
          _
        // Predicated region
        $region41: #{tpu_custom_call.1} parent=11 // pred_check
          %p632 = pneg %p279
        $region42: #{tpu_custom_call.1} parent=11 // pred_check_branch
          %634 = sbr.rel (%p632) target = $region44
        $region43: #{tpu_custom_call.1} parent=11 // pred_region
          %636 = vsyncadd [#allocation17], 0
          %s638 = sshll.u32 %s9, 4
          %s639 = int_to_ptr.hbm [resolvable:$true] %s638
          %s640 = sshll.u32 [#allocation16], 4
          %s641 = int_to_ptr.vmem [resolvable:$true] %s640
          %643 = dma.hbm_to_vmem [thread:$0]  %s639, 16, %s641, [#allocation17]
        $region44: #{tpu_custom_call.1} parent=11 // pred_fallthru
          _
        // Predicated region
        $region45: #{tpu_custom_call.1} parent=11 // pred_check
          %p644 = pneg %p300
        $region46: #{tpu_custom_call.1} parent=11 // pred_check_branch
          %646 = sbr.rel (%p644) target = $region48
        $region47: #{tpu_custom_call.1} parent=11 // pred_region
          %648 = vsyncadd [#allocation17], 0
          %s649 = sshll.u32 %s10, 4
          %s650 = int_to_ptr.hbm [resolvable:$true] %s649
          %s651 = sshll.u32 [#allocation18], 4
          %s652 = int_to_ptr.vmem [resolvable:$true] %s651
          %657 = dma.hbm_to_vmem [thread:$0]  %s650, 1024, %s652, [#allocation17], 128, 128, 8
        $region48: #{tpu_custom_call.1} parent=11 // pred_fallthru
          _
        // Predicated region
        $region49: #{tpu_custom_call.1} parent=11 // pred_check
          %p658 = pneg %p321
        $region50: #{tpu_custom_call.1} parent=11 // pred_check_branch
          %660 = sbr.rel (%p658) target = $region52
        $region51: #{tpu_custom_call.1} parent=11 // pred_region
          %662 = vsyncadd [#allocation20], 0
          %s664 = sshll.u32 %s11, 4
          %s665 = int_to_ptr.hbm [resolvable:$true] %s664
          %s666 = sshll.u32 [#allocation19], 4
          %s667 = int_to_ptr.vmem [resolvable:$true] %s666
          %669 = dma.hbm_to_vmem [thread:$0]  %s665, 16, %s667, [#allocation20]
        $region52: #{tpu_custom_call.1} parent=11 // pred_fallthru
          _
        // Predicated region
        $region53: #{tpu_custom_call.1} parent=11 // pred_check
          %p670 = pneg %p342
        $region54: #{tpu_custom_call.1} parent=11 // pred_check_branch
          %672 = sbr.rel (%p670) target = $region56
        $region55: #{tpu_custom_call.1} parent=11 // pred_region
          %674 = vsyncadd [#allocation20], 0
          %s675 = sshll.u32 %s12, 4
          %s676 = int_to_ptr.hbm [resolvable:$true] %s675
          %s677 = sshll.u32 [#allocation21], 4
          %s678 = int_to_ptr.vmem [resolvable:$true] %s677
          %683 = dma.hbm_to_vmem [thread:$0]  %s676, 2048, %s678, [#allocation20], 128, 128, 8
        $region56: #{tpu_custom_call.1} parent=11 // pred_fallthru
          _
        // Predicated region
        $region57: #{tpu_custom_call.1} parent=11 // pred_check
          %p684 = pneg %p363
        $region58: #{tpu_custom_call.1} parent=11 // pred_check_branch
          %686 = sbr.rel (%p684) target = $region60
        $region59: #{tpu_custom_call.1} parent=11 // pred_region
          %688 = vsyncadd [#allocation23], 0
          %s690 = sshll.u32 %s13, 4
          %s691 = int_to_ptr.hbm [resolvable:$true] %s690
          %s692 = sshll.u32 [#allocation22], 4
          %s693 = int_to_ptr.vmem [resolvable:$true] %s692
          %695 = dma.hbm_to_vmem [thread:$0]  %s691, 16, %s693, [#allocation23]
        $region60: #{tpu_custom_call.1} parent=11 // pred_fallthru
          _
        // Predicated region
        $region61: #{tpu_custom_call.1} parent=11 // pred_check
          %p696 = pneg %p384
        $region62: #{tpu_custom_call.1} parent=11 // pred_check_branch
          %698 = sbr.rel (%p696) target = $region64
        $region63: #{tpu_custom_call.1} parent=11 // pred_region
          %700 = vsyncadd [#allocation23], 0
          %s701 = sshll.u32 %s14, 4
          %s702 = int_to_ptr.hbm [resolvable:$true] %s701
          %s703 = sshll.u32 [#allocation24], 4
          %s704 = int_to_ptr.vmem [resolvable:$true] %s703
          %709 = dma.hbm_to_vmem [thread:$0]  %s702, 8192, %s704, [#allocation23], 256, 256, 16
        $region64: #{tpu_custom_call.1} parent=11 // pred_fallthru
          _
        // Predicated region
        $region65: #{tpu_custom_call.1} parent=11 // pred_check
          %p710 = pneg %p405
        $region66: #{tpu_custom_call.1} parent=11 // pred_check_branch
          %712 = sbr.rel (%p710) target = $region68
        $region67: #{tpu_custom_call.1} parent=11 // pred_region
          %714 = vsyncadd [#allocation26], 0
          %s715 = sshll.u32 %s15, 4
          %s716 = int_to_ptr.hbm [resolvable:$true] %s715
          %s717 = sshll.u32 [#allocation25], 4
          %s718 = int_to_ptr.vmem [resolvable:$true] %s717
          %723 = dma.hbm_to_vmem [thread:$0]  %s716, 4096, %s718, [#allocation26], 256, 256, 16
        $region68: #{tpu_custom_call.1} parent=11 // pred_fallthru
          _
        // Predicated region
        $region69: #{tpu_custom_call.1} parent=11 // pred_check
          %p724 = pneg %p426
        $region70: #{tpu_custom_call.1} parent=11 // pred_check_branch
          %726 = sbr.rel (%p724) target = $region72
        $region71: #{tpu_custom_call.1} parent=11 // pred_region
          %728 = vsyncadd [#allocation26], 0
          %s730 = sshll.u32 %s16, 4
          %s731 = int_to_ptr.hbm [resolvable:$true] %s730
          %s732 = sshll.u32 [#allocation27], 4
          %s733 = int_to_ptr.vmem [resolvable:$true] %s732
          %735 = dma.hbm_to_vmem [thread:$0]  %s731, 32, %s733, [#allocation26]
        $region72: #{tpu_custom_call.1} parent=11 // pred_fallthru
          _
        // Predicated region
        $region73: #{tpu_custom_call.1} parent=11 // pred_check
          %p736 = pneg %p447
        $region74: #{tpu_custom_call.1} parent=11 // pred_check_branch
          %738 = sbr.rel (%p736) target = $region76
        $region75: #{tpu_custom_call.1} parent=11 // pred_region
          %740 = vsyncadd [#allocation29], 0
          %s741 = sshll.u32 %s17, 4
          %s742 = int_to_ptr.hbm [resolvable:$true] %s741
          %s743 = sshll.u32 [#allocation28], 4
          %s744 = int_to_ptr.vmem [resolvable:$true] %s743
          %749 = dma.hbm_to_vmem [thread:$0]  %s742, 8192, %s744, [#allocation29], 256, 256, 16
        $region76: #{tpu_custom_call.1} parent=11 // pred_fallthru
          _
        // Predicated region
        $region77: #{tpu_custom_call.1} parent=11 // pred_check
          %p750 = pneg %p468
        $region78: #{tpu_custom_call.1} parent=11 // pred_check_branch
          %752 = sbr.rel (%p750) target = $region80
        $region79: #{tpu_custom_call.1} parent=11 // pred_region
          %754 = vsyncadd [#allocation29], 0
          %s756 = sshll.u32 %s18, 4
          %s757 = int_to_ptr.hbm [resolvable:$true] %s756
          %s758 = sshll.u32 [#allocation30], 4
          %s759 = int_to_ptr.vmem [resolvable:$true] %s758
          %761 = dma.hbm_to_vmem [thread:$0]  %s757, 32, %s759, [#allocation29]
        $region80: #{tpu_custom_call.1} parent=11 // pred_fallthru
          _
        // Predicated region
        $region81: #{tpu_custom_call.1} parent=11 // pred_check
          %p762 = pneg %p489
        $region82: #{tpu_custom_call.1} parent=11 // pred_check_branch
          %764 = sbr.rel (%p762) target = $region84
        $region83: #{tpu_custom_call.1} parent=11 // pred_region
          %766 = vsyncadd [#allocation32], 0
          %s767 = sshll.u32 %s19, 4
          %s768 = int_to_ptr.hbm [resolvable:$true] %s767
          %s769 = sshll.u32 [#allocation31], 4
          %s770 = int_to_ptr.vmem [resolvable:$true] %s769
          %775 = dma.hbm_to_vmem [thread:$0]  %s768, 4096, %s770, [#allocation32], 128, 128, 8
        $region84: #{tpu_custom_call.1} parent=11 // pred_fallthru
          _
        // Predicated region
        $region85: #{tpu_custom_call.1} parent=11 // pred_check
          %p776 = pneg %p510
        $region86: #{tpu_custom_call.1} parent=11 // pred_check_branch
          %778 = sbr.rel (%p776) target = $region88
        $region87: #{tpu_custom_call.1} parent=11 // pred_region
          %780 = vsyncadd [#allocation32], 0
          %s782 = sshll.u32 %s20, 4
          %s783 = int_to_ptr.hbm [resolvable:$true] %s782
          %s784 = sshll.u32 [#allocation33], 4
          %s785 = int_to_ptr.vmem [resolvable:$true] %s784
          %787 = dma.hbm_to_vmem [thread:$0]  %s783, 16, %s785, [#allocation32]
        $region88: #{tpu_custom_call.1} parent=11 // pred_fallthru
          _
      $region12: #{tpu_custom_call.1} parent=5 // pred_fallthru
        _
      %p788 = scmp.lt.s32.totalorder %s40, 4
      // Predicated region
      $region89: #{tpu_custom_call.1} parent=5 // pred_check
        %p789 = pneg %p788
      $region90: #{tpu_custom_call.1} parent=5 // pred_check_branch
        %791 = sbr.rel (%p789) target = $region92
      $region91: #{tpu_custom_call.1} parent=5 // pred_region
        // Predicated region
        $region93: #{tpu_custom_call.1} parent=91 // pred_check
          %p792 = pneg %p74
        $region94: #{tpu_custom_call.1} parent=91 // pred_check_branch
          %794 = sbr.rel (%p792) target = $region96
        $region95: #{tpu_custom_call.1} parent=91 // pred_region
          %s795 = sand.u32 %s40, 1
          %s796 = scalar_lea.sflag [#allocation4], %s795
          %s797 = sand.u32 %s64, 1
          %s798 = smul.addr %s797, 8
          %s799 = scalar_lea.vmem [#allocation3], %s798
          %s800 = smul.u32 2, %s48
          %802 = vsyncadd %s796, 0
          %s803 = smul.addr %s47, 8
          %s804 = sadd.s32 %s800, %s803
          %s805 = smul.addr %s804, 4
          %s806 = scalar_lea.hbm %s0, %s805
          %s808 = sshll.u32 %s806, 4
          %s809 = int_to_ptr.hbm [resolvable:$true] %s808
          %s810 = sshll.u32 %s799, 4
          %s811 = int_to_ptr.vmem [resolvable:$true] %s810
          %813 = dma.hbm_to_vmem [thread:$0]  %s809, 128, %s811, %s796
        $region96: #{tpu_custom_call.1} parent=91 // pred_fallthru
          _
        // Predicated region
        $region97: #{tpu_custom_call.1} parent=91 // pred_check
          %p814 = pneg %p126
        $region98: #{tpu_custom_call.1} parent=91 // pred_check_branch
          %816 = sbr.rel (%p814) target = $region100
        $region99: #{tpu_custom_call.1} parent=91 // pred_region
          %s817 = sand.u32 %s40, 1
          %s818 = scalar_lea.sflag [#allocation4], %s817
          %s819 = sand.u32 %s116, 1
          %s820 = smul.addr %s819, 768
          %s821 = scalar_lea.vmem [#allocation8], %s820
          %s822 = smul.u32 32, %s48
          %824 = vsyncadd %s818, 0
          %s825 = smul.addr %s822, 6
          %s826 = smul.addr %s825, 4
          %s827 = scalar_lea.hbm %s2, %s826
          %s828 = sshll.u32 %s827, 4
          %s829 = int_to_ptr.hbm [resolvable:$true] %s828
          %s830 = sshll.u32 %s821, 4
          %s831 = int_to_ptr.vmem [resolvable:$true] %s830
          %836 = dma.hbm_to_vmem [thread:$0]  %s829, 12288, %s831, %s818, 384, 384, 24
        $region100: #{tpu_custom_call.1} parent=91 // pred_fallthru
          _
      $region92: #{tpu_custom_call.1} parent=5 // pred_fallthru
        _
      %p837 = scmp.le.s32.totalorder 1, %s40
      %p838 = scmp.lt.s32.totalorder %s40, 5
      %p839 = pnand %p837, %p838
      %p840 = pneg %p839
      // Predicated region
      $region101: #{tpu_custom_call.1} parent=5 // pred_check
        _
      $region102: #{tpu_custom_call.1} parent=5 // pred_check_branch
        %842 = sbr.rel (%p839) target = $region104
      $region103: #{tpu_custom_call.1} parent=5 // pred_region
        %s843 = ssub.s32 %s40, 1
        %s844 = sand.u32 %s45, 1
        %s845 = scalar_lea.sflag [#allocation4], %s844
        %s846 = sand.u32 %s67, 1
        %s847 = smul.addr %s846, 8
        %s848 = scalar_lea.vmem [#allocation3], %s847
        // Predicated region
        $region105: #{tpu_custom_call.1} parent=103 // pred_check
          %p849 = pneg %p80
        $region106: #{tpu_custom_call.1} parent=103 // pred_check_branch
          %851 = sbr.rel (%p849) target = $region108
        $region107: #{tpu_custom_call.1} parent=103 // pred_region
          %853 = dma.done %s845, 128
        $region108: #{tpu_custom_call.1} parent=103 // pred_fallthru
          _
        // Predicated region
        $region109: #{tpu_custom_call.1} parent=103 // pred_check
          %p854 = pneg %p106
        $region110: #{tpu_custom_call.1} parent=103 // pred_check_branch
          %856 = sbr.rel (%p854) target = $region112
        $region111: #{tpu_custom_call.1} parent=103 // pred_region
          %858 = dma.done [#allocation7], 128
        $region112: #{tpu_custom_call.1} parent=103 // pred_fallthru
          _
        %s859 = sand.u32 %s45, 1
        %s860 = scalar_lea.sflag [#allocation4], %s859
        %s861 = sand.u32 %s119, 1
        %s862 = smul.addr %s861, 768
        %s863 = scalar_lea.vmem [#allocation8], %s862
        // Predicated region
        $region113: #{tpu_custom_call.1} parent=103 // pred_check
          %p864 = pneg %p132
        $region114: #{tpu_custom_call.1} parent=103 // pred_check_branch
          %866 = sbr.rel (%p864) target = $region116
        $region115: #{tpu_custom_call.1} parent=103 // pred_region
          %868 = dma.done %s860, 12288
        $region116: #{tpu_custom_call.1} parent=103 // pred_fallthru
          _
        // Predicated region
        $region117: #{tpu_custom_call.1} parent=103 // pred_check
          %p869 = pneg %p153
        $region118: #{tpu_custom_call.1} parent=103 // pred_check_branch
          %871 = sbr.rel (%p869) target = $region120
        $region119: #{tpu_custom_call.1} parent=103 // pred_region
          %873 = dma.done [#allocation7], 96
        $region120: #{tpu_custom_call.1} parent=103 // pred_fallthru
          _
        // Predicated region
        $region121: #{tpu_custom_call.1} parent=103 // pred_check
          %p874 = pneg %p174
        $region122: #{tpu_custom_call.1} parent=103 // pred_check_branch
          %876 = sbr.rel (%p874) target = $region124
        $region123: #{tpu_custom_call.1} parent=103 // pred_region
          %878 = dma.done [#allocation11], 24576
        $region124: #{tpu_custom_call.1} parent=103 // pred_fallthru
          _
        // Predicated region
        $region125: #{tpu_custom_call.1} parent=103 // pred_check
          %p879 = pneg %p195
        $region126: #{tpu_custom_call.1} parent=103 // pred_check_branch
          %881 = sbr.rel (%p879) target = $region128
        $region127: #{tpu_custom_call.1} parent=103 // pred_region
          %883 = dma.done [#allocation11], 32
        $region128: #{tpu_custom_call.1} parent=103 // pred_fallthru
          _
        // Predicated region
        $region129: #{tpu_custom_call.1} parent=103 // pred_check
          %p884 = pneg %p237
        $region130: #{tpu_custom_call.1} parent=103 // pred_check_branch
          %886 = sbr.rel (%p884) target = $region132
        $region131: #{tpu_custom_call.1} parent=103 // pred_region
          %888 = dma.done [#allocation14], 16
        $region132: #{tpu_custom_call.1} parent=103 // pred_fallthru
          _
        // Predicated region
        $region133: #{tpu_custom_call.1} parent=103 // pred_check
          %p889 = pneg %p258
        $region134: #{tpu_custom_call.1} parent=103 // pred_check_branch
          %891 = sbr.rel (%p889) target = $region136
        $region135: #{tpu_custom_call.1} parent=103 // pred_region
          %893 = dma.done [#allocation14], 1024
        $region136: #{tpu_custom_call.1} parent=103 // pred_fallthru
          _
        // Predicated region
        $region137: #{tpu_custom_call.1} parent=103 // pred_check
          %p894 = pneg %p279
        $region138: #{tpu_custom_call.1} parent=103 // pred_check_branch
          %896 = sbr.rel (%p894) target = $region140
        $region139: #{tpu_custom_call.1} parent=103 // pred_region
          %898 = dma.done [#allocation17], 16
        $region140: #{tpu_custom_call.1} parent=103 // pred_fallthru
          _
        // Predicated region
        $region141: #{tpu_custom_call.1} parent=103 // pred_check
          %p899 = pneg %p300
        $region142: #{tpu_custom_call.1} parent=103 // pred_check_branch
          %901 = sbr.rel (%p899) target = $region144
        $region143: #{tpu_custom_call.1} parent=103 // pred_region
          %903 = dma.done [#allocation17], 1024
        $region144: #{tpu_custom_call.1} parent=103 // pred_fallthru
          _
        // Predicated region
        $region145: #{tpu_custom_call.1} parent=103 // pred_check
          %p904 = pneg %p321
        $region146: #{tpu_custom_call.1} parent=103 // pred_check_branch
          %906 = sbr.rel (%p904) target = $region148
        $region147: #{tpu_custom_call.1} parent=103 // pred_region
          %908 = dma.done [#allocation20], 16
        $region148: #{tpu_custom_call.1} parent=103 // pred_fallthru
          _
        // Predicated region
        $region149: #{tpu_custom_call.1} parent=103 // pred_check
          %p909 = pneg %p342
        $region150: #{tpu_custom_call.1} parent=103 // pred_check_branch
          %911 = sbr.rel (%p909) target = $region152
        $region151: #{tpu_custom_call.1} parent=103 // pred_region
          %913 = dma.done [#allocation20], 2048
        $region152: #{tpu_custom_call.1} parent=103 // pred_fallthru
          _
        // Predicated region
        $region153: #{tpu_custom_call.1} parent=103 // pred_check
          %p914 = pneg %p363
        $region154: #{tpu_custom_call.1} parent=103 // pred_check_branch
          %916 = sbr.rel (%p914) target = $region156
        $region155: #{tpu_custom_call.1} parent=103 // pred_region
          %918 = dma.done [#allocation23], 16
        $region156: #{tpu_custom_call.1} parent=103 // pred_fallthru
          _
        // Predicated region
        $region157: #{tpu_custom_call.1} parent=103 // pred_check
          %p919 = pneg %p384
        $region158: #{tpu_custom_call.1} parent=103 // pred_check_branch
          %921 = sbr.rel (%p919) target = $region160
        $region159: #{tpu_custom_call.1} parent=103 // pred_region
          %923 = dma.done [#allocation23], 8192
        $region160: #{tpu_custom_call.1} parent=103 // pred_fallthru
          _
        // Predicated region
        $region161: #{tpu_custom_call.1} parent=103 // pred_check
          %p924 = pneg %p405
        $region162: #{tpu_custom_call.1} parent=103 // pred_check_branch
          %926 = sbr.rel (%p924) target = $region164
        $region163: #{tpu_custom_call.1} parent=103 // pred_region
          %928 = dma.done [#allocation26], 4096
        $region164: #{tpu_custom_call.1} parent=103 // pred_fallthru
          _
        // Predicated region
        $region165: #{tpu_custom_call.1} parent=103 // pred_check
          %p929 = pneg %p426
        $region166: #{tpu_custom_call.1} parent=103 // pred_check_branch
          %931 = sbr.rel (%p929) target = $region168
        $region167: #{tpu_custom_call.1} parent=103 // pred_region
          %933 = dma.done [#allocation26], 32
        $region168: #{tpu_custom_call.1} parent=103 // pred_fallthru
          _
        // Predicated region
        $region169: #{tpu_custom_call.1} parent=103 // pred_check
          %p934 = pneg %p447
        $region170: #{tpu_custom_call.1} parent=103 // pred_check_branch
          %936 = sbr.rel (%p934) target = $region172
        $region171: #{tpu_custom_call.1} parent=103 // pred_region
          %938 = dma.done [#allocation29], 8192
        $region172: #{tpu_custom_call.1} parent=103 // pred_fallthru
          _
        // Predicated region
        $region173: #{tpu_custom_call.1} parent=103 // pred_check
          %p939 = pneg %p468
        $region174: #{tpu_custom_call.1} parent=103 // pred_check_branch
          %941 = sbr.rel (%p939) target = $region176
        $region175: #{tpu_custom_call.1} parent=103 // pred_region
          %943 = dma.done [#allocation29], 32
        $region176: #{tpu_custom_call.1} parent=103 // pred_fallthru
          _
        // Predicated region
        $region177: #{tpu_custom_call.1} parent=103 // pred_check
          %p944 = pneg %p489
        $region178: #{tpu_custom_call.1} parent=103 // pred_check_branch
          %946 = sbr.rel (%p944) target = $region180
        $region179: #{tpu_custom_call.1} parent=103 // pred_region
          %948 = dma.done [#allocation32], 4096
        $region180: #{tpu_custom_call.1} parent=103 // pred_fallthru
          _
        // Predicated region
        $region181: #{tpu_custom_call.1} parent=103 // pred_check
          %p949 = pneg %p510
        $region182: #{tpu_custom_call.1} parent=103 // pred_check_branch
          %951 = sbr.rel (%p949) target = $region184
        $region183: #{tpu_custom_call.1} parent=103 // pred_region
          %953 = dma.done [#allocation32], 16
        $region184: #{tpu_custom_call.1} parent=103 // pred_fallthru
          _
        %s954 = sand.u32 %s45, 1
        %s955 = scalar_lea.sflag [#allocation4], %s954
        %s956 = sand.u32 %s67, 1
        %s957 = smul.addr %s956, 8
        %s958 = scalar_lea.vmem [#allocation3], %s957
        %p959 = pneg %p80
        %p960 = pneg %p77
        %p961 = pneg %p106
        %p962 = pneg %p103
        %s963 = sand.u32 %s45, 1
        %s964 = scalar_lea.sflag [#allocation4], %s963
        %s965 = sand.u32 %s119, 1
        %s966 = smul.addr %s965, 768
        %s967 = scalar_lea.vmem [#allocation8], %s966
        %p968 = pneg %p132
        %p969 = pneg %p129
        %p970 = pneg %p153
        %p971 = pneg %p150
        %p972 = pneg %p174
        %p973 = pneg %p171
        %p974 = pneg %p195
        %p975 = pneg %p192
        %p976 = pneg %p216
        %p977 = pneg %p213
        %p978 = pneg %p237
        %p979 = pneg %p234
        %p980 = pneg %p258
        %p981 = pneg %p255
        %p982 = pneg %p279
        %p983 = pneg %p276
        %p984 = pneg %p300
        %p985 = pneg %p297
        %p986 = pneg %p321
        %p987 = pneg %p318
        %p988 = pneg %p342
        %p989 = pneg %p339
        %p990 = pneg %p363
        %p991 = pneg %p360
        %p992 = pneg %p384
        %p993 = pneg %p381
        %p994 = pneg %p405
        %p995 = pneg %p402
        %p996 = pneg %p426
        %p997 = pneg %p423
        %p998 = pneg %p447
        %p999 = pneg %p444
        %p1000 = pneg %p468
        %p1001 = pneg %p465
        %p1002 = pneg %p489
        %p1003 = pneg %p486
        %p1004 = pneg %p510
        %p1005 = pneg %p507
        %p1006 = pneg %p536
        %p1007 = pneg %p533
        %s1008 = smul.u32 2, %s50
        %s1009 = smul.u32 32, %s50
        %p1010 = scmp.eq.s32.totalorder %s50, 0
        // Predicated region
        $region185: #{tpu_custom_call.1} parent=103 // pred_check
          %p1011 = pneg %p1010
        $region186: #{tpu_custom_call.1} parent=103 // pred_check_branch
          %1013 = sbr.rel (%p1011) target = $region188
        $region187: #{tpu_custom_call.1} parent=103 // pred_region
          %1014 = vst [vmem:[#allocation2] sm:$0xff] 0.0
          %1015 = vst [vmem:[#allocation2 + $0x8] sm:$0xff] 0.0
          %1016 = vst [vmem:[#allocation2 + $0x10] sm:$0xff] 0.0
          %1017 = vst [vmem:[#allocation2 + $0x18] sm:$0xff] 0.0
          %1018 = vst [vmem:[#allocation2 + $0x20] sm:$0xff] 0.0
          %1019 = vst [vmem:[#allocation2 + $0x28] sm:$0xff] 0.0
        $region188: #{tpu_custom_call.1} parent=103 // pred_fallthru
          _
        %v1020 = vld [vmem:[#allocation2] sm:$0xff]
        %v1021 = vld [vmem:[#allocation2 + $0x8] sm:$0xff]
        %v1022 = vld [vmem:[#allocation2 + $0x10] sm:$0xff]
        %v1023 = vld [vmem:[#allocation2 + $0x18] sm:$0xff]
        %v1024 = vld [vmem:[#allocation2 + $0x20] sm:$0xff]
        %v1025 = vld [vmem:[#allocation2 + $0x28] sm:$0xff]
        %v1026 = vld [vmem:[%s848] sm:$0xff]
        %v1027 = vld [vmem:[%s863] sm:$0xff]
        %v1028 = vld [vmem:[%s863 + $0x8] sm:$0xff]
        %v1029 = vld [vmem:[%s863 + $0x10] sm:$0xff]
        %v1030 = vld [vmem:[%s863 + $0x18] sm:$0xff]
        %v1031 = vld [vmem:[%s863 + $0x20] sm:$0xff]
        %v1032 = vld [vmem:[%s863 + $0x28] sm:$0xff]
        %v1033 = vld [vmem:[%s863 + $0x30] sm:$0xff]
        %v1034 = vld [vmem:[%s863 + $0x38] sm:$0xff]
        %v1035 = vld [vmem:[%s863 + $0x40] sm:$0xff]
        %v1036 = vld [vmem:[%s863 + $0x48] sm:$0xff]
        %v1037 = vld [vmem:[%s863 + $0x50] sm:$0xff]
        %v1038 = vld [vmem:[%s863 + $0x58] sm:$0xff]
        %v1039 = vld [vmem:[%s863 + $0x60] sm:$0xff]
        %v1040 = vld [vmem:[%s863 + $0x68] sm:$0xff]
        %v1041 = vld [vmem:[%s863 + $0x70] sm:$0xff]
        %v1042 = vld [vmem:[%s863 + $0x78] sm:$0xff]
        %v1043 = vld [vmem:[%s863 + $0x80] sm:$0xff]
        %v1044 = vld [vmem:[%s863 + $0x88] sm:$0xff]
        %v1045 = vld [vmem:[%s863 + $0x90] sm:$0xff]
        %v1046 = vld [vmem:[%s863 + $0x98] sm:$0xff]
        %v1047 = vld [vmem:[%s863 + $0xa0] sm:$0xff]
        %v1048 = vld [vmem:[%s863 + $0xa8] sm:$0xff]
        %v1049 = vld [vmem:[%s863 + $0xb0] sm:$0xff]
        %v1050 = vld [vmem:[%s863 + $0xb8] sm:$0xff]
        %v1051 = vld [vmem:[%s863 + $0xc0] sm:$0xff]
        %v1052 = vld [vmem:[%s863 + $0xc8] sm:$0xff]
        %v1053 = vld [vmem:[%s863 + $0xd0] sm:$0xff]
        %v1054 = vld [vmem:[%s863 + $0xd8] sm:$0xff]
        %v1055 = vld [vmem:[%s863 + $0xe0] sm:$0xff]
        %v1056 = vld [vmem:[%s863 + $0xe8] sm:$0xff]
        %v1057 = vld [vmem:[%s863 + $0xf0] sm:$0xff]
        %v1058 = vld [vmem:[%s863 + $0xf8] sm:$0xff]
        %v1059 = vld [vmem:[%s863 + $0x100] sm:$0xff]
        %v1060 = vld [vmem:[%s863 + $0x108] sm:$0xff]
        %v1061 = vld [vmem:[%s863 + $0x110] sm:$0xff]
        %v1062 = vld [vmem:[%s863 + $0x118] sm:$0xff]
        %v1063 = vld [vmem:[%s863 + $0x120] sm:$0xff]
        %v1064 = vld [vmem:[%s863 + $0x128] sm:$0xff]
        %v1065 = vld [vmem:[%s863 + $0x130] sm:$0xff]
        %v1066 = vld [vmem:[%s863 + $0x138] sm:$0xff]
        %v1067 = vld [vmem:[%s863 + $0x140] sm:$0xff]
        %v1068 = vld [vmem:[%s863 + $0x148] sm:$0xff]
        %v1069 = vld [vmem:[%s863 + $0x150] sm:$0xff]
        %v1070 = vld [vmem:[%s863 + $0x158] sm:$0xff]
        %v1071 = vld [vmem:[%s863 + $0x160] sm:$0xff]
        %v1072 = vld [vmem:[%s863 + $0x168] sm:$0xff]
        %v1073 = vld [vmem:[%s863 + $0x170] sm:$0xff]
        %v1074 = vld [vmem:[%s863 + $0x178] sm:$0xff]
        %v1075 = vld [vmem:[%s863 + $0x180] sm:$0xff]
        %v1076 = vld [vmem:[%s863 + $0x188] sm:$0xff]
        %v1077 = vld [vmem:[%s863 + $0x190] sm:$0xff]
        %v1078 = vld [vmem:[%s863 + $0x198] sm:$0xff]
        %v1079 = vld [vmem:[%s863 + $0x1a0] sm:$0xff]
        %v1080 = vld [vmem:[%s863 + $0x1a8] sm:$0xff]
        %v1081 = vld [vmem:[%s863 + $0x1b0] sm:$0xff]
        %v1082 = vld [vmem:[%s863 + $0x1b8] sm:$0xff]
        %v1083 = vld [vmem:[%s863 + $0x1c0] sm:$0xff]
        %v1084 = vld [vmem:[%s863 + $0x1c8] sm:$0xff]
        %v1085 = vld [vmem:[%s863 + $0x1d0] sm:$0xff]
        %v1086 = vld [vmem:[%s863 + $0x1d8] sm:$0xff]
        %v1087 = vld [vmem:[%s863 + $0x1e0] sm:$0xff]
        %v1088 = vld [vmem:[%s863 + $0x1e8] sm:$0xff]
        %v1089 = vld [vmem:[%s863 + $0x1f0] sm:$0xff]
        %v1090 = vld [vmem:[%s863 + $0x1f8] sm:$0xff]
        %v1091 = vld [vmem:[%s863 + $0x200] sm:$0xff]
        %v1092 = vld [vmem:[%s863 + $0x208] sm:$0xff]
        %v1093 = vld [vmem:[%s863 + $0x210] sm:$0xff]
        %v1094 = vld [vmem:[%s863 + $0x218] sm:$0xff]
        %v1095 = vld [vmem:[%s863 + $0x220] sm:$0xff]
        %v1096 = vld [vmem:[%s863 + $0x228] sm:$0xff]
        %v1097 = vld [vmem:[%s863 + $0x230] sm:$0xff]
        %v1098 = vld [vmem:[%s863 + $0x238] sm:$0xff]
        %v1099 = vld [vmem:[%s863 + $0x240] sm:$0xff]
        %v1100 = vld [vmem:[%s863 + $0x248] sm:$0xff]
        %v1101 = vld [vmem:[%s863 + $0x250] sm:$0xff]
        %v1102 = vld [vmem:[%s863 + $0x258] sm:$0xff]
        %v1103 = vld [vmem:[%s863 + $0x260] sm:$0xff]
        %v1104 = vld [vmem:[%s863 + $0x268] sm:$0xff]
        %v1105 = vld [vmem:[%s863 + $0x270] sm:$0xff]
        %v1106 = vld [vmem:[%s863 + $0x278] sm:$0xff]
        %v1107 = vld [vmem:[%s863 + $0x280] sm:$0xff]
        %v1108 = vld [vmem:[%s863 + $0x288] sm:$0xff]
        %v1109 = vld [vmem:[%s863 + $0x290] sm:$0xff]
        %v1110 = vld [vmem:[%s863 + $0x298] sm:$0xff]
        %v1111 = vld [vmem:[%s863 + $0x2a0] sm:$0xff]
        %v1112 = vld [vmem:[%s863 + $0x2a8] sm:$0xff]
        %v1113 = vld [vmem:[%s863 + $0x2b0] sm:$0xff]
        %v1114 = vld [vmem:[%s863 + $0x2b8] sm:$0xff]
        %v1115 = vld [vmem:[%s863 + $0x2c0] sm:$0xff]
        %v1116 = vld [vmem:[%s863 + $0x2c8] sm:$0xff]
        %v1117 = vld [vmem:[%s863 + $0x2d0] sm:$0xff]
        %v1118 = vld [vmem:[%s863 + $0x2d8] sm:$0xff]
        %v1119 = vld [vmem:[%s863 + $0x2e0] sm:$0xff]
        %v1120 = vld [vmem:[%s863 + $0x2e8] sm:$0xff]
        %v1121 = vld [vmem:[%s863 + $0x2f0] sm:$0xff]
        %v1122 = vld [vmem:[%s863 + $0x2f8] sm:$0xff]
        %v1124 = vunpack.c.l.b16 %v1026
        %v1125 = vunpack.c.h.b16 %v1026
        %v1126 = vpack.c.b16 %v1124, %v1124
        %v1127 = vpack.c.b16 %v1125, %v1125
        %v1226 = vunpack.c.l.b16 %v1027
        %v1227 = vunpack.c.h.b16 %v1027
        %v1228 = vunpack.c.l.b16 %v1028
        %v1229 = vunpack.c.h.b16 %v1028
        %v1230 = vunpack.c.l.b16 %v1029
        %v1231 = vunpack.c.h.b16 %v1029
        %v1232 = vunpack.c.l.b16 %v1030
        %v1233 = vunpack.c.h.b16 %v1030
        %v1234 = vunpack.c.l.b16 %v1031
        %v1235 = vunpack.c.h.b16 %v1031
        %v1236 = vunpack.c.l.b16 %v1032
        %v1237 = vunpack.c.h.b16 %v1032
        %v1238 = vunpack.c.l.b16 %v1033
        %v1239 = vunpack.c.h.b16 %v1033
        %v1240 = vunpack.c.l.b16 %v1034
        %v1241 = vunpack.c.h.b16 %v1034
        %v1242 = vunpack.c.l.b16 %v1035
        %v1243 = vunpack.c.h.b16 %v1035
        %v1244 = vunpack.c.l.b16 %v1036
        %v1245 = vunpack.c.h.b16 %v1036
        %v1246 = vunpack.c.l.b16 %v1037
        %v1247 = vunpack.c.h.b16 %v1037
        %v1248 = vunpack.c.l.b16 %v1038
        %v1249 = vunpack.c.h.b16 %v1038
        %v1250 = vunpack.c.l.b16 %v1039
        %v1251 = vunpack.c.h.b16 %v1039
        %v1252 = vunpack.c.l.b16 %v1040
        %v1253 = vunpack.c.h.b16 %v1040
        %v1254 = vunpack.c.l.b16 %v1041
        %v1255 = vunpack.c.h.b16 %v1041
        %v1256 = vunpack.c.l.b16 %v1042
        %v1257 = vunpack.c.h.b16 %v1042
        %v1258 = vunpack.c.l.b16 %v1043
        %v1259 = vunpack.c.h.b16 %v1043
        %v1260 = vunpack.c.l.b16 %v1044
        %v1261 = vunpack.c.h.b16 %v1044
        %v1262 = vunpack.c.l.b16 %v1045
        %v1263 = vunpack.c.h.b16 %v1045
        %v1264 = vunpack.c.l.b16 %v1046
        %v1265 = vunpack.c.h.b16 %v1046
        %v1266 = vunpack.c.l.b16 %v1047
        %v1267 = vunpack.c.h.b16 %v1047
        %v1268 = vunpack.c.l.b16 %v1048
        %v1269 = vunpack.c.h.b16 %v1048
        %v1270 = vunpack.c.l.b16 %v1049
        %v1271 = vunpack.c.h.b16 %v1049
        %v1272 = vunpack.c.l.b16 %v1050
        %v1273 = vunpack.c.h.b16 %v1050
        %v1274 = vunpack.c.l.b16 %v1051
        %v1275 = vunpack.c.h.b16 %v1051
        %v1276 = vunpack.c.l.b16 %v1052
        %v1277 = vunpack.c.h.b16 %v1052
        %v1278 = vunpack.c.l.b16 %v1053
        %v1279 = vunpack.c.h.b16 %v1053
        %v1280 = vunpack.c.l.b16 %v1054
        %v1281 = vunpack.c.h.b16 %v1054
        %v1282 = vunpack.c.l.b16 %v1055
        %v1283 = vunpack.c.h.b16 %v1055
        %v1284 = vunpack.c.l.b16 %v1056
        %v1285 = vunpack.c.h.b16 %v1056
        %v1286 = vunpack.c.l.b16 %v1057
        %v1287 = vunpack.c.h.b16 %v1057
        %v1288 = vunpack.c.l.b16 %v1058
        %v1289 = vunpack.c.h.b16 %v1058
        %v1290 = vunpack.c.l.b16 %v1059
        %v1291 = vunpack.c.h.b16 %v1059
        %v1292 = vunpack.c.l.b16 %v1060
        %v1293 = vunpack.c.h.b16 %v1060
        %v1294 = vunpack.c.l.b16 %v1061
        %v1295 = vunpack.c.h.b16 %v1061
        %v1296 = vunpack.c.l.b16 %v1062
        %v1297 = vunpack.c.h.b16 %v1062
        %v1298 = vunpack.c.l.b16 %v1063
        %v1299 = vunpack.c.h.b16 %v1063
        %v1300 = vunpack.c.l.b16 %v1064
        %v1301 = vunpack.c.h.b16 %v1064
        %v1302 = vunpack.c.l.b16 %v1065
        %v1303 = vunpack.c.h.b16 %v1065
        %v1304 = vunpack.c.l.b16 %v1066
        %v1305 = vunpack.c.h.b16 %v1066
        %v1306 = vunpack.c.l.b16 %v1067
        %v1307 = vunpack.c.h.b16 %v1067
        %v1308 = vunpack.c.l.b16 %v1068
        %v1309 = vunpack.c.h.b16 %v1068
        %v1310 = vunpack.c.l.b16 %v1069
        %v1311 = vunpack.c.h.b16 %v1069
        %v1312 = vunpack.c.l.b16 %v1070
        %v1313 = vunpack.c.h.b16 %v1070
        %v1314 = vunpack.c.l.b16 %v1071
        %v1315 = vunpack.c.h.b16 %v1071
        %v1316 = vunpack.c.l.b16 %v1072
        %v1317 = vunpack.c.h.b16 %v1072
        %v1318 = vunpack.c.l.b16 %v1073
        %v1319 = vunpack.c.h.b16 %v1073
        %v1320 = vunpack.c.l.b16 %v1074
        %v1321 = vunpack.c.h.b16 %v1074
        %v1322 = vunpack.c.l.b16 %v1075
        %v1323 = vunpack.c.h.b16 %v1075
        %v1324 = vunpack.c.l.b16 %v1076
        %v1325 = vunpack.c.h.b16 %v1076
        %v1326 = vunpack.c.l.b16 %v1077
        %v1327 = vunpack.c.h.b16 %v1077
        %v1328 = vunpack.c.l.b16 %v1078
        %v1329 = vunpack.c.h.b16 %v1078
        %v1330 = vunpack.c.l.b16 %v1079
        %v1331 = vunpack.c.h.b16 %v1079
        %v1332 = vunpack.c.l.b16 %v1080
        %v1333 = vunpack.c.h.b16 %v1080
        %v1334 = vunpack.c.l.b16 %v1081
        %v1335 = vunpack.c.h.b16 %v1081
        %v1336 = vunpack.c.l.b16 %v1082
        %v1337 = vunpack.c.h.b16 %v1082
        %v1338 = vunpack.c.l.b16 %v1083
        %v1339 = vunpack.c.h.b16 %v1083
        %v1340 = vunpack.c.l.b16 %v1084
        %v1341 = vunpack.c.h.b16 %v1084
        %v1342 = vunpack.c.l.b16 %v1085
        %v1343 = vunpack.c.h.b16 %v1085
        %v1344 = vunpack.c.l.b16 %v1086
        %v1345 = vunpack.c.h.b16 %v1086
        %v1346 = vunpack.c.l.b16 %v1087
        %v1347 = vunpack.c.h.b16 %v1087
        %v1348 = vunpack.c.l.b16 %v1088
        %v1349 = vunpack.c.h.b16 %v1088
        %v1350 = vunpack.c.l.b16 %v1089
        %v1351 = vunpack.c.h.b16 %v1089
        %v1352 = vunpack.c.l.b16 %v1090
        %v1353 = vunpack.c.h.b16 %v1090
        %v1354 = vunpack.c.l.b16 %v1091
        %v1355 = vunpack.c.h.b16 %v1091
        %v1356 = vunpack.c.l.b16 %v1092
        %v1357 = vunpack.c.h.b16 %v1092
        %v1358 = vunpack.c.l.b16 %v1093
        %v1359 = vunpack.c.h.b16 %v1093
        %v1360 = vunpack.c.l.b16 %v1094
        %v1361 = vunpack.c.h.b16 %v1094
        %v1362 = vunpack.c.l.b16 %v1095
        %v1363 = vunpack.c.h.b16 %v1095
        %v1364 = vunpack.c.l.b16 %v1096
        %v1365 = vunpack.c.h.b16 %v1096
        %v1366 = vunpack.c.l.b16 %v1097
        %v1367 = vunpack.c.h.b16 %v1097
        %v1368 = vunpack.c.l.b16 %v1098
        %v1369 = vunpack.c.h.b16 %v1098
        %v1370 = vunpack.c.l.b16 %v1099
        %v1371 = vunpack.c.h.b16 %v1099
        %v1372 = vunpack.c.l.b16 %v1100
        %v1373 = vunpack.c.h.b16 %v1100
        %v1374 = vunpack.c.l.b16 %v1101
        %v1375 = vunpack.c.h.b16 %v1101
        %v1376 = vunpack.c.l.b16 %v1102
        %v1377 = vunpack.c.h.b16 %v1102
        %v1378 = vunpack.c.l.b16 %v1103
        %v1379 = vunpack.c.h.b16 %v1103
        %v1380 = vunpack.c.l.b16 %v1104
        %v1381 = vunpack.c.h.b16 %v1104
        %v1382 = vunpack.c.l.b16 %v1105
        %v1383 = vunpack.c.h.b16 %v1105
        %v1384 = vunpack.c.l.b16 %v1106
        %v1385 = vunpack.c.h.b16 %v1106
        %v1386 = vunpack.c.l.b16 %v1107
        %v1387 = vunpack.c.h.b16 %v1107
        %v1388 = vunpack.c.l.b16 %v1108
        %v1389 = vunpack.c.h.b16 %v1108
        %v1390 = vunpack.c.l.b16 %v1109
        %v1391 = vunpack.c.h.b16 %v1109
        %v1392 = vunpack.c.l.b16 %v1110
        %v1393 = vunpack.c.h.b16 %v1110
        %v1394 = vunpack.c.l.b16 %v1111
        %v1395 = vunpack.c.h.b16 %v1111
        %v1396 = vunpack.c.l.b16 %v1112
        %v1397 = vunpack.c.h.b16 %v1112
        %v1398 = vunpack.c.l.b16 %v1113
        %v1399 = vunpack.c.h.b16 %v1113
        %v1400 = vunpack.c.l.b16 %v1114
        %v1401 = vunpack.c.h.b16 %v1114
        %v1402 = vunpack.c.l.b16 %v1115
        %v1403 = vunpack.c.h.b16 %v1115
        %v1404 = vunpack.c.l.b16 %v1116
        %v1405 = vunpack.c.h.b16 %v1116
        %v1406 = vunpack.c.l.b16 %v1117
        %v1407 = vunpack.c.h.b16 %v1117
        %v1408 = vunpack.c.l.b16 %v1118
        %v1409 = vunpack.c.h.b16 %v1118
        %v1410 = vunpack.c.l.b16 %v1119
        %v1411 = vunpack.c.h.b16 %v1119
        %v1412 = vunpack.c.l.b16 %v1120
        %v1413 = vunpack.c.h.b16 %v1120
        %v1414 = vunpack.c.l.b16 %v1121
        %v1415 = vunpack.c.h.b16 %v1121
        %v1416 = vunpack.c.l.b16 %v1122
        %v1417 = vunpack.c.h.b16 %v1122
        %v1418 = vpack.c.b16 %v1232, %v1226
        %v1419 = vpack.c.b16 %v1233, %v1227
        %v1420 = vpack.c.b16 %v1234, %v1228
        %v1421 = vpack.c.b16 %v1235, %v1229
        %v1422 = vpack.c.b16 %v1236, %v1230
        %v1423 = vpack.c.b16 %v1237, %v1231
        %v1424 = vpack.c.b16 %v1244, %v1238
        %v1425 = vpack.c.b16 %v1245, %v1239
        %v1426 = vpack.c.b16 %v1246, %v1240
        %v1427 = vpack.c.b16 %v1247, %v1241
        %v1428 = vpack.c.b16 %v1248, %v1242
        %v1429 = vpack.c.b16 %v1249, %v1243
        %v1430 = vpack.c.b16 %v1256, %v1250
        %v1431 = vpack.c.b16 %v1257, %v1251
        %v1432 = vpack.c.b16 %v1258, %v1252
        %v1433 = vpack.c.b16 %v1259, %v1253
        %v1434 = vpack.c.b16 %v1260, %v1254
        %v1435 = vpack.c.b16 %v1261, %v1255
        %v1436 = vpack.c.b16 %v1268, %v1262
        %v1437 = vpack.c.b16 %v1269, %v1263
        %v1438 = vpack.c.b16 %v1270, %v1264
        %v1439 = vpack.c.b16 %v1271, %v1265
        %v1440 = vpack.c.b16 %v1272, %v1266
        %v1441 = vpack.c.b16 %v1273, %v1267
        %v1442 = vpack.c.b16 %v1280, %v1274
        %v1443 = vpack.c.b16 %v1281, %v1275
        %v1444 = vpack.c.b16 %v1282, %v1276
        %v1445 = vpack.c.b16 %v1283, %v1277
        %v1446 = vpack.c.b16 %v1284, %v1278
        %v1447 = vpack.c.b16 %v1285, %v1279
        %v1448 = vpack.c.b16 %v1292, %v1286
        %v1449 = vpack.c.b16 %v1293, %v1287
        %v1450 = vpack.c.b16 %v1294, %v1288
        %v1451 = vpack.c.b16 %v1295, %v1289
        %v1452 = vpack.c.b16 %v1296, %v1290
        %v1453 = vpack.c.b16 %v1297, %v1291
        %v1454 = vpack.c.b16 %v1304, %v1298
        %v1455 = vpack.c.b16 %v1305, %v1299
        %v1456 = vpack.c.b16 %v1306, %v1300
        %v1457 = vpack.c.b16 %v1307, %v1301
        %v1458 = vpack.c.b16 %v1308, %v1302
        %v1459 = vpack.c.b16 %v1309, %v1303
        %v1460 = vpack.c.b16 %v1316, %v1310
        %v1461 = vpack.c.b16 %v1317, %v1311
        %v1462 = vpack.c.b16 %v1318, %v1312
        %v1463 = vpack.c.b16 %v1319, %v1313
        %v1464 = vpack.c.b16 %v1320, %v1314
        %v1465 = vpack.c.b16 %v1321, %v1315
        %v1466 = vpack.c.b16 %v1328, %v1322
        %v1467 = vpack.c.b16 %v1329, %v1323
        %v1468 = vpack.c.b16 %v1330, %v1324
        %v1469 = vpack.c.b16 %v1331, %v1325
        %v1470 = vpack.c.b16 %v1332, %v1326
        %v1471 = vpack.c.b16 %v1333, %v1327
        %v1472 = vpack.c.b16 %v1340, %v1334
        %v1473 = vpack.c.b16 %v1341, %v1335
        %v1474 = vpack.c.b16 %v1342, %v1336
        %v1475 = vpack.c.b16 %v1343, %v1337
        %v1476 = vpack.c.b16 %v1344, %v1338
        %v1477 = vpack.c.b16 %v1345, %v1339
        %v1478 = vpack.c.b16 %v1352, %v1346
        %v1479 = vpack.c.b16 %v1353, %v1347
        %v1480 = vpack.c.b16 %v1354, %v1348
        %v1481 = vpack.c.b16 %v1355, %v1349
        %v1482 = vpack.c.b16 %v1356, %v1350
        %v1483 = vpack.c.b16 %v1357, %v1351
        %v1484 = vpack.c.b16 %v1364, %v1358
        %v1485 = vpack.c.b16 %v1365, %v1359
        %v1486 = vpack.c.b16 %v1366, %v1360
        %v1487 = vpack.c.b16 %v1367, %v1361
        %v1488 = vpack.c.b16 %v1368, %v1362
        %v1489 = vpack.c.b16 %v1369, %v1363
        %v1490 = vpack.c.b16 %v1376, %v1370
        %v1491 = vpack.c.b16 %v1377, %v1371
        %v1492 = vpack.c.b16 %v1378, %v1372
        %v1493 = vpack.c.b16 %v1379, %v1373
        %v1494 = vpack.c.b16 %v1380, %v1374
        %v1495 = vpack.c.b16 %v1381, %v1375
        %v1496 = vpack.c.b16 %v1388, %v1382
        %v1497 = vpack.c.b16 %v1389, %v1383
        %v1498 = vpack.c.b16 %v1390, %v1384
        %v1499 = vpack.c.b16 %v1391, %v1385
        %v1500 = vpack.c.b16 %v1392, %v1386
        %v1501 = vpack.c.b16 %v1393, %v1387
        %v1502 = vpack.c.b16 %v1400, %v1394
        %v1503 = vpack.c.b16 %v1401, %v1395
        %v1504 = vpack.c.b16 %v1402, %v1396
        %v1505 = vpack.c.b16 %v1403, %v1397
        %v1506 = vpack.c.b16 %v1404, %v1398
        %v1507 = vpack.c.b16 %v1405, %v1399
        %v1508 = vpack.c.b16 %v1412, %v1406
        %v1509 = vpack.c.b16 %v1413, %v1407
        %v1510 = vpack.c.b16 %v1414, %v1408
        %v1511 = vpack.c.b16 %v1415, %v1409
        %v1512 = vpack.c.b16 %v1416, %v1410
        %v1513 = vpack.c.b16 %v1417, %v1411
        %1610 = vmatpush.bf16.msra.mxu0 %v1460
        %1611 = vmatpush.bf16.msra.mxu0 %v1454
        %1612 = vmatpush.bf16.msra.mxu0 %v1448
        %1613 = vmatpush.bf16.msra.mxu0 %v1442
        %1614 = vmatpush.bf16.msra.mxu0 %v1436
        %1615 = vmatpush.bf16.msra.mxu0 %v1430
        %1616 = vmatpush.bf16.msra.mxu0 %v1424
        %1617 = vmatpush.bf16.msra.mxu0 %v1418
        %1618 = vmatmul.bf16.gmra.mxu0 %v1126
        %v1619 = vpop.f32.mrf.mxu0
        %v1620 = vadd.f32 0.0, %v1619
        %v1621 = vpop.f32.mrf.mxu0
        %1622 = vdwg.mxu0
        %1623 = vmatpush.bf16.msra.mxu0 %v1508
        %1624 = vmatpush.bf16.msra.mxu0 %v1502
        %1625 = vmatpush.bf16.msra.mxu0 %v1496
        %1626 = vmatpush.bf16.msra.mxu0 %v1490
        %1627 = vmatpush.bf16.msra.mxu0 %v1484
        %1628 = vmatpush.bf16.msra.mxu0 %v1478
        %1629 = vmatpush.bf16.msra.mxu0 %v1472
        %1630 = vmatpush.bf16.msra.mxu0 %v1466
        %1631 = vmatmul.bf16.gmra.mxu0 %v1127
        %v1632 = vpop.f32.mrf.mxu0
        %v1633 = vadd.f32 %v1620, %v1632
        %v1634 = vpop.f32.mrf.mxu0
        %1635 = vdwg.mxu0
        %1636 = vmatpush.bf16.msra.mxu0 %v1461
        %1637 = vmatpush.bf16.msra.mxu0 %v1455
        %1638 = vmatpush.bf16.msra.mxu0 %v1449
        %1639 = vmatpush.bf16.msra.mxu0 %v1443
        %1640 = vmatpush.bf16.msra.mxu0 %v1437
        %1641 = vmatpush.bf16.msra.mxu0 %v1431
        %1642 = vmatpush.bf16.msra.mxu0 %v1425
        %1643 = vmatpush.bf16.msra.mxu0 %v1419
        %1644 = vmatmul.bf16.gmra.mxu0 %v1126
        %v1645 = vpop.f32.mrf.mxu0
        %v1646 = vadd.f32 0.0, %v1645
        %v1647 = vpop.f32.mrf.mxu0
        %1648 = vdwg.mxu0
        %1649 = vmatpush.bf16.msra.mxu0 %v1509
        %1650 = vmatpush.bf16.msra.mxu0 %v1503
        %1651 = vmatpush.bf16.msra.mxu0 %v1497
        %1652 = vmatpush.bf16.msra.mxu0 %v1491
        %1653 = vmatpush.bf16.msra.mxu0 %v1485
        %1654 = vmatpush.bf16.msra.mxu0 %v1479
        %1655 = vmatpush.bf16.msra.mxu0 %v1473
        %1656 = vmatpush.bf16.msra.mxu0 %v1467
        %1657 = vmatmul.bf16.gmra.mxu0 %v1127
        %v1658 = vpop.f32.mrf.mxu0
        %v1659 = vadd.f32 %v1646, %v1658
        %v1660 = vpop.f32.mrf.mxu0
        %1661 = vdwg.mxu0
        %1662 = vmatpush.bf16.msra.mxu0 %v1462
        %1663 = vmatpush.bf16.msra.mxu0 %v1456
        %1664 = vmatpush.bf16.msra.mxu0 %v1450
        %1665 = vmatpush.bf16.msra.mxu0 %v1444
        %1666 = vmatpush.bf16.msra.mxu0 %v1438
        %1667 = vmatpush.bf16.msra.mxu0 %v1432
        %1668 = vmatpush.bf16.msra.mxu0 %v1426
        %1669 = vmatpush.bf16.msra.mxu0 %v1420
        %1670 = vmatmul.bf16.gmra.mxu0 %v1126
        %v1671 = vpop.f32.mrf.mxu0
        %v1672 = vadd.f32 0.0, %v1671
        %v1673 = vpop.f32.mrf.mxu0
        %1674 = vdwg.mxu0
        %1675 = vmatpush.bf16.msra.mxu0 %v1510
        %1676 = vmatpush.bf16.msra.mxu0 %v1504
        %1677 = vmatpush.bf16.msra.mxu0 %v1498
        %1678 = vmatpush.bf16.msra.mxu0 %v1492
        %1679 = vmatpush.bf16.msra.mxu0 %v1486
        %1680 = vmatpush.bf16.msra.mxu0 %v1480
        %1681 = vmatpush.bf16.msra.mxu0 %v1474
        %1682 = vmatpush.bf16.msra.mxu0 %v1468
        %1683 = vmatmul.bf16.gmra.mxu0 %v1127
        %v1684 = vpop.f32.mrf.mxu0
        %v1685 = vadd.f32 %v1672, %v1684
        %v1686 = vpop.f32.mrf.mxu0
        %1687 = vdwg.mxu0
        %1688 = vmatpush.bf16.msra.mxu0 %v1463
        %1689 = vmatpush.bf16.msra.mxu0 %v1457
        %1690 = vmatpush.bf16.msra.mxu0 %v1451
        %1691 = vmatpush.bf16.msra.mxu0 %v1445
        %1692 = vmatpush.bf16.msra.mxu0 %v1439
        %1693 = vmatpush.bf16.msra.mxu0 %v1433
        %1694 = vmatpush.bf16.msra.mxu0 %v1427
        %1695 = vmatpush.bf16.msra.mxu0 %v1421
        %1696 = vmatmul.bf16.gmra.mxu0 %v1126
        %v1697 = vpop.f32.mrf.mxu0
        %v1698 = vadd.f32 0.0, %v1697
        %v1699 = vpop.f32.mrf.mxu0
        %1700 = vdwg.mxu0
        %1701 = vmatpush.bf16.msra.mxu0 %v1511
        %1702 = vmatpush.bf16.msra.mxu0 %v1505
        %1703 = vmatpush.bf16.msra.mxu0 %v1499
        %1704 = vmatpush.bf16.msra.mxu0 %v1493
        %1705 = vmatpush.bf16.msra.mxu0 %v1487
        %1706 = vmatpush.bf16.msra.mxu0 %v1481
        %1707 = vmatpush.bf16.msra.mxu0 %v1475
        %1708 = vmatpush.bf16.msra.mxu0 %v1469
        %1709 = vmatmul.bf16.gmra.mxu0 %v1127
        %v1710 = vpop.f32.mrf.mxu0
        %v1711 = vadd.f32 %v1698, %v1710
        %v1712 = vpop.f32.mrf.mxu0
        %1713 = vdwg.mxu0
        %1714 = vmatpush.bf16.msra.mxu0 %v1464
        %1715 = vmatpush.bf16.msra.mxu0 %v1458
        %1716 = vmatpush.bf16.msra.mxu0 %v1452
        %1717 = vmatpush.bf16.msra.mxu0 %v1446
        %1718 = vmatpush.bf16.msra.mxu0 %v1440
        %1719 = vmatpush.bf16.msra.mxu0 %v1434
        %1720 = vmatpush.bf16.msra.mxu0 %v1428
        %1721 = vmatpush.bf16.msra.mxu0 %v1422
        %1722 = vmatmul.bf16.gmra.mxu0 %v1126
        %v1723 = vpop.f32.mrf.mxu0
        %v1724 = vadd.f32 0.0, %v1723
        %v1725 = vpop.f32.mrf.mxu0
        %1726 = vdwg.mxu0
        %1727 = vmatpush.bf16.msra.mxu0 %v1512
        %1728 = vmatpush.bf16.msra.mxu0 %v1506
        %1729 = vmatpush.bf16.msra.mxu0 %v1500
        %1730 = vmatpush.bf16.msra.mxu0 %v1494
        %1731 = vmatpush.bf16.msra.mxu0 %v1488
        %1732 = vmatpush.bf16.msra.mxu0 %v1482
        %1733 = vmatpush.bf16.msra.mxu0 %v1476
        %1734 = vmatpush.bf16.msra.mxu0 %v1470
        %1735 = vmatmul.bf16.gmra.mxu0 %v1127
        %v1736 = vpop.f32.mrf.mxu0
        %v1737 = vadd.f32 %v1724, %v1736
        %v1738 = vpop.f32.mrf.mxu0
        %1739 = vdwg.mxu0
        %1740 = vmatpush.bf16.msra.mxu0 %v1465
        %1741 = vmatpush.bf16.msra.mxu0 %v1459
        %1742 = vmatpush.bf16.msra.mxu0 %v1453
        %1743 = vmatpush.bf16.msra.mxu0 %v1447
        %1744 = vmatpush.bf16.msra.mxu0 %v1441
        %1745 = vmatpush.bf16.msra.mxu0 %v1435
        %1746 = vmatpush.bf16.msra.mxu0 %v1429
        %1747 = vmatpush.bf16.msra.mxu0 %v1423
        %1748 = vmatmul.bf16.gmra.mxu0 %v1126
        %v1749 = vpop.f32.mrf.mxu0
        %v1750 = vadd.f32 0.0, %v1749
        %v1751 = vpop.f32.mrf.mxu0
        %1752 = vdwg.mxu0
        %1753 = vmatpush.bf16.msra.mxu0 %v1513
        %1754 = vmatpush.bf16.msra.mxu0 %v1507
        %1755 = vmatpush.bf16.msra.mxu0 %v1501
        %1756 = vmatpush.bf16.msra.mxu0 %v1495
        %1757 = vmatpush.bf16.msra.mxu0 %v1489
        %1758 = vmatpush.bf16.msra.mxu0 %v1483
        %1759 = vmatpush.bf16.msra.mxu0 %v1477
        %1760 = vmatpush.bf16.msra.mxu0 %v1471
        %1761 = vmatmul.bf16.gmra.mxu0 %v1127
        %v1762 = vpop.f32.mrf.mxu0
        %v1763 = vadd.f32 %v1750, %v1762
        %v1764 = vpop.f32.mrf.mxu0
        %1765 = vdwg.mxu0
        %v1766 = vadd.f32 %v1020, %v1633
        %v1767 = vadd.f32 %v1021, %v1659
        %v1768 = vadd.f32 %v1022, %v1685
        %v1769 = vadd.f32 %v1023, %v1711
        %v1770 = vadd.f32 %v1024, %v1737
        %v1771 = vadd.f32 %v1025, %v1763
        %1772 = vst [vmem:[#allocation2] sm:$0xff] %v1766
        %1773 = vst [vmem:[#allocation2 + $0x8] sm:$0xff] %v1767
        %1774 = vst [vmem:[#allocation2 + $0x10] sm:$0xff] %v1768
        %1775 = vst [vmem:[#allocation2 + $0x18] sm:$0xff] %v1769
        %1776 = vst [vmem:[#allocation2 + $0x20] sm:$0xff] %v1770
        %1777 = vst [vmem:[#allocation2 + $0x28] sm:$0xff] %v1771
        %p1778 = scmp.eq.s32.totalorder %s50, 3
        // Predicated region
        $region189: #{tpu_custom_call.1} parent=103 // pred_check
          %p1779 = pneg %p1778
        $region190: #{tpu_custom_call.1} parent=103 // pred_check_branch
          %1781 = sbr.rel (%p1779) target = $region192
        $region191: #{tpu_custom_call.1} parent=103 // pred_region
          %v1782 = vld [vmem:[#allocation2] sm:$0xff]
          %v1783 = vld [vmem:[#allocation2 + $0x8] sm:$0xff]
          %v1784 = vld [vmem:[#allocation2 + $0x10] sm:$0xff]
          %v1785 = vld [vmem:[#allocation2 + $0x18] sm:$0xff]
          %v1786 = vld [vmem:[#allocation2 + $0x20] sm:$0xff]
          %v1787 = vld [vmem:[#allocation2 + $0x28] sm:$0xff]
          %v1788 = vld [vmem:[#allocation9] sm:$0x3f]
          %v1790 = vperm.slane %v1788, 0
          %v1791 = vperm.slane %v1788, 1
          %v1792 = vperm.slane %v1788, 2
          %v1793 = vperm.slane %v1788, 3
          %v1794 = vperm.slane %v1788, 4
          %v1795 = vperm.slane %v1788, 5
          %v1802 = vadd.f32 %v1782, %v1790
          %v1803 = vadd.f32 %v1783, %v1791
          %v1804 = vadd.f32 %v1784, %v1792
          %v1805 = vadd.f32 %v1785, %v1793
          %v1806 = vadd.f32 %v1786, %v1794
          %v1807 = vadd.f32 %v1787, %v1795
          %v1808 = vld [vmem:[#allocation10] sm:$0xff]
          %v1809 = vld [vmem:[#allocation10 + $0x8] sm:$0xff]
          %v1810 = vld [vmem:[#allocation10 + $0x10] sm:$0xff]
          %v1811 = vld [vmem:[#allocation10 + $0x18] sm:$0xff]
          %v1812 = vld [vmem:[#allocation10 + $0x20] sm:$0xff]
          %v1813 = vld [vmem:[#allocation10 + $0x28] sm:$0xff]
          %v1814 = vld [vmem:[#allocation10 + $0x30] sm:$0xff]
          %v1815 = vld [vmem:[#allocation10 + $0x38] sm:$0xff]
          %v1816 = vld [vmem:[#allocation10 + $0x40] sm:$0xff]
          %v1817 = vld [vmem:[#allocation10 + $0x48] sm:$0xff]
          %v1818 = vld [vmem:[#allocation10 + $0x50] sm:$0xff]
          %v1819 = vld [vmem:[#allocation10 + $0x58] sm:$0xff]
          %v1820 = vld [vmem:[#allocation10 + $0x60] sm:$0xff]
          %v1821 = vld [vmem:[#allocation10 + $0x68] sm:$0xff]
          %v1822 = vld [vmem:[#allocation10 + $0x70] sm:$0xff]
          %v1823 = vld [vmem:[#allocation10 + $0x78] sm:$0xff]
          %v1824 = vld [vmem:[#allocation10 + $0x80] sm:$0xff]
          %v1825 = vld [vmem:[#allocation10 + $0x88] sm:$0xff]
          %v1826 = vld [vmem:[#allocation10 + $0x90] sm:$0xff]
          %v1827 = vld [vmem:[#allocation10 + $0x98] sm:$0xff]
          %v1828 = vld [vmem:[#allocation10 + $0xa0] sm:$0xff]
          %v1829 = vld [vmem:[#allocation10 + $0xa8] sm:$0xff]
          %v1830 = vld [vmem:[#allocation10 + $0xb0] sm:$0xff]
          %v1831 = vld [vmem:[#allocation10 + $0xb8] sm:$0xff]
          %v1832 = vld [vmem:[#allocation10 + $0xc0] sm:$0xff]
          %v1833 = vld [vmem:[#allocation10 + $0xc8] sm:$0xff]
          %v1834 = vld [vmem:[#allocation10 + $0xd0] sm:$0xff]
          %v1835 = vld [vmem:[#allocation10 + $0xd8] sm:$0xff]
          %v1836 = vld [vmem:[#allocation10 + $0xe0] sm:$0xff]
          %v1837 = vld [vmem:[#allocation10 + $0xe8] sm:$0xff]
          %v1838 = vld [vmem:[#allocation10 + $0xf0] sm:$0xff]
          %v1839 = vld [vmem:[#allocation10 + $0xf8] sm:$0xff]
          %v1840 = vld [vmem:[#allocation10 + $0x100] sm:$0xff]
          %v1841 = vld [vmem:[#allocation10 + $0x108] sm:$0xff]
          %v1842 = vld [vmem:[#allocation10 + $0x110] sm:$0xff]
          %v1843 = vld [vmem:[#allocation10 + $0x118] sm:$0xff]
          %v1844 = vld [vmem:[#allocation10 + $0x120] sm:$0xff]
          %v1845 = vld [vmem:[#allocation10 + $0x128] sm:$0xff]
          %v1846 = vld [vmem:[#allocation10 + $0x130] sm:$0xff]
          %v1847 = vld [vmem:[#allocation10 + $0x138] sm:$0xff]
          %v1848 = vld [vmem:[#allocation10 + $0x140] sm:$0xff]
          %v1849 = vld [vmem:[#allocation10 + $0x148] sm:$0xff]
          %v1850 = vld [vmem:[#allocation10 + $0x150] sm:$0xff]
          %v1851 = vld [vmem:[#allocation10 + $0x158] sm:$0xff]
          %v1852 = vld [vmem:[#allocation10 + $0x160] sm:$0xff]
          %v1853 = vld [vmem:[#allocation10 + $0x168] sm:$0xff]
          %v1854 = vld [vmem:[#allocation10 + $0x170] sm:$0xff]
          %v1855 = vld [vmem:[#allocation10 + $0x178] sm:$0xff]
          %v1856 = vld [vmem:[#allocation10 + $0x180] sm:$0xff]
          %v1857 = vld [vmem:[#allocation10 + $0x188] sm:$0xff]
          %v1858 = vld [vmem:[#allocation10 + $0x190] sm:$0xff]
          %v1859 = vld [vmem:[#allocation10 + $0x198] sm:$0xff]
          %v1860 = vld [vmem:[#allocation10 + $0x1a0] sm:$0xff]
          %v1861 = vld [vmem:[#allocation10 + $0x1a8] sm:$0xff]
          %v1862 = vld [vmem:[#allocation10 + $0x1b0] sm:$0xff]
          %v1863 = vld [vmem:[#allocation10 + $0x1b8] sm:$0xff]
          %v1864 = vld [vmem:[#allocation10 + $0x1c0] sm:$0xff]
          %v1865 = vld [vmem:[#allocation10 + $0x1c8] sm:$0xff]
          %v1866 = vld [vmem:[#allocation10 + $0x1d0] sm:$0xff]
          %v1867 = vld [vmem:[#allocation10 + $0x1d8] sm:$0xff]
          %v1868 = vld [vmem:[#allocation10 + $0x1e0] sm:$0xff]
          %v1869 = vld [vmem:[#allocation10 + $0x1e8] sm:$0xff]
          %v1870 = vld [vmem:[#allocation10 + $0x1f0] sm:$0xff]
          %v1871 = vld [vmem:[#allocation10 + $0x1f8] sm:$0xff]
          %v1872 = vld [vmem:[#allocation10 + $0x200] sm:$0xff]
          %v1873 = vld [vmem:[#allocation10 + $0x208] sm:$0xff]
          %v1874 = vld [vmem:[#allocation10 + $0x210] sm:$0xff]
          %v1875 = vld [vmem:[#allocation10 + $0x218] sm:$0xff]
          %v1876 = vld [vmem:[#allocation10 + $0x220] sm:$0xff]
          %v1877 = vld [vmem:[#allocation10 + $0x228] sm:$0xff]
          %v1878 = vld [vmem:[#allocation10 + $0x230] sm:$0xff]
          %v1879 = vld [vmem:[#allocation10 + $0x238] sm:$0xff]
          %v1880 = vld [vmem:[#allocation10 + $0x240] sm:$0xff]
          %v1881 = vld [vmem:[#allocation10 + $0x248] sm:$0xff]
          %v1882 = vld [vmem:[#allocation10 + $0x250] sm:$0xff]
          %v1883 = vld [vmem:[#allocation10 + $0x258] sm:$0xff]
          %v1884 = vld [vmem:[#allocation10 + $0x260] sm:$0xff]
          %v1885 = vld [vmem:[#allocation10 + $0x268] sm:$0xff]
          %v1886 = vld [vmem:[#allocation10 + $0x270] sm:$0xff]
          %v1887 = vld [vmem:[#allocation10 + $0x278] sm:$0xff]
          %v1888 = vld [vmem:[#allocation10 + $0x280] sm:$0xff]
          %v1889 = vld [vmem:[#allocation10 + $0x288] sm:$0xff]
          %v1890 = vld [vmem:[#allocation10 + $0x290] sm:$0xff]
          %v1891 = vld [vmem:[#allocation10 + $0x298] sm:$0xff]
          %v1892 = vld [vmem:[#allocation10 + $0x2a0] sm:$0xff]
          %v1893 = vld [vmem:[#allocation10 + $0x2a8] sm:$0xff]
          %v1894 = vld [vmem:[#allocation10 + $0x2b0] sm:$0xff]
          %v1895 = vld [vmem:[#allocation10 + $0x2b8] sm:$0xff]
          %v1896 = vld [vmem:[#allocation10 + $0x2c0] sm:$0xff]
          %v1897 = vld [vmem:[#allocation10 + $0x2c8] sm:$0xff]
          %v1898 = vld [vmem:[#allocation10 + $0x2d0] sm:$0xff]
          %v1899 = vld [vmem:[#allocation10 + $0x2d8] sm:$0xff]
          %v1900 = vld [vmem:[#allocation10 + $0x2e0] sm:$0xff]
          %v1901 = vld [vmem:[#allocation10 + $0x2e8] sm:$0xff]
          %v1902 = vld [vmem:[#allocation10 + $0x2f0] sm:$0xff]
          %v1903 = vld [vmem:[#allocation10 + $0x2f8] sm:$0xff]
          %v1904 = vld [vmem:[#allocation10 + $0x300] sm:$0xff]
          %v1905 = vld [vmem:[#allocation10 + $0x308] sm:$0xff]
          %v1906 = vld [vmem:[#allocation10 + $0x310] sm:$0xff]
          %v1907 = vld [vmem:[#allocation10 + $0x318] sm:$0xff]
          %v1908 = vld [vmem:[#allocation10 + $0x320] sm:$0xff]
          %v1909 = vld [vmem:[#allocation10 + $0x328] sm:$0xff]
          %v1910 = vld [vmem:[#allocation10 + $0x330] sm:$0xff]
          %v1911 = vld [vmem:[#allocation10 + $0x338] sm:$0xff]
          %v1912 = vld [vmem:[#allocation10 + $0x340] sm:$0xff]
          %v1913 = vld [vmem:[#allocation10 + $0x348] sm:$0xff]
          %v1914 = vld [vmem:[#allocation10 + $0x350] sm:$0xff]
          %v1915 = vld [vmem:[#allocation10 + $0x358] sm:$0xff]
          %v1916 = vld [vmem:[#allocation10 + $0x360] sm:$0xff]
          %v1917 = vld [vmem:[#allocation10 + $0x368] sm:$0xff]
          %v1918 = vld [vmem:[#allocation10 + $0x370] sm:$0xff]
          %v1919 = vld [vmem:[#allocation10 + $0x378] sm:$0xff]
          %v1920 = vld [vmem:[#allocation10 + $0x380] sm:$0xff]
          %v1921 = vld [vmem:[#allocation10 + $0x388] sm:$0xff]
          %v1922 = vld [vmem:[#allocation10 + $0x390] sm:$0xff]
          %v1923 = vld [vmem:[#allocation10 + $0x398] sm:$0xff]
          %v1924 = vld [vmem:[#allocation10 + $0x3a0] sm:$0xff]
          %v1925 = vld [vmem:[#allocation10 + $0x3a8] sm:$0xff]
          %v1926 = vld [vmem:[#allocation10 + $0x3b0] sm:$0xff]
          %v1927 = vld [vmem:[#allocation10 + $0x3b8] sm:$0xff]
          %v1928 = vld [vmem:[#allocation10 + $0x3c0] sm:$0xff]
          %v1929 = vld [vmem:[#allocation10 + $0x3c8] sm:$0xff]
          %v1930 = vld [vmem:[#allocation10 + $0x3d0] sm:$0xff]
          %v1931 = vld [vmem:[#allocation10 + $0x3d8] sm:$0xff]
          %v1932 = vld [vmem:[#allocation10 + $0x3e0] sm:$0xff]
          %v1933 = vld [vmem:[#allocation10 + $0x3e8] sm:$0xff]
          %v1934 = vld [vmem:[#allocation10 + $0x3f0] sm:$0xff]
          %v1935 = vld [vmem:[#allocation10 + $0x3f8] sm:$0xff]
          %v1936 = vld [vmem:[#allocation10 + $0x400] sm:$0xff]
          %v1937 = vld [vmem:[#allocation10 + $0x408] sm:$0xff]
          %v1938 = vld [vmem:[#allocation10 + $0x410] sm:$0xff]
          %v1939 = vld [vmem:[#allocation10 + $0x418] sm:$0xff]
          %v1940 = vld [vmem:[#allocation10 + $0x420] sm:$0xff]
          %v1941 = vld [vmem:[#allocation10 + $0x428] sm:$0xff]
          %v1942 = vld [vmem:[#allocation10 + $0x430] sm:$0xff]
          %v1943 = vld [vmem:[#allocation10 + $0x438] sm:$0xff]
          %v1944 = vld [vmem:[#allocation10 + $0x440] sm:$0xff]
          %v1945 = vld [vmem:[#allocation10 + $0x448] sm:$0xff]
          %v1946 = vld [vmem:[#allocation10 + $0x450] sm:$0xff]
          %v1947 = vld [vmem:[#allocation10 + $0x458] sm:$0xff]
          %v1948 = vld [vmem:[#allocation10 + $0x460] sm:$0xff]
          %v1949 = vld [vmem:[#allocation10 + $0x468] sm:$0xff]
          %v1950 = vld [vmem:[#allocation10 + $0x470] sm:$0xff]
          %v1951 = vld [vmem:[#allocation10 + $0x478] sm:$0xff]
          %v1952 = vld [vmem:[#allocation10 + $0x480] sm:$0xff]
          %v1953 = vld [vmem:[#allocation10 + $0x488] sm:$0xff]
          %v1954 = vld [vmem:[#allocation10 + $0x490] sm:$0xff]
          %v1955 = vld [vmem:[#allocation10 + $0x498] sm:$0xff]
          %v1956 = vld [vmem:[#allocation10 + $0x4a0] sm:$0xff]
          %v1957 = vld [vmem:[#allocation10 + $0x4a8] sm:$0xff]
          %v1958 = vld [vmem:[#allocation10 + $0x4b0] sm:$0xff]
          %v1959 = vld [vmem:[#allocation10 + $0x4b8] sm:$0xff]
          %v1960 = vld [vmem:[#allocation10 + $0x4c0] sm:$0xff]
          %v1961 = vld [vmem:[#allocation10 + $0x4c8] sm:$0xff]
          %v1962 = vld [vmem:[#allocation10 + $0x4d0] sm:$0xff]
          %v1963 = vld [vmem:[#allocation10 + $0x4d8] sm:$0xff]
          %v1964 = vld [vmem:[#allocation10 + $0x4e0] sm:$0xff]
          %v1965 = vld [vmem:[#allocation10 + $0x4e8] sm:$0xff]
          %v1966 = vld [vmem:[#allocation10 + $0x4f0] sm:$0xff]
          %v1967 = vld [vmem:[#allocation10 + $0x4f8] sm:$0xff]
          %v1968 = vld [vmem:[#allocation10 + $0x500] sm:$0xff]
          %v1969 = vld [vmem:[#allocation10 + $0x508] sm:$0xff]
          %v1970 = vld [vmem:[#allocation10 + $0x510] sm:$0xff]
          %v1971 = vld [vmem:[#allocation10 + $0x518] sm:$0xff]
          %v1972 = vld [vmem:[#allocation10 + $0x520] sm:$0xff]
          %v1973 = vld [vmem:[#allocation10 + $0x528] sm:$0xff]
          %v1974 = vld [vmem:[#allocation10 + $0x530] sm:$0xff]
          %v1975 = vld [vmem:[#allocation10 + $0x538] sm:$0xff]
          %v1976 = vld [vmem:[#allocation10 + $0x540] sm:$0xff]
          %v1977 = vld [vmem:[#allocation10 + $0x548] sm:$0xff]
          %v1978 = vld [vmem:[#allocation10 + $0x550] sm:$0xff]
          %v1979 = vld [vmem:[#allocation10 + $0x558] sm:$0xff]
          %v1980 = vld [vmem:[#allocation10 + $0x560] sm:$0xff]
          %v1981 = vld [vmem:[#allocation10 + $0x568] sm:$0xff]
          %v1982 = vld [vmem:[#allocation10 + $0x570] sm:$0xff]
          %v1983 = vld [vmem:[#allocation10 + $0x578] sm:$0xff]
          %v1984 = vld [vmem:[#allocation10 + $0x580] sm:$0xff]
          %v1985 = vld [vmem:[#allocation10 + $0x588] sm:$0xff]
          %v1986 = vld [vmem:[#allocation10 + $0x590] sm:$0xff]
          %v1987 = vld [vmem:[#allocation10 + $0x598] sm:$0xff]
          %v1988 = vld [vmem:[#allocation10 + $0x5a0] sm:$0xff]
          %v1989 = vld [vmem:[#allocation10 + $0x5a8] sm:$0xff]
          %v1990 = vld [vmem:[#allocation10 + $0x5b0] sm:$0xff]
          %v1991 = vld [vmem:[#allocation10 + $0x5b8] sm:$0xff]
          %v1992 = vld [vmem:[#allocation10 + $0x5c0] sm:$0xff]
          %v1993 = vld [vmem:[#allocation10 + $0x5c8] sm:$0xff]
          %v1994 = vld [vmem:[#allocation10 + $0x5d0] sm:$0xff]
          %v1995 = vld [vmem:[#allocation10 + $0x5d8] sm:$0xff]
          %v1996 = vld [vmem:[#allocation10 + $0x5e0] sm:$0xff]
          %v1997 = vld [vmem:[#allocation10 + $0x5e8] sm:$0xff]
          %v1998 = vld [vmem:[#allocation10 + $0x5f0] sm:$0xff]
          %v1999 = vld [vmem:[#allocation10 + $0x5f8] sm:$0xff]
          %v2000 = vld [vmem:[#allocation12] sm:$0x3]
          %v2002 = vperm.slane %v2000, 0
          %v2003 = vperm.slane %v2000, 1
          %2006 = vmatpush.msra.mxu0 %v1838
          %2007 = vmatpush.msra.mxu0 %v1836
          %2008 = vmatpush.msra.mxu0 %v1834
          %2009 = vmatpush.msra.mxu0 %v1832
          %2010 = vmatpush.msra.mxu0 %v1830
          %2011 = vmatpush.msra.mxu0 %v1828
          %2012 = vmatpush.msra.mxu0 %v1826
          %2013 = vmatpush.msra.mxu0 %v1824
          %2014 = vmatpush.msra.mxu0 %v1822
          %2015 = vmatpush.msra.mxu0 %v1820
          %2016 = vmatpush.msra.mxu0 %v1818
          %2017 = vmatpush.msra.mxu0 %v1816
          %2018 = vmatpush.msra.mxu0 %v1814
          %2019 = vmatpush.msra.mxu0 %v1812
          %2020 = vmatpush.msra.mxu0 %v1810
          %2021 = vmatpush.msra.mxu0 %v1808
          %2022 = vmatmul.f32.gmra.mxu0 %v1802
          %v2023 = vpop.f32.mrf.mxu0
          %v2024 = vadd.f32 %v2002, %v2023
          %2025 = vdwg.mxu0
          %2026 = vmatpush.msra.mxu0 %v1870
          %2027 = vmatpush.msra.mxu0 %v1868
          %2028 = vmatpush.msra.mxu0 %v1866
          %2029 = vmatpush.msra.mxu0 %v1864
          %2030 = vmatpush.msra.mxu0 %v1862
          %2031 = vmatpush.msra.mxu0 %v1860
          %2032 = vmatpush.msra.mxu0 %v1858
          %2033 = vmatpush.msra.mxu0 %v1856
          %2034 = vmatpush.msra.mxu0 %v1854
          %2035 = vmatpush.msra.mxu0 %v1852
          %2036 = vmatpush.msra.mxu0 %v1850
          %2037 = vmatpush.msra.mxu0 %v1848
          %2038 = vmatpush.msra.mxu0 %v1846
          %2039 = vmatpush.msra.mxu0 %v1844
          %2040 = vmatpush.msra.mxu0 %v1842
          %2041 = vmatpush.msra.mxu0 %v1840
          %2042 = vmatmul.f32.gmra.mxu0 %v1803
          %v2043 = vpop.f32.mrf.mxu0
          %v2044 = vadd.f32 %v2024, %v2043
          %2045 = vdwg.mxu0
          %2046 = vmatpush.msra.mxu0 %v1902
          %2047 = vmatpush.msra.mxu0 %v1900
          %2048 = vmatpush.msra.mxu0 %v1898
          %2049 = vmatpush.msra.mxu0 %v1896
          %2050 = vmatpush.msra.mxu0 %v1894
          %2051 = vmatpush.msra.mxu0 %v1892
          %2052 = vmatpush.msra.mxu0 %v1890
          %2053 = vmatpush.msra.mxu0 %v1888
          %2054 = vmatpush.msra.mxu0 %v1886
          %2055 = vmatpush.msra.mxu0 %v1884
          %2056 = vmatpush.msra.mxu0 %v1882
          %2057 = vmatpush.msra.mxu0 %v1880
          %2058 = vmatpush.msra.mxu0 %v1878
          %2059 = vmatpush.msra.mxu0 %v1876
          %2060 = vmatpush.msra.mxu0 %v1874
          %2061 = vmatpush.msra.mxu0 %v1872
          %2062 = vmatmul.f32.gmra.mxu0 %v1804
          %v2063 = vpop.f32.mrf.mxu0
          %v2064 = vadd.f32 %v2044, %v2063
          %2065 = vdwg.mxu0
          %2066 = vmatpush.msra.mxu0 %v1934
          %2067 = vmatpush.msra.mxu0 %v1932
          %2068 = vmatpush.msra.mxu0 %v1930
          %2069 = vmatpush.msra.mxu0 %v1928
          %2070 = vmatpush.msra.mxu0 %v1926
          %2071 = vmatpush.msra.mxu0 %v1924
          %2072 = vmatpush.msra.mxu0 %v1922
          %2073 = vmatpush.msra.mxu0 %v1920
          %2074 = vmatpush.msra.mxu0 %v1918
          %2075 = vmatpush.msra.mxu0 %v1916
          %2076 = vmatpush.msra.mxu0 %v1914
          %2077 = vmatpush.msra.mxu0 %v1912
          %2078 = vmatpush.msra.mxu0 %v1910
          %2079 = vmatpush.msra.mxu0 %v1908
          %2080 = vmatpush.msra.mxu0 %v1906
          %2081 = vmatpush.msra.mxu0 %v1904
          %2082 = vmatmul.f32.gmra.mxu0 %v1805
          %v2083 = vpop.f32.mrf.mxu0
          %v2084 = vadd.f32 %v2064, %v2083
          %2085 = vdwg.mxu0
          %2086 = vmatpush.msra.mxu0 %v1966
          %2087 = vmatpush.msra.mxu0 %v1964
          %2088 = vmatpush.msra.mxu0 %v1962
          %2089 = vmatpush.msra.mxu0 %v1960
          %2090 = vmatpush.msra.mxu0 %v1958
          %2091 = vmatpush.msra.mxu0 %v1956
          %2092 = vmatpush.msra.mxu0 %v1954
          %2093 = vmatpush.msra.mxu0 %v1952
          %2094 = vmatpush.msra.mxu0 %v1950
          %2095 = vmatpush.msra.mxu0 %v1948
          %2096 = vmatpush.msra.mxu0 %v1946
          %2097 = vmatpush.msra.mxu0 %v1944
          %2098 = vmatpush.msra.mxu0 %v1942
          %2099 = vmatpush.msra.mxu0 %v1940
          %2100 = vmatpush.msra.mxu0 %v1938
          %2101 = vmatpush.msra.mxu0 %v1936
          %2102 = vmatmul.f32.gmra.mxu0 %v1806
          %v2103 = vpop.f32.mrf.mxu0
          %v2104 = vadd.f32 %v2084, %v2103
          %2105 = vdwg.mxu0
          %2106 = vmatpush.msra.mxu0 %v1998
          %2107 = vmatpush.msra.mxu0 %v1996
          %2108 = vmatpush.msra.mxu0 %v1994
          %2109 = vmatpush.msra.mxu0 %v1992
          %2110 = vmatpush.msra.mxu0 %v1990
          %2111 = vmatpush.msra.mxu0 %v1988
          %2112 = vmatpush.msra.mxu0 %v1986
          %2113 = vmatpush.msra.mxu0 %v1984
          %2114 = vmatpush.msra.mxu0 %v1982
          %2115 = vmatpush.msra.mxu0 %v1980
          %2116 = vmatpush.msra.mxu0 %v1978
          %2117 = vmatpush.msra.mxu0 %v1976
          %2118 = vmatpush.msra.mxu0 %v1974
          %2119 = vmatpush.msra.mxu0 %v1972
          %2120 = vmatpush.msra.mxu0 %v1970
          %2121 = vmatpush.msra.mxu0 %v1968
          %2122 = vmatmul.f32.gmra.mxu0 %v1807
          %v2123 = vpop.f32.mrf.mxu0
          %v2124 = vadd.f32 %v2104, %v2123
          %2125 = vdwg.mxu0
          %2126 = vmatpush.msra.mxu0 %v1839
          %2127 = vmatpush.msra.mxu0 %v1837
          %2128 = vmatpush.msra.mxu0 %v1835
          %2129 = vmatpush.msra.mxu0 %v1833
          %2130 = vmatpush.msra.mxu0 %v1831
          %2131 = vmatpush.msra.mxu0 %v1829
          %2132 = vmatpush.msra.mxu0 %v1827
          %2133 = vmatpush.msra.mxu0 %v1825
          %2134 = vmatpush.msra.mxu0 %v1823
          %2135 = vmatpush.msra.mxu0 %v1821
          %2136 = vmatpush.msra.mxu0 %v1819
          %2137 = vmatpush.msra.mxu0 %v1817
          %2138 = vmatpush.msra.mxu0 %v1815
          %2139 = vmatpush.msra.mxu0 %v1813
          %2140 = vmatpush.msra.mxu0 %v1811
          %2141 = vmatpush.msra.mxu0 %v1809
          %2142 = vmatmul.f32.gmra.mxu0 %v1802
          %v2143 = vpop.f32.mrf.mxu0
          %v2144 = vadd.f32 %v2003, %v2143
          %2145 = vdwg.mxu0
          %2146 = vmatpush.msra.mxu0 %v1871
          %2147 = vmatpush.msra.mxu0 %v1869
          %2148 = vmatpush.msra.mxu0 %v1867
          %2149 = vmatpush.msra.mxu0 %v1865
          %2150 = vmatpush.msra.mxu0 %v1863
          %2151 = vmatpush.msra.mxu0 %v1861
          %2152 = vmatpush.msra.mxu0 %v1859
          %2153 = vmatpush.msra.mxu0 %v1857
          %2154 = vmatpush.msra.mxu0 %v1855
          %2155 = vmatpush.msra.mxu0 %v1853
          %2156 = vmatpush.msra.mxu0 %v1851
          %2157 = vmatpush.msra.mxu0 %v1849
          %2158 = vmatpush.msra.mxu0 %v1847
          %2159 = vmatpush.msra.mxu0 %v1845
          %2160 = vmatpush.msra.mxu0 %v1843
          %2161 = vmatpush.msra.mxu0 %v1841
          %2162 = vmatmul.f32.gmra.mxu0 %v1803
          %v2163 = vpop.f32.mrf.mxu0
          %v2164 = vadd.f32 %v2144, %v2163
          %2165 = vdwg.mxu0
          %2166 = vmatpush.msra.mxu0 %v1903
          %2167 = vmatpush.msra.mxu0 %v1901
          %2168 = vmatpush.msra.mxu0 %v1899
          %2169 = vmatpush.msra.mxu0 %v1897
          %2170 = vmatpush.msra.mxu0 %v1895
          %2171 = vmatpush.msra.mxu0 %v1893
          %2172 = vmatpush.msra.mxu0 %v1891
          %2173 = vmatpush.msra.mxu0 %v1889
          %2174 = vmatpush.msra.mxu0 %v1887
          %2175 = vmatpush.msra.mxu0 %v1885
          %2176 = vmatpush.msra.mxu0 %v1883
          %2177 = vmatpush.msra.mxu0 %v1881
          %2178 = vmatpush.msra.mxu0 %v1879
          %2179 = vmatpush.msra.mxu0 %v1877
          %2180 = vmatpush.msra.mxu0 %v1875
          %2181 = vmatpush.msra.mxu0 %v1873
          %2182 = vmatmul.f32.gmra.mxu0 %v1804
          %v2183 = vpop.f32.mrf.mxu0
          %v2184 = vadd.f32 %v2164, %v2183
          %2185 = vdwg.mxu0
          %2186 = vmatpush.msra.mxu0 %v1935
          %2187 = vmatpush.msra.mxu0 %v1933
          %2188 = vmatpush.msra.mxu0 %v1931
          %2189 = vmatpush.msra.mxu0 %v1929
          %2190 = vmatpush.msra.mxu0 %v1927
          %2191 = vmatpush.msra.mxu0 %v1925
          %2192 = vmatpush.msra.mxu0 %v1923
          %2193 = vmatpush.msra.mxu0 %v1921
          %2194 = vmatpush.msra.mxu0 %v1919
          %2195 = vmatpush.msra.mxu0 %v1917
          %2196 = vmatpush.msra.mxu0 %v1915
          %2197 = vmatpush.msra.mxu0 %v1913
          %2198 = vmatpush.msra.mxu0 %v1911
          %2199 = vmatpush.msra.mxu0 %v1909
          %2200 = vmatpush.msra.mxu0 %v1907
          %2201 = vmatpush.msra.mxu0 %v1905
          %2202 = vmatmul.f32.gmra.mxu0 %v1805
          %v2203 = vpop.f32.mrf.mxu0
          %v2204 = vadd.f32 %v2184, %v2203
          %2205 = vdwg.mxu0
          %2206 = vmatpush.msra.mxu0 %v1967
          %2207 = vmatpush.msra.mxu0 %v1965
          %2208 = vmatpush.msra.mxu0 %v1963
          %2209 = vmatpush.msra.mxu0 %v1961
          %2210 = vmatpush.msra.mxu0 %v1959
          %2211 = vmatpush.msra.mxu0 %v1957
          %2212 = vmatpush.msra.mxu0 %v1955
          %2213 = vmatpush.msra.mxu0 %v1953
          %2214 = vmatpush.msra.mxu0 %v1951
          %2215 = vmatpush.msra.mxu0 %v1949
          %2216 = vmatpush.msra.mxu0 %v1947
          %2217 = vmatpush.msra.mxu0 %v1945
          %2218 = vmatpush.msra.mxu0 %v1943
          %2219 = vmatpush.msra.mxu0 %v1941
          %2220 = vmatpush.msra.mxu0 %v1939
          %2221 = vmatpush.msra.mxu0 %v1937
          %2222 = vmatmul.f32.gmra.mxu0 %v1806
          %v2223 = vpop.f32.mrf.mxu0
          %v2224 = vadd.f32 %v2204, %v2223
          %2225 = vdwg.mxu0
          %2226 = vmatpush.msra.mxu0 %v1999
          %2227 = vmatpush.msra.mxu0 %v1997
          %2228 = vmatpush.msra.mxu0 %v1995
          %2229 = vmatpush.msra.mxu0 %v1993
          %2230 = vmatpush.msra.mxu0 %v1991
          %2231 = vmatpush.msra.mxu0 %v1989
          %2232 = vmatpush.msra.mxu0 %v1987
          %2233 = vmatpush.msra.mxu0 %v1985
          %2234 = vmatpush.msra.mxu0 %v1983
          %2235 = vmatpush.msra.mxu0 %v1981
          %2236 = vmatpush.msra.mxu0 %v1979
          %2237 = vmatpush.msra.mxu0 %v1977
          %2238 = vmatpush.msra.mxu0 %v1975
          %2239 = vmatpush.msra.mxu0 %v1973
          %2240 = vmatpush.msra.mxu0 %v1971
          %2241 = vmatpush.msra.mxu0 %v1969
          %2242 = vmatmul.f32.gmra.mxu0 %v1807
          %v2243 = vpop.f32.mrf.mxu0
          %v2244 = vadd.f32 %v2224, %v2243
          %2245 = vdwg.mxu0
          %v2246 = vld [vmem:[#allocation6] sm:$0xff]
          %v2247 = vld [vmem:[%s6] sm:$0xff]
          %v2248 = vld [vmem:[%s6 + $0x8] sm:$0xff]
          %v2249 = vld [vmem:[%s6 + $0x10] sm:$0xff]
          %v2250 = vld [vmem:[%s6 + $0x18] sm:$0xff]
          %v2251 = vld [vmem:[%s6 + $0x20] sm:$0xff]
          %v2252 = vld [vmem:[%s6 + $0x28] sm:$0xff]
          %v2253 = vld [vmem:[%s6 + $0x30] sm:$0xff]
          %v2254 = vld [vmem:[%s6 + $0x38] sm:$0xff]
          %v2255 = vld [vmem:[%s6 + $0x40] sm:$0xff]
          %v2256 = vld [vmem:[%s6 + $0x48] sm:$0xff]
          %v2257 = vld [vmem:[%s6 + $0x50] sm:$0xff]
          %v2258 = vld [vmem:[%s6 + $0x58] sm:$0xff]
          %v2259 = vld [vmem:[%s6 + $0x60] sm:$0xff]
          %v2260 = vld [vmem:[%s6 + $0x68] sm:$0xff]
          %v2261 = vld [vmem:[%s6 + $0x70] sm:$0xff]
          %v2262 = vld [vmem:[%s6 + $0x78] sm:$0xff]
          %v2263 = vld [vmem:[#allocation13] sm:$0x1]
          %v2265 = vperm.slane %v2263, 0
          %2267 = vmatpush.msra.mxu0 %v2262
          %2268 = vmatpush.msra.mxu0 %v2261
          %2269 = vmatpush.msra.mxu0 %v2260
          %2270 = vmatpush.msra.mxu0 %v2259
          %2271 = vmatpush.msra.mxu0 %v2258
          %2272 = vmatpush.msra.mxu0 %v2257
          %2273 = vmatpush.msra.mxu0 %v2256
          %2274 = vmatpush.msra.mxu0 %v2255
          %2275 = vmatpush.msra.mxu0 %v2254
          %2276 = vmatpush.msra.mxu0 %v2253
          %2277 = vmatpush.msra.mxu0 %v2252
          %2278 = vmatpush.msra.mxu0 %v2251
          %2279 = vmatpush.msra.mxu0 %v2250
          %2280 = vmatpush.msra.mxu0 %v2249
          %2281 = vmatpush.msra.mxu0 %v2248
          %2282 = vmatpush.msra.mxu0 %v2247
          %2283 = vmatmul.f32.gmra.mxu0 %v2246
          %v2284 = vpop.f32.mrf.mxu0
          %v2285 = vadd.f32 %v2265, %v2284
          %2286 = vdwg.mxu0
          %v2287 = vmax.f32 %v2285, 0.0
          %v2288 = vld [vmem:[#allocation15] sm:$0xff]
          %v2289 = vld [vmem:[#allocation15 + $0x8] sm:$0xff]
          %v2290 = vld [vmem:[#allocation15 + $0x10] sm:$0xff]
          %v2291 = vld [vmem:[#allocation15 + $0x18] sm:$0xff]
          %v2292 = vld [vmem:[#allocation15 + $0x20] sm:$0xff]
          %v2293 = vld [vmem:[#allocation15 + $0x28] sm:$0xff]
          %v2294 = vld [vmem:[#allocation15 + $0x30] sm:$0xff]
          %v2295 = vld [vmem:[#allocation15 + $0x38] sm:$0xff]
          %v2296 = vld [vmem:[#allocation16] sm:$0x1]
          %v2298 = vperm.slane %v2296, 0
          %vm2300 = vcmask 523264
          %v2302 = vsel %vm2300, %v2287, 0
          %2304 = vmatpush.msra.mxu0 0.0
          %2305 = vmatpush.msra.mxu0 0.0
          %2306 = vmatpush.msra.mxu0 0.0
          %2307 = vmatpush.msra.mxu0 0.0
          %2308 = vmatpush.msra.mxu0 0.0
          %2309 = vmatpush.msra.mxu0 0.0
          %2310 = vmatpush.msra.mxu0 0.0
          %2311 = vmatpush.msra.mxu0 0.0
          %2312 = vmatpush.msra.mxu0 %v2295
          %2313 = vmatpush.msra.mxu0 %v2294
          %2314 = vmatpush.msra.mxu0 %v2293
          %2315 = vmatpush.msra.mxu0 %v2292
          %2316 = vmatpush.msra.mxu0 %v2291
          %2317 = vmatpush.msra.mxu0 %v2290
          %2318 = vmatpush.msra.mxu0 %v2289
          %2319 = vmatpush.msra.mxu0 %v2288
          %2320 = vmatmul.f32.gmra.mxu0 %v2302
          %v2321 = vpop.f32.mrf.mxu0
          %v2322 = vadd.f32 %v2298, %v2321
          %2323 = vdwg.mxu0
          %v2324 = vmax.f32 %v2322, 0.0
          %v2325 = vld [vmem:[#allocation18] sm:$0xff]
          %v2326 = vld [vmem:[#allocation18 + $0x8] sm:$0xff]
          %v2327 = vld [vmem:[#allocation18 + $0x10] sm:$0xff]
          %v2328 = vld [vmem:[#allocation18 + $0x18] sm:$0xff]
          %v2329 = vld [vmem:[#allocation18 + $0x20] sm:$0xff]
          %v2330 = vld [vmem:[#allocation18 + $0x28] sm:$0xff]
          %v2331 = vld [vmem:[#allocation18 + $0x30] sm:$0xff]
          %v2332 = vld [vmem:[#allocation18 + $0x38] sm:$0xff]
          %v2333 = vld [vmem:[#allocation19] sm:$0x1]
          %v2335 = vperm.slane %v2333, 0
          %v2338 = vsel %vm2300, %v2324, 0
          %2340 = vmatpush.msra.mxu0 0.0
          %2341 = vmatpush.msra.mxu0 0.0
          %2342 = vmatpush.msra.mxu0 0.0
          %2343 = vmatpush.msra.mxu0 0.0
          %2344 = vmatpush.msra.mxu0 0.0
          %2345 = vmatpush.msra.mxu0 0.0
          %2346 = vmatpush.msra.mxu0 0.0
          %2347 = vmatpush.msra.mxu0 0.0
          %2348 = vmatpush.msra.mxu0 %v2332
          %2349 = vmatpush.msra.mxu0 %v2331
          %2350 = vmatpush.msra.mxu0 %v2330
          %2351 = vmatpush.msra.mxu0 %v2329
          %2352 = vmatpush.msra.mxu0 %v2328
          %2353 = vmatpush.msra.mxu0 %v2327
          %2354 = vmatpush.msra.mxu0 %v2326
          %2355 = vmatpush.msra.mxu0 %v2325
          %2356 = vmatmul.f32.gmra.mxu0 %v2338
          %v2357 = vpop.f32.mrf.mxu0
          %v2358 = vadd.f32 %v2335, %v2357
          %2359 = vdwg.mxu0
          %v2360 = vmax.f32 %v2358, 0.0
          %v2361 = vld [vmem:[#allocation21] sm:$0xff]
          %v2362 = vld [vmem:[#allocation21 + $0x8] sm:$0xff]
          %v2363 = vld [vmem:[#allocation21 + $0x10] sm:$0xff]
          %v2364 = vld [vmem:[#allocation21 + $0x18] sm:$0xff]
          %v2365 = vld [vmem:[#allocation21 + $0x20] sm:$0xff]
          %v2366 = vld [vmem:[#allocation21 + $0x28] sm:$0xff]
          %v2367 = vld [vmem:[#allocation21 + $0x30] sm:$0xff]
          %v2368 = vld [vmem:[#allocation21 + $0x38] sm:$0xff]
          %v2369 = vld [vmem:[#allocation21 + $0x40] sm:$0xff]
          %v2370 = vld [vmem:[#allocation21 + $0x48] sm:$0xff]
          %v2371 = vld [vmem:[#allocation21 + $0x50] sm:$0xff]
          %v2372 = vld [vmem:[#allocation21 + $0x58] sm:$0xff]
          %v2373 = vld [vmem:[#allocation21 + $0x60] sm:$0xff]
          %v2374 = vld [vmem:[#allocation21 + $0x68] sm:$0xff]
          %v2375 = vld [vmem:[#allocation21 + $0x70] sm:$0xff]
          %v2376 = vld [vmem:[#allocation21 + $0x78] sm:$0xff]
          %v2377 = vld [vmem:[#allocation22] sm:$0x1]
          %v2379 = vperm.slane %v2377, 0
          %2381 = vmatpush.msra.mxu0 %v2376
          %2382 = vmatpush.msra.mxu0 %v2375
          %2383 = vmatpush.msra.mxu0 %v2374
          %2384 = vmatpush.msra.mxu0 %v2373
          %2385 = vmatpush.msra.mxu0 %v2372
          %2386 = vmatpush.msra.mxu0 %v2371
          %2387 = vmatpush.msra.mxu0 %v2370
          %2388 = vmatpush.msra.mxu0 %v2369
          %2389 = vmatpush.msra.mxu0 %v2368
          %2390 = vmatpush.msra.mxu0 %v2367
          %2391 = vmatpush.msra.mxu0 %v2366
          %2392 = vmatpush.msra.mxu0 %v2365
          %2393 = vmatpush.msra.mxu0 %v2364
          %2394 = vmatpush.msra.mxu0 %v2363
          %2395 = vmatpush.msra.mxu0 %v2362
          %2396 = vmatpush.msra.mxu0 %v2361
          %2397 = vmatmul.f32.gmra.mxu0 %v2360
          %v2398 = vpop.f32.mrf.mxu0
          %v2399 = vadd.f32 %v2379, %v2398
          %2400 = vdwg.mxu0
          %v2401 = vld [vmem:[#allocation24] sm:$0xff]
          %v2402 = vld [vmem:[#allocation24 + $0x8] sm:$0xff]
          %v2403 = vld [vmem:[#allocation24 + $0x10] sm:$0xff]
          %v2404 = vld [vmem:[#allocation24 + $0x18] sm:$0xff]
          %v2405 = vld [vmem:[#allocation24 + $0x20] sm:$0xff]
          %v2406 = vld [vmem:[#allocation24 + $0x28] sm:$0xff]
          %v2407 = vld [vmem:[#allocation24 + $0x30] sm:$0xff]
          %v2408 = vld [vmem:[#allocation24 + $0x38] sm:$0xff]
          %v2409 = vld [vmem:[#allocation24 + $0x40] sm:$0xff]
          %v2410 = vld [vmem:[#allocation24 + $0x48] sm:$0xff]
          %v2411 = vld [vmem:[#allocation24 + $0x50] sm:$0xff]
          %v2412 = vld [vmem:[#allocation24 + $0x58] sm:$0xff]
          %v2413 = vld [vmem:[#allocation24 + $0x60] sm:$0xff]
          %v2414 = vld [vmem:[#allocation24 + $0x68] sm:$0xff]
          %v2415 = vld [vmem:[#allocation24 + $0x70] sm:$0xff]
          %v2416 = vld [vmem:[#allocation24 + $0x78] sm:$0xff]
          %v2417 = vld [vmem:[#allocation24 + $0x80] sm:$0xff]
          %v2418 = vld [vmem:[#allocation24 + $0x88] sm:$0xff]
          %v2419 = vld [vmem:[#allocation24 + $0x90] sm:$0xff]
          %v2420 = vld [vmem:[#allocation24 + $0x98] sm:$0xff]
          %v2421 = vld [vmem:[#allocation24 + $0xa0] sm:$0xff]
          %v2422 = vld [vmem:[#allocation24 + $0xa8] sm:$0xff]
          %v2423 = vld [vmem:[#allocation24 + $0xb0] sm:$0xff]
          %v2424 = vld [vmem:[#allocation24 + $0xb8] sm:$0xff]
          %v2425 = vld [vmem:[#allocation24 + $0xc0] sm:$0xff]
          %v2426 = vld [vmem:[#allocation24 + $0xc8] sm:$0xff]
          %v2427 = vld [vmem:[#allocation24 + $0xd0] sm:$0xff]
          %v2428 = vld [vmem:[#allocation24 + $0xd8] sm:$0xff]
          %v2429 = vld [vmem:[#allocation24 + $0xe0] sm:$0xff]
          %v2430 = vld [vmem:[#allocation24 + $0xe8] sm:$0xff]
          %v2431 = vld [vmem:[#allocation24 + $0xf0] sm:$0xff]
          %v2432 = vld [vmem:[#allocation24 + $0xf8] sm:$0xff]
          %v2433 = vld [vmem:[#allocation24 + $0x100] sm:$0xff]
          %v2434 = vld [vmem:[#allocation24 + $0x108] sm:$0xff]
          %v2435 = vld [vmem:[#allocation24 + $0x110] sm:$0xff]
          %v2436 = vld [vmem:[#allocation24 + $0x118] sm:$0xff]
          %v2437 = vld [vmem:[#allocation24 + $0x120] sm:$0xff]
          %v2438 = vld [vmem:[#allocation24 + $0x128] sm:$0xff]
          %v2439 = vld [vmem:[#allocation24 + $0x130] sm:$0xff]
          %v2440 = vld [vmem:[#allocation24 + $0x138] sm:$0xff]
          %v2441 = vld [vmem:[#allocation24 + $0x140] sm:$0xff]
          %v2442 = vld [vmem:[#allocation24 + $0x148] sm:$0xff]
          %v2443 = vld [vmem:[#allocation24 + $0x150] sm:$0xff]
          %v2444 = vld [vmem:[#allocation24 + $0x158] sm:$0xff]
          %v2445 = vld [vmem:[#allocation24 + $0x160] sm:$0xff]
          %v2446 = vld [vmem:[#allocation24 + $0x168] sm:$0xff]
          %v2447 = vld [vmem:[#allocation24 + $0x170] sm:$0xff]
          %v2448 = vld [vmem:[#allocation24 + $0x178] sm:$0xff]
          %v2449 = vld [vmem:[#allocation24 + $0x180] sm:$0xff]
          %v2450 = vld [vmem:[#allocation24 + $0x188] sm:$0xff]
          %v2451 = vld [vmem:[#allocation24 + $0x190] sm:$0xff]
          %v2452 = vld [vmem:[#allocation24 + $0x198] sm:$0xff]
          %v2453 = vld [vmem:[#allocation24 + $0x1a0] sm:$0xff]
          %v2454 = vld [vmem:[#allocation24 + $0x1a8] sm:$0xff]
          %v2455 = vld [vmem:[#allocation24 + $0x1b0] sm:$0xff]
          %v2456 = vld [vmem:[#allocation24 + $0x1b8] sm:$0xff]
          %v2457 = vld [vmem:[#allocation24 + $0x1c0] sm:$0xff]
          %v2458 = vld [vmem:[#allocation24 + $0x1c8] sm:$0xff]
          %v2459 = vld [vmem:[#allocation24 + $0x1d0] sm:$0xff]
          %v2460 = vld [vmem:[#allocation24 + $0x1d8] sm:$0xff]
          %v2461 = vld [vmem:[#allocation24 + $0x1e0] sm:$0xff]
          %v2462 = vld [vmem:[#allocation24 + $0x1e8] sm:$0xff]
          %v2463 = vld [vmem:[#allocation24 + $0x1f0] sm:$0xff]
          %v2464 = vld [vmem:[#allocation24 + $0x1f8] sm:$0xff]
          %v2465 = vld [vmem:[#allocation25] sm:$0xff]
          %v2466 = vld [vmem:[#allocation25 + $0x8] sm:$0xff]
          %v2467 = vld [vmem:[#allocation25 + $0x10] sm:$0xff]
          %v2468 = vld [vmem:[#allocation25 + $0x18] sm:$0xff]
          %v2469 = vld [vmem:[#allocation25 + $0x20] sm:$0xff]
          %v2470 = vld [vmem:[#allocation25 + $0x28] sm:$0xff]
          %v2471 = vld [vmem:[#allocation25 + $0x30] sm:$0xff]
          %v2472 = vld [vmem:[#allocation25 + $0x38] sm:$0xff]
          %v2473 = vld [vmem:[#allocation25 + $0x40] sm:$0xff]
          %v2474 = vld [vmem:[#allocation25 + $0x48] sm:$0xff]
          %v2475 = vld [vmem:[#allocation25 + $0x50] sm:$0xff]
          %v2476 = vld [vmem:[#allocation25 + $0x58] sm:$0xff]
          %v2477 = vld [vmem:[#allocation25 + $0x60] sm:$0xff]
          %v2478 = vld [vmem:[#allocation25 + $0x68] sm:$0xff]
          %v2479 = vld [vmem:[#allocation25 + $0x70] sm:$0xff]
          %v2480 = vld [vmem:[#allocation25 + $0x78] sm:$0xff]
          %v2481 = vld [vmem:[#allocation25 + $0x80] sm:$0xff]
          %v2482 = vld [vmem:[#allocation25 + $0x88] sm:$0xff]
          %v2483 = vld [vmem:[#allocation25 + $0x90] sm:$0xff]
          %v2484 = vld [vmem:[#allocation25 + $0x98] sm:$0xff]
          %v2485 = vld [vmem:[#allocation25 + $0xa0] sm:$0xff]
          %v2486 = vld [vmem:[#allocation25 + $0xa8] sm:$0xff]
          %v2487 = vld [vmem:[#allocation25 + $0xb0] sm:$0xff]
          %v2488 = vld [vmem:[#allocation25 + $0xb8] sm:$0xff]
          %v2489 = vld [vmem:[#allocation25 + $0xc0] sm:$0xff]
          %v2490 = vld [vmem:[#allocation25 + $0xc8] sm:$0xff]
          %v2491 = vld [vmem:[#allocation25 + $0xd0] sm:$0xff]
          %v2492 = vld [vmem:[#allocation25 + $0xd8] sm:$0xff]
          %v2493 = vld [vmem:[#allocation25 + $0xe0] sm:$0xff]
          %v2494 = vld [vmem:[#allocation25 + $0xe8] sm:$0xff]
          %v2495 = vld [vmem:[#allocation25 + $0xf0] sm:$0xff]
          %v2496 = vld [vmem:[#allocation25 + $0xf8] sm:$0xff]
          %2497 = vmatpush.msra.mxu0 %v2495
          %2498 = vmatpush.msra.mxu0 %v2493
          %2499 = vmatpush.msra.mxu0 %v2491
          %2500 = vmatpush.msra.mxu0 %v2489
          %2501 = vmatpush.msra.mxu0 %v2487
          %2502 = vmatpush.msra.mxu0 %v2485
          %2503 = vmatpush.msra.mxu0 %v2483
          %2504 = vmatpush.msra.mxu0 %v2481
          %2505 = vmatpush.msra.mxu0 %v2479
          %2506 = vmatpush.msra.mxu0 %v2477
          %2507 = vmatpush.msra.mxu0 %v2475
          %2508 = vmatpush.msra.mxu0 %v2473
          %2509 = vmatpush.msra.mxu0 %v2471
          %2510 = vmatpush.msra.mxu0 %v2469
          %2511 = vmatpush.msra.mxu0 %v2467
          %2512 = vmatpush.msra.mxu0 %v2465
          %2513 = vmatmul.f32.gmra.mxu0 %v2399
          %v2514 = vpop.f32.mrf.mxu0
          %v2515 = vadd.f32 0.0, %v2514
          %2516 = vdwg.mxu0
          %2517 = vmatpush.msra.mxu0 %v2496
          %2518 = vmatpush.msra.mxu0 %v2494
          %2519 = vmatpush.msra.mxu0 %v2492
          %2520 = vmatpush.msra.mxu0 %v2490
          %2521 = vmatpush.msra.mxu0 %v2488
          %2522 = vmatpush.msra.mxu0 %v2486
          %2523 = vmatpush.msra.mxu0 %v2484
          %2524 = vmatpush.msra.mxu0 %v2482
          %2525 = vmatpush.msra.mxu0 %v2480
          %2526 = vmatpush.msra.mxu0 %v2478
          %2527 = vmatpush.msra.mxu0 %v2476
          %2528 = vmatpush.msra.mxu0 %v2474
          %2529 = vmatpush.msra.mxu0 %v2472
          %2530 = vmatpush.msra.mxu0 %v2470
          %2531 = vmatpush.msra.mxu0 %v2468
          %2532 = vmatpush.msra.mxu0 %v2466
          %2533 = vmatmul.f32.gmra.mxu0 %v2399
          %v2534 = vpop.f32.mrf.mxu0
          %v2535 = vadd.f32 0.0, %v2534
          %2536 = vdwg.mxu0
          %2537 = vmatpush.msra.mxu0 %v2431
          %2538 = vmatpush.msra.mxu0 %v2429
          %2539 = vmatpush.msra.mxu0 %v2427
          %2540 = vmatpush.msra.mxu0 %v2425
          %2541 = vmatpush.msra.mxu0 %v2423
          %2542 = vmatpush.msra.mxu0 %v2421
          %2543 = vmatpush.msra.mxu0 %v2419
          %2544 = vmatpush.msra.mxu0 %v2417
          %2545 = vmatpush.msra.mxu0 %v2415
          %2546 = vmatpush.msra.mxu0 %v2413
          %2547 = vmatpush.msra.mxu0 %v2411
          %2548 = vmatpush.msra.mxu0 %v2409
          %2549 = vmatpush.msra.mxu0 %v2407
          %2550 = vmatpush.msra.mxu0 %v2405
          %2551 = vmatpush.msra.mxu0 %v2403
          %2552 = vmatpush.msra.mxu0 %v2401
          %2553 = vmatmul.f32.gmra.mxu0 %v2124
          %v2554 = vpop.f32.mrf.mxu0
          %v2555 = vadd.f32 %v2515, %v2554
          %2556 = vdwg.mxu0
          %2557 = vmatpush.msra.mxu0 %v2463
          %2558 = vmatpush.msra.mxu0 %v2461
          %2559 = vmatpush.msra.mxu0 %v2459
          %2560 = vmatpush.msra.mxu0 %v2457
          %2561 = vmatpush.msra.mxu0 %v2455
          %2562 = vmatpush.msra.mxu0 %v2453
          %2563 = vmatpush.msra.mxu0 %v2451
          %2564 = vmatpush.msra.mxu0 %v2449
          %2565 = vmatpush.msra.mxu0 %v2447
          %2566 = vmatpush.msra.mxu0 %v2445
          %2567 = vmatpush.msra.mxu0 %v2443
          %2568 = vmatpush.msra.mxu0 %v2441
          %2569 = vmatpush.msra.mxu0 %v2439
          %2570 = vmatpush.msra.mxu0 %v2437
          %2571 = vmatpush.msra.mxu0 %v2435
          %2572 = vmatpush.msra.mxu0 %v2433
          %2573 = vmatmul.f32.gmra.mxu0 %v2244
          %v2574 = vpop.f32.mrf.mxu0
          %v2575 = vadd.f32 %v2555, %v2574
          %2576 = vdwg.mxu0
          %2577 = vmatpush.msra.mxu0 %v2432
          %2578 = vmatpush.msra.mxu0 %v2430
          %2579 = vmatpush.msra.mxu0 %v2428
          %2580 = vmatpush.msra.mxu0 %v2426
          %2581 = vmatpush.msra.mxu0 %v2424
          %2582 = vmatpush.msra.mxu0 %v2422
          %2583 = vmatpush.msra.mxu0 %v2420
          %2584 = vmatpush.msra.mxu0 %v2418
          %2585 = vmatpush.msra.mxu0 %v2416
          %2586 = vmatpush.msra.mxu0 %v2414
          %2587 = vmatpush.msra.mxu0 %v2412
          %2588 = vmatpush.msra.mxu0 %v2410
          %2589 = vmatpush.msra.mxu0 %v2408
          %2590 = vmatpush.msra.mxu0 %v2406
          %2591 = vmatpush.msra.mxu0 %v2404
          %2592 = vmatpush.msra.mxu0 %v2402
          %2593 = vmatmul.f32.gmra.mxu0 %v2124
          %v2594 = vpop.f32.mrf.mxu0
          %v2595 = vadd.f32 %v2535, %v2594
          %2596 = vdwg.mxu0
          %2597 = vmatpush.msra.mxu0 %v2464
          %2598 = vmatpush.msra.mxu0 %v2462
          %2599 = vmatpush.msra.mxu0 %v2460
          %2600 = vmatpush.msra.mxu0 %v2458
          %2601 = vmatpush.msra.mxu0 %v2456
          %2602 = vmatpush.msra.mxu0 %v2454
          %2603 = vmatpush.msra.mxu0 %v2452
          %2604 = vmatpush.msra.mxu0 %v2450
          %2605 = vmatpush.msra.mxu0 %v2448
          %2606 = vmatpush.msra.mxu0 %v2446
          %2607 = vmatpush.msra.mxu0 %v2444
          %2608 = vmatpush.msra.mxu0 %v2442
          %2609 = vmatpush.msra.mxu0 %v2440
          %2610 = vmatpush.msra.mxu0 %v2438
          %2611 = vmatpush.msra.mxu0 %v2436
          %2612 = vmatpush.msra.mxu0 %v2434
          %2613 = vmatmul.f32.gmra.mxu0 %v2244
          %v2614 = vpop.f32.mrf.mxu0
          %v2615 = vadd.f32 %v2595, %v2614
          %2616 = vdwg.mxu0
          %v2617 = vld [vmem:[#allocation27] sm:$0x3]
          %v2619 = vperm.slane %v2617, 0
          %v2620 = vperm.slane %v2617, 1
          %v2623 = vadd.f32 %v2575, %v2619
          %v2624 = vadd.f32 %v2615, %v2620
          %v2625 = vmax.f32 %v2623, 0.0
          %v2626 = vmax.f32 %v2624, 0.0
          %v2627 = vld [vmem:[#allocation28] sm:$0xff]
          %v2628 = vld [vmem:[#allocation28 + $0x8] sm:$0xff]
          %v2629 = vld [vmem:[#allocation28 + $0x10] sm:$0xff]
          %v2630 = vld [vmem:[#allocation28 + $0x18] sm:$0xff]
          %v2631 = vld [vmem:[#allocation28 + $0x20] sm:$0xff]
          %v2632 = vld [vmem:[#allocation28 + $0x28] sm:$0xff]
          %v2633 = vld [vmem:[#allocation28 + $0x30] sm:$0xff]
          %v2634 = vld [vmem:[#allocation28 + $0x38] sm:$0xff]
          %v2635 = vld [vmem:[#allocation28 + $0x40] sm:$0xff]
          %v2636 = vld [vmem:[#allocation28 + $0x48] sm:$0xff]
          %v2637 = vld [vmem:[#allocation28 + $0x50] sm:$0xff]
          %v2638 = vld [vmem:[#allocation28 + $0x58] sm:$0xff]
          %v2639 = vld [vmem:[#allocation28 + $0x60] sm:$0xff]
          %v2640 = vld [vmem:[#allocation28 + $0x68] sm:$0xff]
          %v2641 = vld [vmem:[#allocation28 + $0x70] sm:$0xff]
          %v2642 = vld [vmem:[#allocation28 + $0x78] sm:$0xff]
          %v2643 = vld [vmem:[#allocation28 + $0x80] sm:$0xff]
          %v2644 = vld [vmem:[#allocation28 + $0x88] sm:$0xff]
          %v2645 = vld [vmem:[#allocation28 + $0x90] sm:$0xff]
          %v2646 = vld [vmem:[#allocation28 + $0x98] sm:$0xff]
          %v2647 = vld [vmem:[#allocation28 + $0xa0] sm:$0xff]
          %v2648 = vld [vmem:[#allocation28 + $0xa8] sm:$0xff]
          %v2649 = vld [vmem:[#allocation28 + $0xb0] sm:$0xff]
          %v2650 = vld [vmem:[#allocation28 + $0xb8] sm:$0xff]
          %v2651 = vld [vmem:[#allocation28 + $0xc0] sm:$0xff]
          %v2652 = vld [vmem:[#allocation28 + $0xc8] sm:$0xff]
          %v2653 = vld [vmem:[#allocation28 + $0xd0] sm:$0xff]
          %v2654 = vld [vmem:[#allocation28 + $0xd8] sm:$0xff]
          %v2655 = vld [vmem:[#allocation28 + $0xe0] sm:$0xff]
          %v2656 = vld [vmem:[#allocation28 + $0xe8] sm:$0xff]
          %v2657 = vld [vmem:[#allocation28 + $0xf0] sm:$0xff]
          %v2658 = vld [vmem:[#allocation28 + $0xf8] sm:$0xff]
          %v2659 = vld [vmem:[#allocation28 + $0x100] sm:$0xff]
          %v2660 = vld [vmem:[#allocation28 + $0x108] sm:$0xff]
          %v2661 = vld [vmem:[#allocation28 + $0x110] sm:$0xff]
          %v2662 = vld [vmem:[#allocation28 + $0x118] sm:$0xff]
          %v2663 = vld [vmem:[#allocation28 + $0x120] sm:$0xff]
          %v2664 = vld [vmem:[#allocation28 + $0x128] sm:$0xff]
          %v2665 = vld [vmem:[#allocation28 + $0x130] sm:$0xff]
          %v2666 = vld [vmem:[#allocation28 + $0x138] sm:$0xff]
          %v2667 = vld [vmem:[#allocation28 + $0x140] sm:$0xff]
          %v2668 = vld [vmem:[#allocation28 + $0x148] sm:$0xff]
          %v2669 = vld [vmem:[#allocation28 + $0x150] sm:$0xff]
          %v2670 = vld [vmem:[#allocation28 + $0x158] sm:$0xff]
          %v2671 = vld [vmem:[#allocation28 + $0x160] sm:$0xff]
          %v2672 = vld [vmem:[#allocation28 + $0x168] sm:$0xff]
          %v2673 = vld [vmem:[#allocation28 + $0x170] sm:$0xff]
          %v2674 = vld [vmem:[#allocation28 + $0x178] sm:$0xff]
          %v2675 = vld [vmem:[#allocation28 + $0x180] sm:$0xff]
          %v2676 = vld [vmem:[#allocation28 + $0x188] sm:$0xff]
          %v2677 = vld [vmem:[#allocation28 + $0x190] sm:$0xff]
          %v2678 = vld [vmem:[#allocation28 + $0x198] sm:$0xff]
          %v2679 = vld [vmem:[#allocation28 + $0x1a0] sm:$0xff]
          %v2680 = vld [vmem:[#allocation28 + $0x1a8] sm:$0xff]
          %v2681 = vld [vmem:[#allocation28 + $0x1b0] sm:$0xff]
          %v2682 = vld [vmem:[#allocation28 + $0x1b8] sm:$0xff]
          %v2683 = vld [vmem:[#allocation28 + $0x1c0] sm:$0xff]
          %v2684 = vld [vmem:[#allocation28 + $0x1c8] sm:$0xff]
          %v2685 = vld [vmem:[#allocation28 + $0x1d0] sm:$0xff]
          %v2686 = vld [vmem:[#allocation28 + $0x1d8] sm:$0xff]
          %v2687 = vld [vmem:[#allocation28 + $0x1e0] sm:$0xff]
          %v2688 = vld [vmem:[#allocation28 + $0x1e8] sm:$0xff]
          %v2689 = vld [vmem:[#allocation28 + $0x1f0] sm:$0xff]
          %v2690 = vld [vmem:[#allocation28 + $0x1f8] sm:$0xff]
          %v2691 = vld [vmem:[#allocation30] sm:$0x3]
          %v2693 = vperm.slane %v2691, 0
          %v2694 = vperm.slane %v2691, 1
          %2697 = vmatpush.msra.mxu0 %v2657
          %2698 = vmatpush.msra.mxu0 %v2655
          %2699 = vmatpush.msra.mxu0 %v2653
          %2700 = vmatpush.msra.mxu0 %v2651
          %2701 = vmatpush.msra.mxu0 %v2649
          %2702 = vmatpush.msra.mxu0 %v2647
          %2703 = vmatpush.msra.mxu0 %v2645
          %2704 = vmatpush.msra.mxu0 %v2643
          %2705 = vmatpush.msra.mxu0 %v2641
          %2706 = vmatpush.msra.mxu0 %v2639
          %2707 = vmatpush.msra.mxu0 %v2637
          %2708 = vmatpush.msra.mxu0 %v2635
          %2709 = vmatpush.msra.mxu0 %v2633
          %2710 = vmatpush.msra.mxu0 %v2631
          %2711 = vmatpush.msra.mxu0 %v2629
          %2712 = vmatpush.msra.mxu0 %v2627
          %2713 = vmatmul.f32.gmra.mxu0 %v2625
          %v2714 = vpop.f32.mrf.mxu0
          %v2715 = vadd.f32 %v2693, %v2714
          %2716 = vdwg.mxu0
          %2717 = vmatpush.msra.mxu0 %v2689
          %2718 = vmatpush.msra.mxu0 %v2687
          %2719 = vmatpush.msra.mxu0 %v2685
          %2720 = vmatpush.msra.mxu0 %v2683
          %2721 = vmatpush.msra.mxu0 %v2681
          %2722 = vmatpush.msra.mxu0 %v2679
          %2723 = vmatpush.msra.mxu0 %v2677
          %2724 = vmatpush.msra.mxu0 %v2675
          %2725 = vmatpush.msra.mxu0 %v2673
          %2726 = vmatpush.msra.mxu0 %v2671
          %2727 = vmatpush.msra.mxu0 %v2669
          %2728 = vmatpush.msra.mxu0 %v2667
          %2729 = vmatpush.msra.mxu0 %v2665
          %2730 = vmatpush.msra.mxu0 %v2663
          %2731 = vmatpush.msra.mxu0 %v2661
          %2732 = vmatpush.msra.mxu0 %v2659
          %2733 = vmatmul.f32.gmra.mxu0 %v2626
          %v2734 = vpop.f32.mrf.mxu0
          %v2735 = vadd.f32 %v2715, %v2734
          %2736 = vdwg.mxu0
          %2737 = vmatpush.msra.mxu0 %v2658
          %2738 = vmatpush.msra.mxu0 %v2656
          %2739 = vmatpush.msra.mxu0 %v2654
          %2740 = vmatpush.msra.mxu0 %v2652
          %2741 = vmatpush.msra.mxu0 %v2650
          %2742 = vmatpush.msra.mxu0 %v2648
          %2743 = vmatpush.msra.mxu0 %v2646
          %2744 = vmatpush.msra.mxu0 %v2644
          %2745 = vmatpush.msra.mxu0 %v2642
          %2746 = vmatpush.msra.mxu0 %v2640
          %2747 = vmatpush.msra.mxu0 %v2638
          %2748 = vmatpush.msra.mxu0 %v2636
          %2749 = vmatpush.msra.mxu0 %v2634
          %2750 = vmatpush.msra.mxu0 %v2632
          %2751 = vmatpush.msra.mxu0 %v2630
          %2752 = vmatpush.msra.mxu0 %v2628
          %2753 = vmatmul.f32.gmra.mxu0 %v2625
          %v2754 = vpop.f32.mrf.mxu0
          %v2755 = vadd.f32 %v2694, %v2754
          %2756 = vdwg.mxu0
          %2757 = vmatpush.msra.mxu0 %v2690
          %2758 = vmatpush.msra.mxu0 %v2688
          %2759 = vmatpush.msra.mxu0 %v2686
          %2760 = vmatpush.msra.mxu0 %v2684
          %2761 = vmatpush.msra.mxu0 %v2682
          %2762 = vmatpush.msra.mxu0 %v2680
          %2763 = vmatpush.msra.mxu0 %v2678
          %2764 = vmatpush.msra.mxu0 %v2676
          %2765 = vmatpush.msra.mxu0 %v2674
          %2766 = vmatpush.msra.mxu0 %v2672
          %2767 = vmatpush.msra.mxu0 %v2670
          %2768 = vmatpush.msra.mxu0 %v2668
          %2769 = vmatpush.msra.mxu0 %v2666
          %2770 = vmatpush.msra.mxu0 %v2664
          %2771 = vmatpush.msra.mxu0 %v2662
          %2772 = vmatpush.msra.mxu0 %v2660
          %2773 = vmatmul.f32.gmra.mxu0 %v2626
          %v2774 = vpop.f32.mrf.mxu0
          %v2775 = vadd.f32 %v2755, %v2774
          %2776 = vdwg.mxu0
          %v2777 = vmax.f32 %v2735, 0.0
          %v2778 = vmax.f32 %v2775, 0.0
          %v2779 = vld [vmem:[#allocation31] sm:$0xff]
          %v2780 = vld [vmem:[#allocation31 + $0x8] sm:$0xff]
          %v2781 = vld [vmem:[#allocation31 + $0x10] sm:$0xff]
          %v2782 = vld [vmem:[#allocation31 + $0x18] sm:$0xff]
          %v2783 = vld [vmem:[#allocation31 + $0x20] sm:$0xff]
          %v2784 = vld [vmem:[#allocation31 + $0x28] sm:$0xff]
          %v2785 = vld [vmem:[#allocation31 + $0x30] sm:$0xff]
          %v2786 = vld [vmem:[#allocation31 + $0x38] sm:$0xff]
          %v2787 = vld [vmem:[#allocation31 + $0x40] sm:$0xff]
          %v2788 = vld [vmem:[#allocation31 + $0x48] sm:$0xff]
          %v2789 = vld [vmem:[#allocation31 + $0x50] sm:$0xff]
          %v2790 = vld [vmem:[#allocation31 + $0x58] sm:$0xff]
          %v2791 = vld [vmem:[#allocation31 + $0x60] sm:$0xff]
          %v2792 = vld [vmem:[#allocation31 + $0x68] sm:$0xff]
          %v2793 = vld [vmem:[#allocation31 + $0x70] sm:$0xff]
          %v2794 = vld [vmem:[#allocation31 + $0x78] sm:$0xff]
          %v2795 = vld [vmem:[#allocation31 + $0x80] sm:$0xff]
          %v2796 = vld [vmem:[#allocation31 + $0x88] sm:$0xff]
          %v2797 = vld [vmem:[#allocation31 + $0x90] sm:$0xff]
          %v2798 = vld [vmem:[#allocation31 + $0x98] sm:$0xff]
          %v2799 = vld [vmem:[#allocation31 + $0xa0] sm:$0xff]
          %v2800 = vld [vmem:[#allocation31 + $0xa8] sm:$0xff]
          %v2801 = vld [vmem:[#allocation31 + $0xb0] sm:$0xff]
          %v2802 = vld [vmem:[#allocation31 + $0xb8] sm:$0xff]
          %v2803 = vld [vmem:[#allocation31 + $0xc0] sm:$0xff]
          %v2804 = vld [vmem:[#allocation31 + $0xc8] sm:$0xff]
          %v2805 = vld [vmem:[#allocation31 + $0xd0] sm:$0xff]
          %v2806 = vld [vmem:[#allocation31 + $0xd8] sm:$0xff]
          %v2807 = vld [vmem:[#allocation31 + $0xe0] sm:$0xff]
          %v2808 = vld [vmem:[#allocation31 + $0xe8] sm:$0xff]
          %v2809 = vld [vmem:[#allocation31 + $0xf0] sm:$0xff]
          %v2810 = vld [vmem:[#allocation31 + $0xf8] sm:$0xff]
          %v2811 = vld [vmem:[#allocation33] sm:$0x1]
          %v2813 = vperm.slane %v2811, 0
          %2815 = vmatpush.msra.mxu0 %v2794
          %2816 = vmatpush.msra.mxu0 %v2793
          %2817 = vmatpush.msra.mxu0 %v2792
          %2818 = vmatpush.msra.mxu0 %v2791
          %2819 = vmatpush.msra.mxu0 %v2790
          %2820 = vmatpush.msra.mxu0 %v2789
          %2821 = vmatpush.msra.mxu0 %v2788
          %2822 = vmatpush.msra.mxu0 %v2787
          %2823 = vmatpush.msra.mxu0 %v2786
          %2824 = vmatpush.msra.mxu0 %v2785
          %2825 = vmatpush.msra.mxu0 %v2784
          %2826 = vmatpush.msra.mxu0 %v2783
          %2827 = vmatpush.msra.mxu0 %v2782
          %2828 = vmatpush.msra.mxu0 %v2781
          %2829 = vmatpush.msra.mxu0 %v2780
          %2830 = vmatpush.msra.mxu0 %v2779
          %2831 = vmatmul.f32.gmra.mxu0 %v2777
          %v2832 = vpop.f32.mrf.mxu0
          %v2833 = vadd.f32 %v2813, %v2832
          %2834 = vdwg.mxu0
          %2835 = vmatpush.msra.mxu0 %v2810
          %2836 = vmatpush.msra.mxu0 %v2809
          %2837 = vmatpush.msra.mxu0 %v2808
          %2838 = vmatpush.msra.mxu0 %v2807
          %2839 = vmatpush.msra.mxu0 %v2806
          %2840 = vmatpush.msra.mxu0 %v2805
          %2841 = vmatpush.msra.mxu0 %v2804
          %2842 = vmatpush.msra.mxu0 %v2803
          %2843 = vmatpush.msra.mxu0 %v2802
          %2844 = vmatpush.msra.mxu0 %v2801
          %2845 = vmatpush.msra.mxu0 %v2800
          %2846 = vmatpush.msra.mxu0 %v2799
          %2847 = vmatpush.msra.mxu0 %v2798
          %2848 = vmatpush.msra.mxu0 %v2797
          %2849 = vmatpush.msra.mxu0 %v2796
          %2850 = vmatpush.msra.mxu0 %v2795
          %2851 = vmatmul.f32.gmra.mxu0 %v2778
          %v2852 = vpop.f32.mrf.mxu0
          %v2853 = vadd.f32 %v2833, %v2852
          %2854 = vdwg.mxu0
          %2855 = vst [vmem:[#allocation34] sm:$0xff] %v2853
        $region192: #{tpu_custom_call.1} parent=103 // pred_fallthru
          _
        // Predicated region
        $region193: #{tpu_custom_call.1} parent=103 // pred_check
          %p2856 = pneg %p533
        $region194: #{tpu_custom_call.1} parent=103 // pred_check_branch
          %2858 = sbr.rel (%p2856) target = $region196
        $region195: #{tpu_custom_call.1} parent=103 // pred_region
          %2860 = vsyncadd [#allocation5], 0
          %s2861 = smul.addr %s49, 8
          %s2862 = scalar_lea.hbm %s21, %s2861
          %s2864 = sshll.u32 [#allocation34], 4
          %s2865 = int_to_ptr.vmem [resolvable:$true] %s2864
          %s2866 = sshll.u32 %s2862, 4
          %s2867 = int_to_ptr.hbm [resolvable:$true] %s2866
          %2869 = dma.vmem_to_hbm [thread:$0]  %s2865, 128, %s2867, [#allocation5]
        $region196: #{tpu_custom_call.1} parent=103 // pred_fallthru
          _
        // Predicated region
        $region197: #{tpu_custom_call.1} parent=103 // pred_check
          %p2870 = pneg %p533
        $region198: #{tpu_custom_call.1} parent=103 // pred_check_branch
          %2872 = sbr.rel (%p2870) target = $region200
        $region199: #{tpu_custom_call.1} parent=103 // pred_region
          %2874 = dma.done [#allocation5], 128
        $region200: #{tpu_custom_call.1} parent=103 // pred_fallthru
          _
      $region104: #{tpu_custom_call.1} parent=5 // pred_fallthru
        _
      %p2875 = scmp.le.s32.totalorder 2, %s40
      // Predicated region
      $region201: #{tpu_custom_call.1} parent=5 // pred_check
        %p2876 = pneg %p2875
      $region202: #{tpu_custom_call.1} parent=5 // pred_check_branch
        %2878 = sbr.rel (%p2876) target = $region204
      $region203: #{tpu_custom_call.1} parent=5 // pred_region
        %s2879 = ssub.s32 %s40, 2
      $region204: #{tpu_custom_call.1} parent=5 // pred_fallthru
        _
    $region6: #{tpu_custom_call.1} parent=1 // loop_footer
      %s44 = sadd.s32 1, %s40
    $region7: #{tpu_custom_call.1} parent=1 // loop_footer_branch
      %39 = sbr.rel target = $region3
    $region8: #{tpu_custom_call.1} parent=1 // loop_exit
      _
    %2880 = vsyncpa [#allocation4], 1
    %s2881 = scalar_lea.sflag [#allocation4], 1
    %2882 = vsyncpa %s2881, 1
    %2883 = vsyncpa [#allocation7], 1
    %2884 = vsyncpa [#allocation11], 1
    %2885 = vsyncpa [#allocation14], 1
    %2886 = vsyncpa [#allocation17], 1
    %2887 = vsyncpa [#allocation20], 1
    %2888 = vsyncpa [#allocation23], 1
    %2889 = vsyncpa [#allocation26], 1
    %2890 = vsyncpa [#allocation29], 1
    %2891 = vsyncpa [#allocation32], 1
    %2892 = vsyncpa [#allocation5], 1
    %s2893 = scalar_lea.sflag [#allocation5], 1
    %2894 = vsyncpa %s2893, 1

</llo_original>
